<compile_context>
chip_gen: v7x
topology: tpu7x:2x2x1
jax: 0.10.0
libtpu: 0.0.40
codegen_flags: <defaults>
</compile_context>

<pallas_src>
import jax
import jax.numpy as jnp
from jax import lax
from jax.experimental import pallas as pl
from jax.experimental.pallas import tpu as pltpu


def _pinball_lstm_kernel(
    x_ref,       # (Bb, Tt, F)   f32   batch-first input block
    wi1_ref,     # (F, 4H)       bf16  layer-1 input weights (transposed)
    wh1_ref,     # (H, 4H)       bf16  layer-1 hidden weights (transposed)
    b1_ref,      # (1, 4H)       f32   b_ih0 + b_hh0
    w2_ref,      # (2H, 4H)      bf16  layer-2 [W_ih; W_hh] stacked (transposed)
    b2_ref,      # (1, 4H)       f32   b_ih1 + b_hh1
    ln_g_ref,    # (1, H)        f32   LayerNorm gamma
    ln_b_ref,    # (1, H)        f32   LayerNorm beta
    wf1_ref,     # (H, H//2)     f32   head Linear 1 weight (transposed)
    bf1_ref,     # (1, H//2)     f32
    wf2_ref,     # (H//2, n_q)   f32   head Linear 2 weight (transposed)
    bf2_ref,     # (1, n_q)      f32
    out_ref,     # (Bb, n_q)     f32
    xp_ref,      # scratch (Bb, Tt, 4H) f32   hoisted layer-1 input projection
    h1_ref,      # scratch (Bb, H) f32  carries persist across time blocks
    c1_ref,
    h2_ref,
    c2_ref,
):
    t_blk = pl.program_id(1)
    n_t_blk = pl.num_programs(1)
    Bb, Tt, F = x_ref.shape
    H = wh1_ref.shape[0]
    H4 = 4 * H

    # Initialize the recurrent state at the first time block of each batch block.
    @pl.when(t_blk == 0)
    def _init():
        for r in (h1_ref, c1_ref, h2_ref, c2_ref):
            r[...] = jnp.zeros_like(r)

    # ---- Hoisted layer-1 input projection: one MXU-friendly matmul / block ----
    x2d = x_ref[...].astype(jnp.bfloat16).reshape(Bb * Tt, F)
    xp = jnp.dot(x2d, wi1_ref[...], preferred_element_type=jnp.float32)
    xp_ref[...] = xp.reshape(Bb, Tt, H4) + b1_ref[...]          # fold b1 once

    wh1 = wh1_ref[...]                                          # bf16, resident
    w2 = w2_ref[...]                                            # bf16, resident
    b2b = jnp.broadcast_to(b2_ref[...], (Bb, H4))               # hoisted broadcast

    def gate_update(gates, c):
        # PyTorch gate order [i, f, g, o]; slices lane-aligned when H % 128 == 0.
        i_g = jax.nn.sigmoid(gates[:, 0 * H:1 * H])
        f_g = jax.nn.sigmoid(gates[:, 1 * H:2 * H])
        g_g = jnp.tanh(gates[:, 2 * H:3 * H])
        o_g = jax.nn.sigmoid(gates[:, 3 * H:4 * H])
        c_new = f_g * c + i_g * g_g
        h_new = o_g * jnp.tanh(c_new)
        return h_new, c_new

    def step(t, carry):
        h1, c1, h2, c2 = carry
        # Layer 1: recurrent dot only (input projection precomputed above).
        g1 = xp_ref[:, t, :] + jnp.dot(
            h1.astype(jnp.bfloat16), wh1, preferred_element_type=jnp.float32)
        h1, c1 = gate_update(g1, c1)
        # Layer 2: single fused dot over [h1, h2] against stacked [W_ih; W_hh].
        h12 = jnp.concatenate([h1, h2], axis=-1).astype(jnp.bfloat16)
        g2 = jnp.dot(h12, w2, preferred_element_type=jnp.float32) + b2b
        h2, c2 = gate_update(g2, c2)
        return (h1, c1, h2, c2)

    carry0 = (h1_ref[...], c1_ref[...], h2_ref[...], c2_ref[...])
    h1, c1, h2, c2 = lax.fori_loop(0, Tt, step, carry0, unroll=True)
    h1_ref[...] = h1
    c1_ref[...] = c1
    h2_ref[...] = h2
    c2_ref[...] = c2

    # Head runs once, on the hidden state after the final time step.
    @pl.when(t_blk == n_t_blk - 1)
    def _finalize():
        mu = jnp.mean(h2, axis=-1, keepdims=True)
        var = jnp.mean((h2 - mu) ** 2, axis=-1, keepdims=True)
        hn = (h2 - mu) * lax.rsqrt(var + 1e-5) * ln_g_ref[...] + ln_b_ref[...]
        y1 = jnp.dot(hn, wf1_ref[...], preferred_element_type=jnp.float32) + bf1_ref[...]
        y1 = jnp.maximum(y1, 0.0)
        y2 = jnp.dot(y1, wf2_ref[...], preferred_element_type=jnp.float32) + bf2_ref[...]
        out_ref[...] = y2.astype(out_ref.dtype)


def pinball_lstm_forward(x, kparams, *, t_block=8):
    """x: (B, T, F) batch-first f32. Returns (B, n_q) f32."""
    B, T, F = x.shape
    H = kparams["wh1"].shape[0]
    H4 = 4 * H
    n_q = kparams["wf2"].shape[1]

    if T % t_block != 0 or t_block % 8 != 0:
        t_block = T                      # fall back to a single time block
    n_t_blk = T // t_block

    # One batch block here (B is tiny).  For large B on v7x set Bb = B // 2
    # (kept a multiple of 8) so the 'parallel' axis splits across the 2 TCs.
    Bb = B
    n_b_blk = B // Bb

    def _full(a):
        return pl.BlockSpec(a.shape, lambda b, t: (0,) * a.ndim)

    args = (
        x,
        kparams["wi1"], kparams["wh1"], kparams["b1"],
        kparams["w2"], kparams["b2"],
        kparams["ln_g"], kparams["ln_b"],
        kparams["wf1"], kparams["bf1"],
        kparams["wf2"], kparams["bf2"],
    )

    in_specs = [pl.BlockSpec((Bb, t_block, F), lambda b, t: (b, t, 0))]
    in_specs += [_full(a) for a in args[1:]]
    out_spec = pl.BlockSpec((Bb, n_q), lambda b, t: (b, 0))

    flops = (2 * T * B * (F * H4 + H * H4 + 2 * H * H4)
             + 2 * B * (H * (H // 2) + (H // 2) * n_q))
    transcendentals = 10 * T * B * H     # 3 sigmoid + 2 tanh per layer per step
    bytes_accessed = (sum(int(a.size) * a.dtype.itemsize for a in args)
                      + B * n_q * 4)

    grid_spec = pltpu.PrefetchScalarGridSpec(
        num_scalar_prefetch=0,
        grid=(n_b_blk, n_t_blk),
        in_specs=in_specs,
        out_specs=out_spec,
        scratch_shapes=[
            pltpu.VMEM((Bb, t_block, H4), jnp.float32),   # hoisted layer-1 proj
            pltpu.VMEM((Bb, H), jnp.float32),             # h1
            pltpu.VMEM((Bb, H), jnp.float32),             # c1
            pltpu.VMEM((Bb, H), jnp.float32),             # h2
            pltpu.VMEM((Bb, H), jnp.float32),             # c2
        ],
    )

    return pl.pallas_call(
        _pinball_lstm_kernel,
        out_shape=jax.ShapeDtypeStruct((B, n_q), jnp.float32),
        grid_spec=grid_spec,
        compiler_params=pltpu.CompilerParams(
            dimension_semantics=("parallel", "arbitrary"),
            vmem_limit_bytes=32 * 1024 * 1024,
        ),
        cost_estimate=pl.CostEstimate(
            flops=flops,
            transcendentals=transcendentals,
            bytes_accessed=bytes_accessed,
        ),
    )(*args)


def init_torch_params(key, n_feat, hidden, n_q):
    """PyTorch-layout parameters with PyTorch-style uniform init."""
    H = hidden
    ks = iter(jax.random.split(key, 16))

    def u(shape, scale):
        return jax.random.uniform(next(ks), shape, jnp.float32, -scale, scale)

    s_l = H ** -0.5
    return {
        "w_ih_l0": u((4 * H, n_feat), s_l), "w_hh_l0": u((4 * H, H), s_l),
        "b_ih_l0": u((4 * H,), s_l),        "b_hh_l0": u((4 * H,), s_l),
        "w_ih_l1": u((4 * H, H), s_l),      "w_hh_l1": u((4 * H, H), s_l),
        "b_ih_l1": u((4 * H,), s_l),        "b_hh_l1": u((4 * H,), s_l),
        "ln_g": jnp.ones((H,), jnp.float32), "ln_b": jnp.zeros((H,), jnp.float32),
        "w_fc1": u((H // 2, H), H ** -0.5),  "b_fc1": u((H // 2,), H ** -0.5),
        "w_fc2": u((n_q, H // 2), (H // 2) ** -0.5),
        "b_fc2": u((n_q,), (H // 2) ** -0.5),
    }


def prepare_kernel_params(pt):
    """Kernel layout: transposed, layer-2 weights stacked, LSTM weights in bf16."""
    return {
        "wi1": pt["w_ih_l0"].T.astype(jnp.bfloat16),
        "wh1": pt["w_hh_l0"].T.astype(jnp.bfloat16),
        "b1": (pt["b_ih_l0"] + pt["b_hh_l0"])[None, :],
        "w2": jnp.concatenate([pt["w_ih_l1"].T, pt["w_hh_l1"].T],
                              axis=0).astype(jnp.bfloat16),
        "b2": (pt["b_ih_l1"] + pt["b_hh_l1"])[None, :],
        "ln_g": pt["ln_g"][None, :],
        "ln_b": pt["ln_b"][None, :],
        "wf1": pt["w_fc1"].T,
        "bf1": pt["b_fc1"][None, :],
        "wf2": pt["w_fc2"].T,
        "bf2": pt["b_fc2"][None, :],
    }


def reference_forward(x, pt, matmul_dtype=jnp.float32):
    """Pure-JAX reference with PyTorch semantics.

    matmul_dtype=jnp.bfloat16 mimics the kernel's bf16 MXU operands (f32
    accumulation, f32 state) for tight validation of the kernel logic.
    """
    B, T, _ = x.shape
    H = pt["w_hh_l0"].shape[1]
    md = lambda a: a.astype(matmul_dtype)

    def cell(x_t, h, c, w_ih, w_hh, b_ih, b_hh):
        g = (jnp.dot(md(x_t), md(w_ih.T), preferred_element_type=jnp.float32)
             + jnp.dot(md(h), md(w_hh.T), preferred_element_type=jnp.float32)
             + b_ih + b_hh)
        i = jax.nn.sigmoid(g[:, 0 * H:1 * H])
        f = jax.nn.sigmoid(g[:, 1 * H:2 * H])
        gg = jnp.tanh(g[:, 2 * H:3 * H])
        o = jax.nn.sigmoid(g[:, 3 * H:4 * H])
        c = f * c + i * gg
        return o * jnp.tanh(c), c

    h1 = c1 = h2 = c2 = jnp.zeros((B, H), jnp.float32)
    for t in range(T):
        h1, c1 = cell(x[:, t], h1, c1, pt["w_ih_l0"], pt["w_hh_l0"],
                      pt["b_ih_l0"], pt["b_hh_l0"])
        h2, c2 = cell(h1, h2, c2, pt["w_ih_l1"], pt["w_hh_l1"],
                      pt["b_ih_l1"], pt["b_hh_l1"])

    mu = jnp.mean(h2, axis=-1, keepdims=True)
    var = jnp.mean((h2 - mu) ** 2, axis=-1, keepdims=True)
    hn = (h2 - mu) * lax.rsqrt(var + 1e-5) * pt["ln_g"] + pt["ln_b"]
    y1 = jnp.maximum(jnp.dot(hn, pt["w_fc1"].T) + pt["b_fc1"], 0.0)
    return jnp.dot(y1, pt["w_fc2"].T) + pt["b_fc2"]


if __name__ == "__main__":
    # Small demo shapes. hidden=128 (multiple of 128) => lane-aligned gate slices.
    B, T, n_feat, hidden, n_q = 2, 16, 4, 128, 3

    key = jax.random.PRNGKey(0)
    k_x, k_p = jax.random.split(key)
    x = jax.random.normal(k_x, (B, T, n_feat), jnp.float32)

    pt = init_torch_params(k_p, n_feat, hidden, n_q)
    kparams = prepare_kernel_params(pt)

    out = jax.block_until_ready(pinball_lstm_forward(x, kparams, t_block=8))
    assert out.shape == (B, n_q)

    # Tight check vs a reference with matching bf16-operand matmuls (validates
    # kernel logic and the weight re-layout exactly).
    ref_bf16 = reference_forward(x, pt, matmul_dtype=jnp.bfloat16)
    assert jnp.allclose(out, ref_bf16, atol=2e-3, rtol=2e-3), (out, ref_bf16)

    # Loose check vs the full-f32 PyTorch-semantics reference (difference is
    # only bf16 operand quantization in the LSTM matmuls).
    ref_f32 = reference_forward(x, pt, matmul_dtype=jnp.float32)
    assert jnp.allclose(out, ref_f32, atol=1e-1, rtol=1e-1), (out, ref_f32)

    print("KERNEL_OK")
</pallas_src>

<mosaic_0001>
module attributes {stable_mosaic.version = 11 : i64} {
  func.func @_pinball_lstm_kernel(%arg0: i32, %arg1: i32, %arg2: memref<2x8x4xf32, #tpu.memory_space<vmem>>, %arg3: memref<4x512xbf16, #tpu.memory_space<vmem>>, %arg4: memref<128x512xbf16, #tpu.memory_space<vmem>>, %arg5: memref<1x512xf32, #tpu.memory_space<vmem>>, %arg6: memref<256x512xbf16, #tpu.memory_space<vmem>>, %arg7: memref<1x512xf32, #tpu.memory_space<vmem>>, %arg8: memref<1x128xf32, #tpu.memory_space<vmem>>, %arg9: memref<1x128xf32, #tpu.memory_space<vmem>>, %arg10: memref<128x64xf32, #tpu.memory_space<vmem>>, %arg11: memref<1x64xf32, #tpu.memory_space<vmem>>, %arg12: memref<64x3xf32, #tpu.memory_space<vmem>>, %arg13: memref<1x3xf32, #tpu.memory_space<vmem>>, %arg14: memref<2x3xf32, #tpu.memory_space<vmem>>, %arg15: memref<2x8x512xf32, #tpu.memory_space<vmem>>, %arg16: memref<2x128xf32, #tpu.memory_space<vmem>>, %arg17: memref<2x128xf32, #tpu.memory_space<vmem>>, %arg18: memref<2x128xf32, #tpu.memory_space<vmem>>, %arg19: memref<2x128xf32, #tpu.memory_space<vmem>>) attributes {dimension_semantics = [#tpu.dimension_semantics<parallel>, #tpu.dimension_semantics<arbitrary>], iteration_bounds = array<i64: 1, 2>, scalar_prefetch = 0 : i64, scratch_operands = 5 : i64, tpu.core_type = #tpu.core_type<tc>, window_params = [{transform_indices = @transform_0, window_bounds = array<i64: 2, 8, 4>}, {pipeline_mode = #tpu.pipeline_mode<synchronous>, transform_indices = @transform_1, window_bounds = array<i64: 4, 512>}, {pipeline_mode = #tpu.pipeline_mode<synchronous>, transform_indices = @transform_2, window_bounds = array<i64: 128, 512>}, {pipeline_mode = #tpu.pipeline_mode<synchronous>, transform_indices = @transform_3, window_bounds = array<i64: 1, 512>}, {pipeline_mode = #tpu.pipeline_mode<synchronous>, transform_indices = @transform_4, window_bounds = array<i64: 256, 512>}, {pipeline_mode = #tpu.pipeline_mode<synchronous>, transform_indices = @transform_5, window_bounds = array<i64: 1, 512>}, {pipeline_mode = #tpu.pipeline_mode<synchronous>, transform_indices = @transform_6, window_bounds = array<i64: 1, 128>}, {pipeline_mode = #tpu.pipeline_mode<synchronous>, transform_indices = @transform_7, window_bounds = array<i64: 1, 128>}, {pipeline_mode = #tpu.pipeline_mode<synchronous>, transform_indices = @transform_8, window_bounds = array<i64: 128, 64>}, {pipeline_mode = #tpu.pipeline_mode<synchronous>, transform_indices = @transform_9, window_bounds = array<i64: 1, 64>}, {pipeline_mode = #tpu.pipeline_mode<synchronous>, transform_indices = @transform_10, window_bounds = array<i64: 64, 3>}, {pipeline_mode = #tpu.pipeline_mode<synchronous>, transform_indices = @transform_11, window_bounds = array<i64: 1, 3>}, {transform_indices = @transform_12, window_bounds = array<i64: 2, 3>}]} {
    %c0_i32 = arith.constant 0 : i32
    %0 = arith.cmpi eq, %arg1, %c0_i32 : i32
    %1 = arith.extui %0 : i1 to i32
    %c0_i32_0 = arith.constant 0 : i32
    %2 = arith.cmpi ne, %1, %c0_i32_0 : i32
    scf.if %2 {
      %cst_115 = arith.constant 0.000000e+00 : f32
      %510 = vector.broadcast %cst_115 : f32 to vector<2x128xf32>
      %c0_116 = arith.constant 0 : index
      %c0_117 = arith.constant 0 : index
      %511 = vector.load %arg16[%c0_116, %c0_117] : memref<2x128xf32, #tpu.memory_space<vmem>>, vector<2x128xf32>
      tpu.vector_store %arg16[%c0_116, %c0_117], %510 {strides = array<i32>} : memref<2x128xf32, #tpu.memory_space<vmem>>, vector<2x128xf32>,
      %cst_118 = arith.constant 0.000000e+00 : f32
      %512 = vector.broadcast %cst_118 : f32 to vector<2x128xf32>
      %c0_119 = arith.constant 0 : index
      %c0_120 = arith.constant 0 : index
      %513 = vector.load %arg17[%c0_119, %c0_120] : memref<2x128xf32, #tpu.memory_space<vmem>>, vector<2x128xf32>
      tpu.vector_store %arg17[%c0_119, %c0_120], %512 {strides = array<i32>} : memref<2x128xf32, #tpu.memory_space<vmem>>, vector<2x128xf32>,
      %cst_121 = arith.constant 0.000000e+00 : f32
      %514 = vector.broadcast %cst_121 : f32 to vector<2x128xf32>
      %c0_122 = arith.constant 0 : index
      %c0_123 = arith.constant 0 : index
      %515 = vector.load %arg18[%c0_122, %c0_123] : memref<2x128xf32, #tpu.memory_space<vmem>>, vector<2x128xf32>
      tpu.vector_store %arg18[%c0_122, %c0_123], %514 {strides = array<i32>} : memref<2x128xf32, #tpu.memory_space<vmem>>, vector<2x128xf32>,
      %cst_124 = arith.constant 0.000000e+00 : f32
      %516 = vector.broadcast %cst_124 : f32 to vector<2x128xf32>
      %c0_125 = arith.constant 0 : index
      %c0_126 = arith.constant 0 : index
      %517 = vector.load %arg19[%c0_125, %c0_126] : memref<2x128xf32, #tpu.memory_space<vmem>>, vector<2x128xf32>
      tpu.vector_store %arg19[%c0_125, %c0_126], %516 {strides = array<i32>} : memref<2x128xf32, #tpu.memory_space<vmem>>, vector<2x128xf32>,
    } else {
    }
    %c0 = arith.constant 0 : index
    %c0_1 = arith.constant 0 : index
    %c0_2 = arith.constant 0 : index
    %3 = vector.load %arg2[%c0, %c0_1, %c0_2] : memref<2x8x4xf32, #tpu.memory_space<vmem>>, vector<2x8x4xf32>
    %4 = arith.truncf %3 : vector<2x8x4xf32> to vector<2x8x4xbf16>
    %5 = vector.shape_cast %4 : vector<2x8x4xbf16> to vector<16x4xbf16>
    %c0_3 = arith.constant 0 : index
    %c0_4 = arith.constant 0 : index
    %6 = vector.load %arg3[%c0_3, %c0_4] : memref<4x512xbf16, #tpu.memory_space<vmem>>, vector<4x512xbf16>
    %cst = arith.constant dense<0.000000e+00> : vector<16x512xf32>
    %7 = tpu.matmul %5, %6, %cst {dimension_numbers = #tpu.dot_dimension_numbers<[1], [0], [0], [1], [0, 0, 1, 1], [], []>} : vector<16x4xbf16>, vector<4x512xbf16>, vector<16x512xf32> -> vector<16x512xf32>
    %8 = vector.shape_cast %7 : vector<16x512xf32> to vector<2x8x512xf32>
    %c0_5 = arith.constant 0 : index
    %c0_6 = arith.constant 0 : index
    %9 = vector.load %arg5[%c0_5, %c0_6] : memref<1x512xf32, #tpu.memory_space<vmem>>, vector<1x512xf32>
    %10 = vector.shape_cast %9 : vector<1x512xf32> to vector<1x1x512xf32>
    %11 = vector.broadcast %10 : vector<1x1x512xf32> to vector<2x8x512xf32>
    %12 = arith.addf %8, %11 : vector<2x8x512xf32>
    %c0_7 = arith.constant 0 : index
    %c0_8 = arith.constant 0 : index
    %c0_9 = arith.constant 0 : index
    %13 = vector.load %arg15[%c0_7, %c0_8, %c0_9] : memref<2x8x512xf32, #tpu.memory_space<vmem>>, vector<2x8x512xf32>
    tpu.vector_store %arg15[%c0_7, %c0_8, %c0_9], %12 {strides = array<i32>} : memref<2x8x512xf32, #tpu.memory_space<vmem>>, vector<2x8x512xf32>,
    %c0_10 = arith.constant 0 : index
    %c0_11 = arith.constant 0 : index
    %14 = vector.load %arg4[%c0_10, %c0_11] : memref<128x512xbf16, #tpu.memory_space<vmem>>, vector<128x512xbf16>
    %c0_12 = arith.constant 0 : index
    %c0_13 = arith.constant 0 : index
    %15 = vector.load %arg6[%c0_12, %c0_13] : memref<256x512xbf16, #tpu.memory_space<vmem>>, vector<256x512xbf16>
    %c0_14 = arith.constant 0 : index
    %c0_15 = arith.constant 0 : index
    %16 = vector.load %arg7[%c0_14, %c0_15] : memref<1x512xf32, #tpu.memory_space<vmem>>, vector<1x512xf32>
    %17 = vector.shape_cast %16 : vector<1x512xf32> to vector<1x512xf32>
    %18 = vector.broadcast %17 : vector<1x512xf32> to vector<2x512xf32>
    %c0_16 = arith.constant 0 : index
    %c0_17 = arith.constant 0 : index
    %19 = vector.load %arg16[%c0_16, %c0_17] : memref<2x128xf32, #tpu.memory_space<vmem>>, vector<2x128xf32>
    %c0_18 = arith.constant 0 : index
    %c0_19 = arith.constant 0 : index
    %20 = vector.load %arg17[%c0_18, %c0_19] : memref<2x128xf32, #tpu.memory_space<vmem>>, vector<2x128xf32>
    %c0_20 = arith.constant 0 : index
    %c0_21 = arith.constant 0 : index
    %21 = vector.load %arg18[%c0_20, %c0_21] : memref<2x128xf32, #tpu.memory_space<vmem>>, vector<2x128xf32>
    %c0_22 = arith.constant 0 : index
    %c0_23 = arith.constant 0 : index
    %22 = vector.load %arg19[%c0_22, %c0_23] : memref<2x128xf32, #tpu.memory_space<vmem>>, vector<2x128xf32>
    %c0_i32_24 = arith.constant 0 : i32
    %c0_25 = arith.constant 0 : index
    %23 = arith.index_cast %c0_i32_24 : i32 to index
    %c0_26 = arith.constant 0 : index
    %24 = vector.load %arg15[%c0_25, %23, %c0_26] : memref<2x8x512xf32, #tpu.memory_space<vmem>>, vector<2x1x512xf32>
    %25 = vector.shape_cast %24 : vector<2x1x512xf32> to vector<2x512xf32>
    %26 = arith.truncf %19 : vector<2x128xf32> to vector<2x128xbf16>
    %cst_27 = arith.constant dense<0.000000e+00> : vector<2x512xf32>
    %27 = tpu.matmul %26, %14, %cst_27 {dimension_numbers = #tpu.dot_dimension_numbers<[1], [0], [0], [1], [0, 0, 1, 1], [], []>} : vector<2x128xbf16>, vector<128x512xbf16>, vector<2x512xf32> -> vector<2x512xf32>
    %28 = arith.addf %25, %27 : vector<2x512xf32>
    %29 = vector.extract_strided_slice %28 {offsets = [0, 0], sizes = [2, 128], strides = [1, 1]} : vector<2x512xf32> to vector<2x128xf32>
    %30 = arith.negf %29 : vector<2x128xf32>
    %31 = math.exp %30 : vector<2x128xf32>
    %cst_28 = arith.constant 1.000000e+00 : f32
    %32 = vector.broadcast %cst_28 : f32 to vector<2x128xf32>
    %33 = arith.addf %32, %31 : vector<2x128xf32>
    %34 = arith.divf %32, %33 : vector<2x128xf32>
    %35 = vector.extract_strided_slice %28 {offsets = [0, 128], sizes = [2, 128], strides = [1, 1]} : vector<2x512xf32> to vector<2x128xf32>
    %36 = arith.negf %35 : vector<2x128xf32>
    %37 = math.exp %36 : vector<2x128xf32>
    %cst_29 = arith.constant 1.000000e+00 : f32
    %38 = vector.broadcast %cst_29 : f32 to vector<2x128xf32>
    %39 = arith.addf %38, %37 : vector<2x128xf32>
    %40 = arith.divf %38, %39 : vector<2x128xf32>
    %41 = vector.extract_strided_slice %28 {offsets = [0, 256], sizes = [2, 128], strides = [1, 1]} : vector<2x512xf32> to vector<2x128xf32>
    %42 = math.tanh %41 : vector<2x128xf32>
    %43 = vector.extract_strided_slice %28 {offsets = [0, 384], sizes = [2, 128], strides = [1, 1]} : vector<2x512xf32> to vector<2x128xf32>
    %44 = arith.negf %43 : vector<2x128xf32>
    %45 = math.exp %44 : vector<2x128xf32>
    %cst_30 = arith.constant 1.000000e+00 : f32
    %46 = vector.broadcast %cst_30 : f32 to vector<2x128xf32>
    %47 = arith.addf %46, %45 : vector<2x128xf32>
    %48 = arith.divf %46, %47 : vector<2x128xf32>
    %49 = arith.mulf %40, %20 : vector<2x128xf32>
    %50 = arith.mulf %34, %42 : vector<2x128xf32>
    %51 = arith.addf %49, %50 : vector<2x128xf32>
    %52 = math.tanh %51 : vector<2x128xf32>
    %53 = arith.mulf %48, %52 : vector<2x128xf32>
    %54 = tpu.concatenate %53, %21 in 1 : vector<2x128xf32>, vector<2x128xf32> -> vector<2x256xf32>
    %55 = arith.truncf %54 : vector<2x256xf32> to vector<2x256xbf16>
    %cst_31 = arith.constant dense<0.000000e+00> : vector<2x512xf32>
    %56 = tpu.matmul %55, %15, %cst_31 {dimension_numbers = #tpu.dot_dimension_numbers<[1], [0], [0], [1], [0, 0, 1, 1], [], []>} : vector<2x256xbf16>, vector<256x512xbf16>, vector<2x512xf32> -> vector<2x512xf32>
    %57 = arith.addf %56, %18 : vector<2x512xf32>
    %58 = vector.extract_strided_slice %57 {offsets = [0, 0], sizes = [2, 128], strides = [1, 1]} : vector<2x512xf32> to vector<2x128xf32>
    %59 = arith.negf %58 : vector<2x128xf32>
    %60 = math.exp %59 : vector<2x128xf32>
    %cst_32 = arith.constant 1.000000e+00 : f32
    %61 = vector.broadcast %cst_32 : f32 to vector<2x128xf32>
    %62 = arith.addf %61, %60 : vector<2x128xf32>
    %63 = arith.divf %61, %62 : vector<2x128xf32>
    %64 = vector.extract_strided_slice %57 {offsets = [0, 128], sizes = [2, 128], strides = [1, 1]} : vector<2x512xf32> to vector<2x128xf32>
    %65 = arith.negf %64 : vector<2x128xf32>
    %66 = math.exp %65 : vector<2x128xf32>
    %cst_33 = arith.constant 1.000000e+00 : f32
    %67 = vector.broadcast %cst_33 : f32 to vector<2x128xf32>
    %68 = arith.addf %67, %66 : vector<2x128xf32>
    %69 = arith.divf %67, %68 : vector<2x128xf32>
    %70 = vector.extract_strided_slice %57 {offsets = [0, 256], sizes = [2, 128], strides = [1, 1]} : vector<2x512xf32> to vector<2x128xf32>
    %71 = math.tanh %70 : vector<2x128xf32>
    %72 = vector.extract_strided_slice %57 {offsets = [0, 384], sizes = [2, 128], strides = [1, 1]} : vector<2x512xf32> to vector<2x128xf32>
    %73 = arith.negf %72 : vector<2x128xf32>
    %74 = math.exp %73 : vector<2x128xf32>
    %cst_34 = arith.constant 1.000000e+00 : f32
    %75 = vector.broadcast %cst_34 : f32 to vector<2x128xf32>
    %76 = arith.addf %75, %74 : vector<2x128xf32>
    %77 = arith.divf %75, %76 : vector<2x128xf32>
    %78 = arith.mulf %69, %22 : vector<2x128xf32>
    %79 = arith.mulf %63, %71 : vector<2x128xf32>
    %80 = arith.addf %78, %79 : vector<2x128xf32>
    %81 = math.tanh %80 : vector<2x128xf32>
    %82 = arith.mulf %77, %81 : vector<2x128xf32>
    %c1_i32 = arith.constant 1 : i32
    %c0_35 = arith.constant 0 : index
    %83 = arith.index_cast %c1_i32 : i32 to index
    %c0_36 = arith.constant 0 : index
    %84 = vector.load %arg15[%c0_35, %83, %c0_36] : memref<2x8x512xf32, #tpu.memory_space<vmem>>, vector<2x1x512xf32>
    %85 = vector.shape_cast %84 : vector<2x1x512xf32> to vector<2x512xf32>
    %86 = arith.truncf %53 : vector<2x128xf32> to vector<2x128xbf16>
    %cst_37 = arith.constant dense<0.000000e+00> : vector<2x512xf32>
    %87 = tpu.matmul %86, %14, %cst_37 {dimension_numbers = #tpu.dot_dimension_numbers<[1], [0], [0], [1], [0, 0, 1, 1], [], []>} : vector<2x128xbf16>, vector<128x512xbf16>, vector<2x512xf32> -> vector<2x512xf32>
    %88 = arith.addf %85, %87 : vector<2x512xf32>
    %89 = vector.extract_strided_slice %88 {offsets = [0, 0], sizes = [2, 128], strides = [1, 1]} : vector<2x512xf32> to vector<2x128xf32>
    %90 = arith.negf %89 : vector<2x128xf32>
    %91 = math.exp %90 : vector<2x128xf32>
    %cst_38 = arith.constant 1.000000e+00 : f32
    %92 = vector.broadcast %cst_38 : f32 to vector<2x128xf32>
    %93 = arith.addf %92, %91 : vector<2x128xf32>
    %94 = arith.divf %92, %93 : vector<2x128xf32>
    %95 = vector.extract_strided_slice %88 {offsets = [0, 128], sizes = [2, 128], strides = [1, 1]} : vector<2x512xf32> to vector<2x128xf32>
    %96 = arith.negf %95 : vector<2x128xf32>
    %97 = math.exp %96 : vector<2x128xf32>
    %cst_39 = arith.constant 1.000000e+00 : f32
    %98 = vector.broadcast %cst_39 : f32 to vector<2x128xf32>
    %99 = arith.addf %98, %97 : vector<2x128xf32>
    %100 = arith.divf %98, %99 : vector<2x128xf32>
    %101 = vector.extract_strided_slice %88 {offsets = [0, 256], sizes = [2, 128], strides = [1, 1]} : vector<2x512xf32> to vector<2x128xf32>
    %102 = math.tanh %101 : vector<2x128xf32>
    %103 = vector.extract_strided_slice %88 {offsets = [0, 384], sizes = [2, 128], strides = [1, 1]} : vector<2x512xf32> to vector<2x128xf32>
    %104 = arith.negf %103 : vector<2x128xf32>
    %105 = math.exp %104 : vector<2x128xf32>
    %cst_40 = arith.constant 1.000000e+00 : f32
    %106 = vector.broadcast %cst_40 : f32 to vector<2x128xf32>
    %107 = arith.addf %106, %105 : vector<2x128xf32>
    %108 = arith.divf %106, %107 : vector<2x128xf32>
    %109 = arith.mulf %100, %51 : vector<2x128xf32>
    %110 = arith.mulf %94, %102 : vector<2x128xf32>
    %111 = arith.addf %109, %110 : vector<2x128xf32>
    %112 = math.tanh %111 : vector<2x128xf32>
    %113 = arith.mulf %108, %112 : vector<2x128xf32>
    %114 = tpu.concatenate %113, %82 in 1 : vector<2x128xf32>, vector<2x128xf32> -> vector<2x256xf32>
    %115 = arith.truncf %114 : vector<2x256xf32> to vector<2x256xbf16>
    %cst_41 = arith.constant dense<0.000000e+00> : vector<2x512xf32>
    %116 = tpu.matmul %115, %15, %cst_41 {dimension_numbers = #tpu.dot_dimension_numbers<[1], [0], [0], [1], [0, 0, 1, 1], [], []>} : vector<2x256xbf16>, vector<256x512xbf16>, vector<2x512xf32> -> vector<2x512xf32>
    %117 = arith.addf %116, %18 : vector<2x512xf32>
    %118 = vector.extract_strided_slice %117 {offsets = [0, 0], sizes = [2, 128], strides = [1, 1]} : vector<2x512xf32> to vector<2x128xf32>
    %119 = arith.negf %118 : vector<2x128xf32>
    %120 = math.exp %119 : vector<2x128xf32>
    %cst_42 = arith.constant 1.000000e+00 : f32
    %121 = vector.broadcast %cst_42 : f32 to vector<2x128xf32>
    %122 = arith.addf %121, %120 : vector<2x128xf32>
    %123 = arith.divf %121, %122 : vector<2x128xf32>
    %124 = vector.extract_strided_slice %117 {offsets = [0, 128], sizes = [2, 128], strides = [1, 1]} : vector<2x512xf32> to vector<2x128xf32>
    %125 = arith.negf %124 : vector<2x128xf32>
    %126 = math.exp %125 : vector<2x128xf32>
    %cst_43 = arith.constant 1.000000e+00 : f32
    %127 = vector.broadcast %cst_43 : f32 to vector<2x128xf32>
    %128 = arith.addf %127, %126 : vector<2x128xf32>
    %129 = arith.divf %127, %128 : vector<2x128xf32>
    %130 = vector.extract_strided_slice %117 {offsets = [0, 256], sizes = [2, 128], strides = [1, 1]} : vector<2x512xf32> to vector<2x128xf32>
    %131 = math.tanh %130 : vector<2x128xf32>
    %132 = vector.extract_strided_slice %117 {offsets = [0, 384], sizes = [2, 128], strides = [1, 1]} : vector<2x512xf32> to vector<2x128xf32>
    %133 = arith.negf %132 : vector<2x128xf32>
    %134 = math.exp %133 : vector<2x128xf32>
    %cst_44 = arith.constant 1.000000e+00 : f32
    %135 = vector.broadcast %cst_44 : f32 to vector<2x128xf32>
    %136 = arith.addf %135, %134 : vector<2x128xf32>
    %137 = arith.divf %135, %136 : vector<2x128xf32>
    %138 = arith.mulf %129, %80 : vector<2x128xf32>
    %139 = arith.mulf %123, %131 : vector<2x128xf32>
    %140 = arith.addf %138, %139 : vector<2x128xf32>
    %141 = math.tanh %140 : vector<2x128xf32>
    %142 = arith.mulf %137, %141 : vector<2x128xf32>
    %c2_i32 = arith.constant 2 : i32
    %c0_45 = arith.constant 0 : index
    %143 = arith.index_cast %c2_i32 : i32 to index
    %c0_46 = arith.constant 0 : index
    %144 = vector.load %arg15[%c0_45, %143, %c0_46] : memref<2x8x512xf32, #tpu.memory_space<vmem>>, vector<2x1x512xf32>
    %145 = vector.shape_cast %144 : vector<2x1x512xf32> to vector<2x512xf32>
    %146 = arith.truncf %113 : vector<2x128xf32> to vector<2x128xbf16>
    %cst_47 = arith.constant dense<0.000000e+00> : vector<2x512xf32>
    %147 = tpu.matmul %146, %14, %cst_47 {dimension_numbers = #tpu.dot_dimension_numbers<[1], [0], [0], [1], [0, 0, 1, 1], [], []>} : vector<2x128xbf16>, vector<128x512xbf16>, vector<2x512xf32> -> vector<2x512xf32>
    %148 = arith.addf %145, %147 : vector<2x512xf32>
    %149 = vector.extract_strided_slice %148 {offsets = [0, 0], sizes = [2, 128], strides = [1, 1]} : vector<2x512xf32> to vector<2x128xf32>
    %150 = arith.negf %149 : vector<2x128xf32>
    %151 = math.exp %150 : vector<2x128xf32>
    %cst_48 = arith.constant 1.000000e+00 : f32
    %152 = vector.broadcast %cst_48 : f32 to vector<2x128xf32>
    %153 = arith.addf %152, %151 : vector<2x128xf32>
    %154 = arith.divf %152, %153 : vector<2x128xf32>
    %155 = vector.extract_strided_slice %148 {offsets = [0, 128], sizes = [2, 128], strides = [1, 1]} : vector<2x512xf32> to vector<2x128xf32>
    %156 = arith.negf %155 : vector<2x128xf32>
    %157 = math.exp %156 : vector<2x128xf32>
    %cst_49 = arith.constant 1.000000e+00 : f32
    %158 = vector.broadcast %cst_49 : f32 to vector<2x128xf32>
    %159 = arith.addf %158, %157 : vector<2x128xf32>
    %160 = arith.divf %158, %159 : vector<2x128xf32>
    %161 = vector.extract_strided_slice %148 {offsets = [0, 256], sizes = [2, 128], strides = [1, 1]} : vector<2x512xf32> to vector<2x128xf32>
    %162 = math.tanh %161 : vector<2x128xf32>
    %163 = vector.extract_strided_slice %148 {offsets = [0, 384], sizes = [2, 128], strides = [1, 1]} : vector<2x512xf32> to vector<2x128xf32>
    %164 = arith.negf %163 : vector<2x128xf32>
    %165 = math.exp %164 : vector<2x128xf32>
    %cst_50 = arith.constant 1.000000e+00 : f32
    %166 = vector.broadcast %cst_50 : f32 to vector<2x128xf32>
    %167 = arith.addf %166, %165 : vector<2x128xf32>
    %168 = arith.divf %166, %167 : vector<2x128xf32>
    %169 = arith.mulf %160, %111 : vector<2x128xf32>
    %170 = arith.mulf %154, %162 : vector<2x128xf32>
    %171 = arith.addf %169, %170 : vector<2x128xf32>
    %172 = math.tanh %171 : vector<2x128xf32>
    %173 = arith.mulf %168, %172 : vector<2x128xf32>
    %174 = tpu.concatenate %173, %142 in 1 : vector<2x128xf32>, vector<2x128xf32> -> vector<2x256xf32>
    %175 = arith.truncf %174 : vector<2x256xf32> to vector<2x256xbf16>
    %cst_51 = arith.constant dense<0.000000e+00> : vector<2x512xf32>
    %176 = tpu.matmul %175, %15, %cst_51 {dimension_numbers = #tpu.dot_dimension_numbers<[1], [0], [0], [1], [0, 0, 1, 1], [], []>} : vector<2x256xbf16>, vector<256x512xbf16>, vector<2x512xf32> -> vector<2x512xf32>
    %177 = arith.addf %176, %18 : vector<2x512xf32>
    %178 = vector.extract_strided_slice %177 {offsets = [0, 0], sizes = [2, 128], strides = [1, 1]} : vector<2x512xf32> to vector<2x128xf32>
    %179 = arith.negf %178 : vector<2x128xf32>
    %180 = math.exp %179 : vector<2x128xf32>
    %cst_52 = arith.constant 1.000000e+00 : f32
    %181 = vector.broadcast %cst_52 : f32 to vector<2x128xf32>
    %182 = arith.addf %181, %180 : vector<2x128xf32>
    %183 = arith.divf %181, %182 : vector<2x128xf32>
    %184 = vector.extract_strided_slice %177 {offsets = [0, 128], sizes = [2, 128], strides = [1, 1]} : vector<2x512xf32> to vector<2x128xf32>
    %185 = arith.negf %184 : vector<2x128xf32>
    %186 = math.exp %185 : vector<2x128xf32>
    %cst_53 = arith.constant 1.000000e+00 : f32
    %187 = vector.broadcast %cst_53 : f32 to vector<2x128xf32>
    %188 = arith.addf %187, %186 : vector<2x128xf32>
    %189 = arith.divf %187, %188 : vector<2x128xf32>
    %190 = vector.extract_strided_slice %177 {offsets = [0, 256], sizes = [2, 128], strides = [1, 1]} : vector<2x512xf32> to vector<2x128xf32>
    %191 = math.tanh %190 : vector<2x128xf32>
    %192 = vector.extract_strided_slice %177 {offsets = [0, 384], sizes = [2, 128], strides = [1, 1]} : vector<2x512xf32> to vector<2x128xf32>
    %193 = arith.negf %192 : vector<2x128xf32>
    %194 = math.exp %193 : vector<2x128xf32>
    %cst_54 = arith.constant 1.000000e+00 : f32
    %195 = vector.broadcast %cst_54 : f32 to vector<2x128xf32>
    %196 = arith.addf %195, %194 : vector<2x128xf32>
    %197 = arith.divf %195, %196 : vector<2x128xf32>
    %198 = arith.mulf %189, %140 : vector<2x128xf32>
    %199 = arith.mulf %183, %191 : vector<2x128xf32>
    %200 = arith.addf %198, %199 : vector<2x128xf32>
    %201 = math.tanh %200 : vector<2x128xf32>
    %202 = arith.mulf %197, %201 : vector<2x128xf32>
    %c3_i32 = arith.constant 3 : i32
    %c0_55 = arith.constant 0 : index
    %203 = arith.index_cast %c3_i32 : i32 to index
    %c0_56 = arith.constant 0 : index
    %204 = vector.load %arg15[%c0_55, %203, %c0_56] : memref<2x8x512xf32, #tpu.memory_space<vmem>>, vector<2x1x512xf32>
    %205 = vector.shape_cast %204 : vector<2x1x512xf32> to vector<2x512xf32>
    %206 = arith.truncf %173 : vector<2x128xf32> to vector<2x128xbf16>
    %cst_57 = arith.constant dense<0.000000e+00> : vector<2x512xf32>
    %207 = tpu.matmul %206, %14, %cst_57 {dimension_numbers = #tpu.dot_dimension_numbers<[1], [0], [0], [1], [0, 0, 1, 1], [], []>} : vector<2x128xbf16>, vector<128x512xbf16>, vector<2x512xf32> -> vector<2x512xf32>
    %208 = arith.addf %205, %207 : vector<2x512xf32>
    %209 = vector.extract_strided_slice %208 {offsets = [0, 0], sizes = [2, 128], strides = [1, 1]} : vector<2x512xf32> to vector<2x128xf32>
    %210 = arith.negf %209 : vector<2x128xf32>
    %211 = math.exp %210 : vector<2x128xf32>
    %cst_58 = arith.constant 1.000000e+00 : f32
    %212 = vector.broadcast %cst_58 : f32 to vector<2x128xf32>
    %213 = arith.addf %212, %211 : vector<2x128xf32>
    %214 = arith.divf %212, %213 : vector<2x128xf32>
    %215 = vector.extract_strided_slice %208 {offsets = [0, 128], sizes = [2, 128], strides = [1, 1]} : vector<2x512xf32> to vector<2x128xf32>
    %216 = arith.negf %215 : vector<2x128xf32>
    %217 = math.exp %216 : vector<2x128xf32>
    %cst_59 = arith.constant 1.000000e+00 : f32
    %218 = vector.broadcast %cst_59 : f32 to vector<2x128xf32>
    %219 = arith.addf %218, %217 : vector<2x128xf32>
    %220 = arith.divf %218, %219 : vector<2x128xf32>
    %221 = vector.extract_strided_slice %208 {offsets = [0, 256], sizes = [2, 128], strides = [1, 1]} : vector<2x512xf32> to vector<2x128xf32>
    %222 = math.tanh %221 : vector<2x128xf32>
    %223 = vector.extract_strided_slice %208 {offsets = [0, 384], sizes = [2, 128], strides = [1, 1]} : vector<2x512xf32> to vector<2x128xf32>
    %224 = arith.negf %223 : vector<2x128xf32>
    %225 = math.exp %224 : vector<2x128xf32>
    %cst_60 = arith.constant 1.000000e+00 : f32
    %226 = vector.broadcast %cst_60 : f32 to vector<2x128xf32>
    %227 = arith.addf %226, %225 : vector<2x128xf32>
    %228 = arith.divf %226, %227 : vector<2x128xf32>
    %229 = arith.mulf %220, %171 : vector<2x128xf32>
    %230 = arith.mulf %214, %222 : vector<2x128xf32>
    %231 = arith.addf %229, %230 : vector<2x128xf32>
    %232 = math.tanh %231 : vector<2x128xf32>
    %233 = arith.mulf %228, %232 : vector<2x128xf32>
    %234 = tpu.concatenate %233, %202 in 1 : vector<2x128xf32>, vector<2x128xf32> -> vector<2x256xf32>
    %235 = arith.truncf %234 : vector<2x256xf32> to vector<2x256xbf16>
    %cst_61 = arith.constant dense<0.000000e+00> : vector<2x512xf32>
    %236 = tpu.matmul %235, %15, %cst_61 {dimension_numbers = #tpu.dot_dimension_numbers<[1], [0], [0], [1], [0, 0, 1, 1], [], []>} : vector<2x256xbf16>, vector<256x512xbf16>, vector<2x512xf32> -> vector<2x512xf32>
    %237 = arith.addf %236, %18 : vector<2x512xf32>
    %238 = vector.extract_strided_slice %237 {offsets = [0, 0], sizes = [2, 128], strides = [1, 1]} : vector<2x512xf32> to vector<2x128xf32>
    %239 = arith.negf %238 : vector<2x128xf32>
    %240 = math.exp %239 : vector<2x128xf32>
    %cst_62 = arith.constant 1.000000e+00 : f32
    %241 = vector.broadcast %cst_62 : f32 to vector<2x128xf32>
    %242 = arith.addf %241, %240 : vector<2x128xf32>
    %243 = arith.divf %241, %242 : vector<2x128xf32>
    %244 = vector.extract_strided_slice %237 {offsets = [0, 128], sizes = [2, 128], strides = [1, 1]} : vector<2x512xf32> to vector<2x128xf32>
    %245 = arith.negf %244 : vector<2x128xf32>
    %246 = math.exp %245 : vector<2x128xf32>
    %cst_63 = arith.constant 1.000000e+00 : f32
    %247 = vector.broadcast %cst_63 : f32 to vector<2x128xf32>
    %248 = arith.addf %247, %246 : vector<2x128xf32>
    %249 = arith.divf %247, %248 : vector<2x128xf32>
    %250 = vector.extract_strided_slice %237 {offsets = [0, 256], sizes = [2, 128], strides = [1, 1]} : vector<2x512xf32> to vector<2x128xf32>
    %251 = math.tanh %250 : vector<2x128xf32>
    %252 = vector.extract_strided_slice %237 {offsets = [0, 384], sizes = [2, 128], strides = [1, 1]} : vector<2x512xf32> to vector<2x128xf32>
    %253 = arith.negf %252 : vector<2x128xf32>
    %254 = math.exp %253 : vector<2x128xf32>
    %cst_64 = arith.constant 1.000000e+00 : f32
    %255 = vector.broadcast %cst_64 : f32 to vector<2x128xf32>
    %256 = arith.addf %255, %254 : vector<2x128xf32>
    %257 = arith.divf %255, %256 : vector<2x128xf32>
    %258 = arith.mulf %249, %200 : vector<2x128xf32>
    %259 = arith.mulf %243, %251 : vector<2x128xf32>
    %260 = arith.addf %258, %259 : vector<2x128xf32>
    %261 = math.tanh %260 : vector<2x128xf32>
    %262 = arith.mulf %257, %261 : vector<2x128xf32>
    %c4_i32 = arith.constant 4 : i32
    %c0_65 = arith.constant 0 : index
    %263 = arith.index_cast %c4_i32 : i32 to index
    %c0_66 = arith.constant 0 : index
    %264 = vector.load %arg15[%c0_65, %263, %c0_66] : memref<2x8x512xf32, #tpu.memory_space<vmem>>, vector<2x1x512xf32>
    %265 = vector.shape_cast %264 : vector<2x1x512xf32> to vector<2x512xf32>
    %266 = arith.truncf %233 : vector<2x128xf32> to vector<2x128xbf16>
    %cst_67 = arith.constant dense<0.000000e+00> : vector<2x512xf32>
    %267 = tpu.matmul %266, %14, %cst_67 {dimension_numbers = #tpu.dot_dimension_numbers<[1], [0], [0], [1], [0, 0, 1, 1], [], []>} : vector<2x128xbf16>, vector<128x512xbf16>, vector<2x512xf32> -> vector<2x512xf32>
    %268 = arith.addf %265, %267 : vector<2x512xf32>
    %269 = vector.extract_strided_slice %268 {offsets = [0, 0], sizes = [2, 128], strides = [1, 1]} : vector<2x512xf32> to vector<2x128xf32>
    %270 = arith.negf %269 : vector<2x128xf32>
    %271 = math.exp %270 : vector<2x128xf32>
    %cst_68 = arith.constant 1.000000e+00 : f32
    %272 = vector.broadcast %cst_68 : f32 to vector<2x128xf32>
    %273 = arith.addf %272, %271 : vector<2x128xf32>
    %274 = arith.divf %272, %273 : vector<2x128xf32>
    %275 = vector.extract_strided_slice %268 {offsets = [0, 128], sizes = [2, 128], strides = [1, 1]} : vector<2x512xf32> to vector<2x128xf32>
    %276 = arith.negf %275 : vector<2x128xf32>
    %277 = math.exp %276 : vector<2x128xf32>
    %cst_69 = arith.constant 1.000000e+00 : f32
    %278 = vector.broadcast %cst_69 : f32 to vector<2x128xf32>
    %279 = arith.addf %278, %277 : vector<2x128xf32>
    %280 = arith.divf %278, %279 : vector<2x128xf32>
    %281 = vector.extract_strided_slice %268 {offsets = [0, 256], sizes = [2, 128], strides = [1, 1]} : vector<2x512xf32> to vector<2x128xf32>
    %282 = math.tanh %281 : vector<2x128xf32>
    %283 = vector.extract_strided_slice %268 {offsets = [0, 384], sizes = [2, 128], strides = [1, 1]} : vector<2x512xf32> to vector<2x128xf32>
    %284 = arith.negf %283 : vector<2x128xf32>
    %285 = math.exp %284 : vector<2x128xf32>
    %cst_70 = arith.constant 1.000000e+00 : f32
    %286 = vector.broadcast %cst_70 : f32 to vector<2x128xf32>
    %287 = arith.addf %286, %285 : vector<2x128xf32>
    %288 = arith.divf %286, %287 : vector<2x128xf32>
    %289 = arith.mulf %280, %231 : vector<2x128xf32>
    %290 = arith.mulf %274, %282 : vector<2x128xf32>
    %291 = arith.addf %289, %290 : vector<2x128xf32>
    %292 = math.tanh %291 : vector<2x128xf32>
    %293 = arith.mulf %288, %292 : vector<2x128xf32>
    %294 = tpu.concatenate %293, %262 in 1 : vector<2x128xf32>, vector<2x128xf32> -> vector<2x256xf32>
    %295 = arith.truncf %294 : vector<2x256xf32> to vector<2x256xbf16>
    %cst_71 = arith.constant dense<0.000000e+00> : vector<2x512xf32>
    %296 = tpu.matmul %295, %15, %cst_71 {dimension_numbers = #tpu.dot_dimension_numbers<[1], [0], [0], [1], [0, 0, 1, 1], [], []>} : vector<2x256xbf16>, vector<256x512xbf16>, vector<2x512xf32> -> vector<2x512xf32>
    %297 = arith.addf %296, %18 : vector<2x512xf32>
    %298 = vector.extract_strided_slice %297 {offsets = [0, 0], sizes = [2, 128], strides = [1, 1]} : vector<2x512xf32> to vector<2x128xf32>
    %299 = arith.negf %298 : vector<2x128xf32>
    %300 = math.exp %299 : vector<2x128xf32>
    %cst_72 = arith.constant 1.000000e+00 : f32
    %301 = vector.broadcast %cst_72 : f32 to vector<2x128xf32>
    %302 = arith.addf %301, %300 : vector<2x128xf32>
    %303 = arith.divf %301, %302 : vector<2x128xf32>
    %304 = vector.extract_strided_slice %297 {offsets = [0, 128], sizes = [2, 128], strides = [1, 1]} : vector<2x512xf32> to vector<2x128xf32>
    %305 = arith.negf %304 : vector<2x128xf32>
    %306 = math.exp %305 : vector<2x128xf32>
    %cst_73 = arith.constant 1.000000e+00 : f32
    %307 = vector.broadcast %cst_73 : f32 to vector<2x128xf32>
    %308 = arith.addf %307, %306 : vector<2x128xf32>
    %309 = arith.divf %307, %308 : vector<2x128xf32>
    %310 = vector.extract_strided_slice %297 {offsets = [0, 256], sizes = [2, 128], strides = [1, 1]} : vector<2x512xf32> to vector<2x128xf32>
    %311 = math.tanh %310 : vector<2x128xf32>
    %312 = vector.extract_strided_slice %297 {offsets = [0, 384], sizes = [2, 128], strides = [1, 1]} : vector<2x512xf32> to vector<2x128xf32>
    %313 = arith.negf %312 : vector<2x128xf32>
    %314 = math.exp %313 : vector<2x128xf32>
    %cst_74 = arith.constant 1.000000e+00 : f32
    %315 = vector.broadcast %cst_74 : f32 to vector<2x128xf32>
    %316 = arith.addf %315, %314 : vector<2x128xf32>
    %317 = arith.divf %315, %316 : vector<2x128xf32>
    %318 = arith.mulf %309, %260 : vector<2x128xf32>
    %319 = arith.mulf %303, %311 : vector<2x128xf32>
    %320 = arith.addf %318, %319 : vector<2x128xf32>
    %321 = math.tanh %320 : vector<2x128xf32>
    %322 = arith.mulf %317, %321 : vector<2x128xf32>
    %c5_i32 = arith.constant 5 : i32
    %c0_75 = arith.constant 0 : index
    %323 = arith.index_cast %c5_i32 : i32 to index
    %c0_76 = arith.constant 0 : index
    %324 = vector.load %arg15[%c0_75, %323, %c0_76] : memref<2x8x512xf32, #tpu.memory_space<vmem>>, vector<2x1x512xf32>
    %325 = vector.shape_cast %324 : vector<2x1x512xf32> to vector<2x512xf32>
    %326 = arith.truncf %293 : vector<2x128xf32> to vector<2x128xbf16>
    %cst_77 = arith.constant dense<0.000000e+00> : vector<2x512xf32>
    %327 = tpu.matmul %326, %14, %cst_77 {dimension_numbers = #tpu.dot_dimension_numbers<[1], [0], [0], [1], [0, 0, 1, 1], [], []>} : vector<2x128xbf16>, vector<128x512xbf16>, vector<2x512xf32> -> vector<2x512xf32>
    %328 = arith.addf %325, %327 : vector<2x512xf32>
    %329 = vector.extract_strided_slice %328 {offsets = [0, 0], sizes = [2, 128], strides = [1, 1]} : vector<2x512xf32> to vector<2x128xf32>
    %330 = arith.negf %329 : vector<2x128xf32>
    %331 = math.exp %330 : vector<2x128xf32>
    %cst_78 = arith.constant 1.000000e+00 : f32
    %332 = vector.broadcast %cst_78 : f32 to vector<2x128xf32>
    %333 = arith.addf %332, %331 : vector<2x128xf32>
    %334 = arith.divf %332, %333 : vector<2x128xf32>
    %335 = vector.extract_strided_slice %328 {offsets = [0, 128], sizes = [2, 128], strides = [1, 1]} : vector<2x512xf32> to vector<2x128xf32>
    %336 = arith.negf %335 : vector<2x128xf32>
    %337 = math.exp %336 : vector<2x128xf32>
    %cst_79 = arith.constant 1.000000e+00 : f32
    %338 = vector.broadcast %cst_79 : f32 to vector<2x128xf32>
    %339 = arith.addf %338, %337 : vector<2x128xf32>
    %340 = arith.divf %338, %339 : vector<2x128xf32>
    %341 = vector.extract_strided_slice %328 {offsets = [0, 256], sizes = [2, 128], strides = [1, 1]} : vector<2x512xf32> to vector<2x128xf32>
    %342 = math.tanh %341 : vector<2x128xf32>
    %343 = vector.extract_strided_slice %328 {offsets = [0, 384], sizes = [2, 128], strides = [1, 1]} : vector<2x512xf32> to vector<2x128xf32>
    %344 = arith.negf %343 : vector<2x128xf32>
    %345 = math.exp %344 : vector<2x128xf32>
    %cst_80 = arith.constant 1.000000e+00 : f32
    %346 = vector.broadcast %cst_80 : f32 to vector<2x128xf32>
    %347 = arith.addf %346, %345 : vector<2x128xf32>
    %348 = arith.divf %346, %347 : vector<2x128xf32>
    %349 = arith.mulf %340, %291 : vector<2x128xf32>
    %350 = arith.mulf %334, %342 : vector<2x128xf32>
    %351 = arith.addf %349, %350 : vector<2x128xf32>
    %352 = math.tanh %351 : vector<2x128xf32>
    %353 = arith.mulf %348, %352 : vector<2x128xf32>
    %354 = tpu.concatenate %353, %322 in 1 : vector<2x128xf32>, vector<2x128xf32> -> vector<2x256xf32>
    %355 = arith.truncf %354 : vector<2x256xf32> to vector<2x256xbf16>
    %cst_81 = arith.constant dense<0.000000e+00> : vector<2x512xf32>
    %356 = tpu.matmul %355, %15, %cst_81 {dimension_numbers = #tpu.dot_dimension_numbers<[1], [0], [0], [1], [0, 0, 1, 1], [], []>} : vector<2x256xbf16>, vector<256x512xbf16>, vector<2x512xf32> -> vector<2x512xf32>
    %357 = arith.addf %356, %18 : vector<2x512xf32>
    %358 = vector.extract_strided_slice %357 {offsets = [0, 0], sizes = [2, 128], strides = [1, 1]} : vector<2x512xf32> to vector<2x128xf32>
    %359 = arith.negf %358 : vector<2x128xf32>
    %360 = math.exp %359 : vector<2x128xf32>
    %cst_82 = arith.constant 1.000000e+00 : f32
    %361 = vector.broadcast %cst_82 : f32 to vector<2x128xf32>
    %362 = arith.addf %361, %360 : vector<2x128xf32>
    %363 = arith.divf %361, %362 : vector<2x128xf32>
    %364 = vector.extract_strided_slice %357 {offsets = [0, 128], sizes = [2, 128], strides = [1, 1]} : vector<2x512xf32> to vector<2x128xf32>
    %365 = arith.negf %364 : vector<2x128xf32>
    %366 = math.exp %365 : vector<2x128xf32>
    %cst_83 = arith.constant 1.000000e+00 : f32
    %367 = vector.broadcast %cst_83 : f32 to vector<2x128xf32>
    %368 = arith.addf %367, %366 : vector<2x128xf32>
    %369 = arith.divf %367, %368 : vector<2x128xf32>
    %370 = vector.extract_strided_slice %357 {offsets = [0, 256], sizes = [2, 128], strides = [1, 1]} : vector<2x512xf32> to vector<2x128xf32>
    %371 = math.tanh %370 : vector<2x128xf32>
    %372 = vector.extract_strided_slice %357 {offsets = [0, 384], sizes = [2, 128], strides = [1, 1]} : vector<2x512xf32> to vector<2x128xf32>
    %373 = arith.negf %372 : vector<2x128xf32>
    %374 = math.exp %373 : vector<2x128xf32>
    %cst_84 = arith.constant 1.000000e+00 : f32
    %375 = vector.broadcast %cst_84 : f32 to vector<2x128xf32>
    %376 = arith.addf %375, %374 : vector<2x128xf32>
    %377 = arith.divf %375, %376 : vector<2x128xf32>
    %378 = arith.mulf %369, %320 : vector<2x128xf32>
    %379 = arith.mulf %363, %371 : vector<2x128xf32>
    %380 = arith.addf %378, %379 : vector<2x128xf32>
    %381 = math.tanh %380 : vector<2x128xf32>
    %382 = arith.mulf %377, %381 : vector<2x128xf32>
    %c6_i32 = arith.constant 6 : i32
    %c0_85 = arith.constant 0 : index
    %383 = arith.index_cast %c6_i32 : i32 to index
    %c0_86 = arith.constant 0 : index
    %384 = vector.load %arg15[%c0_85, %383, %c0_86] : memref<2x8x512xf32, #tpu.memory_space<vmem>>, vector<2x1x512xf32>
    %385 = vector.shape_cast %384 : vector<2x1x512xf32> to vector<2x512xf32>
    %386 = arith.truncf %353 : vector<2x128xf32> to vector<2x128xbf16>
    %cst_87 = arith.constant dense<0.000000e+00> : vector<2x512xf32>
    %387 = tpu.matmul %386, %14, %cst_87 {dimension_numbers = #tpu.dot_dimension_numbers<[1], [0], [0], [1], [0, 0, 1, 1], [], []>} : vector<2x128xbf16>, vector<128x512xbf16>, vector<2x512xf32> -> vector<2x512xf32>
    %388 = arith.addf %385, %387 : vector<2x512xf32>
    %389 = vector.extract_strided_slice %388 {offsets = [0, 0], sizes = [2, 128], strides = [1, 1]} : vector<2x512xf32> to vector<2x128xf32>
    %390 = arith.negf %389 : vector<2x128xf32>
    %391 = math.exp %390 : vector<2x128xf32>
    %cst_88 = arith.constant 1.000000e+00 : f32
    %392 = vector.broadcast %cst_88 : f32 to vector<2x128xf32>
    %393 = arith.addf %392, %391 : vector<2x128xf32>
    %394 = arith.divf %392, %393 : vector<2x128xf32>
    %395 = vector.extract_strided_slice %388 {offsets = [0, 128], sizes = [2, 128], strides = [1, 1]} : vector<2x512xf32> to vector<2x128xf32>
    %396 = arith.negf %395 : vector<2x128xf32>
    %397 = math.exp %396 : vector<2x128xf32>
    %cst_89 = arith.constant 1.000000e+00 : f32
    %398 = vector.broadcast %cst_89 : f32 to vector<2x128xf32>
    %399 = arith.addf %398, %397 : vector<2x128xf32>
    %400 = arith.divf %398, %399 : vector<2x128xf32>
    %401 = vector.extract_strided_slice %388 {offsets = [0, 256], sizes = [2, 128], strides = [1, 1]} : vector<2x512xf32> to vector<2x128xf32>
    %402 = math.tanh %401 : vector<2x128xf32>
    %403 = vector.extract_strided_slice %388 {offsets = [0, 384], sizes = [2, 128], strides = [1, 1]} : vector<2x512xf32> to vector<2x128xf32>
    %404 = arith.negf %403 : vector<2x128xf32>
    %405 = math.exp %404 : vector<2x128xf32>
    %cst_90 = arith.constant 1.000000e+00 : f32
    %406 = vector.broadcast %cst_90 : f32 to vector<2x128xf32>
    %407 = arith.addf %406, %405 : vector<2x128xf32>
    %408 = arith.divf %406, %407 : vector<2x128xf32>
    %409 = arith.mulf %400, %351 : vector<2x128xf32>
    %410 = arith.mulf %394, %402 : vector<2x128xf32>
    %411 = arith.addf %409, %410 : vector<2x128xf32>
    %412 = math.tanh %411 : vector<2x128xf32>
    %413 = arith.mulf %408, %412 : vector<2x128xf32>
    %414 = tpu.concatenate %413, %382 in 1 : vector<2x128xf32>, vector<2x128xf32> -> vector<2x256xf32>
    %415 = arith.truncf %414 : vector<2x256xf32> to vector<2x256xbf16>
    %cst_91 = arith.constant dense<0.000000e+00> : vector<2x512xf32>
    %416 = tpu.matmul %415, %15, %cst_91 {dimension_numbers = #tpu.dot_dimension_numbers<[1], [0], [0], [1], [0, 0, 1, 1], [], []>} : vector<2x256xbf16>, vector<256x512xbf16>, vector<2x512xf32> -> vector<2x512xf32>
    %417 = arith.addf %416, %18 : vector<2x512xf32>
    %418 = vector.extract_strided_slice %417 {offsets = [0, 0], sizes = [2, 128], strides = [1, 1]} : vector<2x512xf32> to vector<2x128xf32>
    %419 = arith.negf %418 : vector<2x128xf32>
    %420 = math.exp %419 : vector<2x128xf32>
    %cst_92 = arith.constant 1.000000e+00 : f32
    %421 = vector.broadcast %cst_92 : f32 to vector<2x128xf32>
    %422 = arith.addf %421, %420 : vector<2x128xf32>
    %423 = arith.divf %421, %422 : vector<2x128xf32>
    %424 = vector.extract_strided_slice %417 {offsets = [0, 128], sizes = [2, 128], strides = [1, 1]} : vector<2x512xf32> to vector<2x128xf32>
    %425 = arith.negf %424 : vector<2x128xf32>
    %426 = math.exp %425 : vector<2x128xf32>
    %cst_93 = arith.constant 1.000000e+00 : f32
    %427 = vector.broadcast %cst_93 : f32 to vector<2x128xf32>
    %428 = arith.addf %427, %426 : vector<2x128xf32>
    %429 = arith.divf %427, %428 : vector<2x128xf32>
    %430 = vector.extract_strided_slice %417 {offsets = [0, 256], sizes = [2, 128], strides = [1, 1]} : vector<2x512xf32> to vector<2x128xf32>
    %431 = math.tanh %430 : vector<2x128xf32>
    %432 = vector.extract_strided_slice %417 {offsets = [0, 384], sizes = [2, 128], strides = [1, 1]} : vector<2x512xf32> to vector<2x128xf32>
    %433 = arith.negf %432 : vector<2x128xf32>
    %434 = math.exp %433 : vector<2x128xf32>
    %cst_94 = arith.constant 1.000000e+00 : f32
    %435 = vector.broadcast %cst_94 : f32 to vector<2x128xf32>
    %436 = arith.addf %435, %434 : vector<2x128xf32>
    %437 = arith.divf %435, %436 : vector<2x128xf32>
    %438 = arith.mulf %429, %380 : vector<2x128xf32>
    %439 = arith.mulf %423, %431 : vector<2x128xf32>
    %440 = arith.addf %438, %439 : vector<2x128xf32>
    %441 = math.tanh %440 : vector<2x128xf32>
    %442 = arith.mulf %437, %441 : vector<2x128xf32>
    %c7_i32 = arith.constant 7 : i32
    %c0_95 = arith.constant 0 : index
    %443 = arith.index_cast %c7_i32 : i32 to index
    %c0_96 = arith.constant 0 : index
    %444 = vector.load %arg15[%c0_95, %443, %c0_96] : memref<2x8x512xf32, #tpu.memory_space<vmem>>, vector<2x1x512xf32>
    %445 = vector.shape_cast %444 : vector<2x1x512xf32> to vector<2x512xf32>
    %446 = arith.truncf %413 : vector<2x128xf32> to vector<2x128xbf16>
    %cst_97 = arith.constant dense<0.000000e+00> : vector<2x512xf32>
    %447 = tpu.matmul %446, %14, %cst_97 {dimension_numbers = #tpu.dot_dimension_numbers<[1], [0], [0], [1], [0, 0, 1, 1], [], []>} : vector<2x128xbf16>, vector<128x512xbf16>, vector<2x512xf32> -> vector<2x512xf32>
    %448 = arith.addf %445, %447 : vector<2x512xf32>
    %449 = vector.extract_strided_slice %448 {offsets = [0, 0], sizes = [2, 128], strides = [1, 1]} : vector<2x512xf32> to vector<2x128xf32>
    %450 = arith.negf %449 : vector<2x128xf32>
    %451 = math.exp %450 : vector<2x128xf32>
    %cst_98 = arith.constant 1.000000e+00 : f32
    %452 = vector.broadcast %cst_98 : f32 to vector<2x128xf32>
    %453 = arith.addf %452, %451 : vector<2x128xf32>
    %454 = arith.divf %452, %453 : vector<2x128xf32>
    %455 = vector.extract_strided_slice %448 {offsets = [0, 128], sizes = [2, 128], strides = [1, 1]} : vector<2x512xf32> to vector<2x128xf32>
    %456 = arith.negf %455 : vector<2x128xf32>
    %457 = math.exp %456 : vector<2x128xf32>
    %cst_99 = arith.constant 1.000000e+00 : f32
    %458 = vector.broadcast %cst_99 : f32 to vector<2x128xf32>
    %459 = arith.addf %458, %457 : vector<2x128xf32>
    %460 = arith.divf %458, %459 : vector<2x128xf32>
    %461 = vector.extract_strided_slice %448 {offsets = [0, 256], sizes = [2, 128], strides = [1, 1]} : vector<2x512xf32> to vector<2x128xf32>
    %462 = math.tanh %461 : vector<2x128xf32>
    %463 = vector.extract_strided_slice %448 {offsets = [0, 384], sizes = [2, 128], strides = [1, 1]} : vector<2x512xf32> to vector<2x128xf32>
    %464 = arith.negf %463 : vector<2x128xf32>
    %465 = math.exp %464 : vector<2x128xf32>
    %cst_100 = arith.constant 1.000000e+00 : f32
    %466 = vector.broadcast %cst_100 : f32 to vector<2x128xf32>
    %467 = arith.addf %466, %465 : vector<2x128xf32>
    %468 = arith.divf %466, %467 : vector<2x128xf32>
    %469 = arith.mulf %460, %411 : vector<2x128xf32>
    %470 = arith.mulf %454, %462 : vector<2x128xf32>
    %471 = arith.addf %469, %470 : vector<2x128xf32>
    %472 = math.tanh %471 : vector<2x128xf32>
    %473 = arith.mulf %468, %472 : vector<2x128xf32>
    %474 = tpu.concatenate %473, %442 in 1 : vector<2x128xf32>, vector<2x128xf32> -> vector<2x256xf32>
    %475 = arith.truncf %474 : vector<2x256xf32> to vector<2x256xbf16>
    %cst_101 = arith.constant dense<0.000000e+00> : vector<2x512xf32>
    %476 = tpu.matmul %475, %15, %cst_101 {dimension_numbers = #tpu.dot_dimension_numbers<[1], [0], [0], [1], [0, 0, 1, 1], [], []>} : vector<2x256xbf16>, vector<256x512xbf16>, vector<2x512xf32> -> vector<2x512xf32>
    %477 = arith.addf %476, %18 : vector<2x512xf32>
    %478 = vector.extract_strided_slice %477 {offsets = [0, 0], sizes = [2, 128], strides = [1, 1]} : vector<2x512xf32> to vector<2x128xf32>
    %479 = arith.negf %478 : vector<2x128xf32>
    %480 = math.exp %479 : vector<2x128xf32>
    %cst_102 = arith.constant 1.000000e+00 : f32
    %481 = vector.broadcast %cst_102 : f32 to vector<2x128xf32>
    %482 = arith.addf %481, %480 : vector<2x128xf32>
    %483 = arith.divf %481, %482 : vector<2x128xf32>
    %484 = vector.extract_strided_slice %477 {offsets = [0, 128], sizes = [2, 128], strides = [1, 1]} : vector<2x512xf32> to vector<2x128xf32>
    %485 = arith.negf %484 : vector<2x128xf32>
    %486 = math.exp %485 : vector<2x128xf32>
    %cst_103 = arith.constant 1.000000e+00 : f32
    %487 = vector.broadcast %cst_103 : f32 to vector<2x128xf32>
    %488 = arith.addf %487, %486 : vector<2x128xf32>
    %489 = arith.divf %487, %488 : vector<2x128xf32>
    %490 = vector.extract_strided_slice %477 {offsets = [0, 256], sizes = [2, 128], strides = [1, 1]} : vector<2x512xf32> to vector<2x128xf32>
    %491 = math.tanh %490 : vector<2x128xf32>
    %492 = vector.extract_strided_slice %477 {offsets = [0, 384], sizes = [2, 128], strides = [1, 1]} : vector<2x512xf32> to vector<2x128xf32>
    %493 = arith.negf %492 : vector<2x128xf32>
    %494 = math.exp %493 : vector<2x128xf32>
    %cst_104 = arith.constant 1.000000e+00 : f32
    %495 = vector.broadcast %cst_104 : f32 to vector<2x128xf32>
    %496 = arith.addf %495, %494 : vector<2x128xf32>
    %497 = arith.divf %495, %496 : vector<2x128xf32>
    %498 = arith.mulf %489, %440 : vector<2x128xf32>
    %499 = arith.mulf %483, %491 : vector<2x128xf32>
    %500 = arith.addf %498, %499 : vector<2x128xf32>
    %501 = math.tanh %500 : vector<2x128xf32>
    %502 = arith.mulf %497, %501 : vector<2x128xf32>
    %c8_i32 = arith.constant 8 : i32
    %c0_105 = arith.constant 0 : index
    %c0_106 = arith.constant 0 : index
    %503 = vector.load %arg16[%c0_105, %c0_106] : memref<2x128xf32, #tpu.memory_space<vmem>>, vector<2x128xf32>
    tpu.vector_store %arg16[%c0_105, %c0_106], %473 {strides = array<i32>} : memref<2x128xf32, #tpu.memory_space<vmem>>, vector<2x128xf32>,
    %c0_107 = arith.constant 0 : index
    %c0_108 = arith.constant 0 : index
    %504 = vector.load %arg17[%c0_107, %c0_108] : memref<2x128xf32, #tpu.memory_space<vmem>>, vector<2x128xf32>
    tpu.vector_store %arg17[%c0_107, %c0_108], %471 {strides = array<i32>} : memref<2x128xf32, #tpu.memory_space<vmem>>, vector<2x128xf32>,
    %c0_109 = arith.constant 0 : index
    %c0_110 = arith.constant 0 : index
    %505 = vector.load %arg18[%c0_109, %c0_110] : memref<2x128xf32, #tpu.memory_space<vmem>>, vector<2x128xf32>
    tpu.vector_store %arg18[%c0_109, %c0_110], %502 {strides = array<i32>} : memref<2x128xf32, #tpu.memory_space<vmem>>, vector<2x128xf32>,
    %c0_111 = arith.constant 0 : index
    %c0_112 = arith.constant 0 : index
    %506 = vector.load %arg19[%c0_111, %c0_112] : memref<2x128xf32, #tpu.memory_space<vmem>>, vector<2x128xf32>
    tpu.vector_store %arg19[%c0_111, %c0_112], %500 {strides = array<i32>} : memref<2x128xf32, #tpu.memory_space<vmem>>, vector<2x128xf32>,
    %c1_i32_113 = arith.constant 1 : i32
    %507 = arith.cmpi eq, %arg1, %c1_i32_113 : i32
    %508 = arith.extui %507 : i1 to i32
    %c0_i32_114 = arith.constant 0 : i32
    %509 = arith.cmpi ne, %508, %c0_i32_114 : i32
    scf.if %509 {
      %cst_115 = arith.constant dense<0.000000e+00> : vector<2xf32>
      %510 = vector.multi_reduction <add>, %502, %cst_115 [1] : vector<2x128xf32> to vector<2xf32>
      %511 = vector.shape_cast %510 : vector<2xf32> to vector<2x1xf32>
      %cst_116 = arith.constant 1.280000e+02 : f32
      %512 = vector.broadcast %cst_116 : f32 to vector<2x1xf32>
      %513 = arith.divf %511, %512 : vector<2x1xf32>
      %514 = vector.broadcast %513 : vector<2x1xf32> to vector<2x128xf32>
      %515 = arith.subf %502, %514 : vector<2x128xf32>
      %516 = arith.mulf %515, %515 : vector<2x128xf32>
      %cst_117 = arith.constant dense<0.000000e+00> : vector<2xf32>
      %517 = vector.multi_reduction <add>, %516, %cst_117 [1] : vector<2x128xf32> to vector<2xf32>
      %518 = vector.shape_cast %517 : vector<2xf32> to vector<2x1xf32>
      %cst_118 = arith.constant 1.280000e+02 : f32
      %519 = vector.broadcast %cst_118 : f32 to vector<2x1xf32>
      %520 = arith.divf %518, %519 : vector<2x1xf32>
      %521 = vector.broadcast %513 : vector<2x1xf32> to vector<2x128xf32>
      %522 = arith.subf %502, %521 : vector<2x128xf32>
      %cst_119 = arith.constant 9.99999974E-6 : f32
      %523 = vector.broadcast %cst_119 : f32 to vector<2x1xf32>
      %524 = arith.addf %520, %523 : vector<2x1xf32>
      %525 = math.rsqrt %524 : vector<2x1xf32>
      %526 = vector.broadcast %525 : vector<2x1xf32> to vector<2x128xf32>
      %527 = arith.mulf %522, %526 : vector<2x128xf32>
      %c0_120 = arith.constant 0 : index
      %c0_121 = arith.constant 0 : index
      %528 = vector.load %arg8[%c0_120, %c0_121] : memref<1x128xf32, #tpu.memory_space<vmem>>, vector<1x128xf32>
      %529 = vector.broadcast %528 : vector<1x128xf32> to vector<2x128xf32>
      %530 = arith.mulf %527, %529 : vector<2x128xf32>
      %c0_122 = arith.constant 0 : index
      %c0_123 = arith.constant 0 : index
      %531 = vector.load %arg9[%c0_122, %c0_123] : memref<1x128xf32, #tpu.memory_space<vmem>>, vector<1x128xf32>
      %532 = vector.broadcast %531 : vector<1x128xf32> to vector<2x128xf32>
      %533 = arith.addf %530, %532 : vector<2x128xf32>
      %c0_124 = arith.constant 0 : index
      %c0_125 = arith.constant 0 : index
      %534 = vector.load %arg10[%c0_124, %c0_125] : memref<128x64xf32, #tpu.memory_space<vmem>>, vector<128x64xf32>
      %cst_126 = arith.constant dense<0.000000e+00> : vector<2x64xf32>
      %535 = tpu.matmul %533, %534, %cst_126 {dimension_numbers = #tpu.dot_dimension_numbers<[1], [0], [0], [1], [0, 0, 1, 1], [], []>} : vector<2x128xf32>, vector<128x64xf32>, vector<2x64xf32> -> vector<2x64xf32>
      %c0_127 = arith.constant 0 : index
      %c0_128 = arith.constant 0 : index
      %536 = vector.load %arg11[%c0_127, %c0_128] : memref<1x64xf32, #tpu.memory_space<vmem>>, vector<1x64xf32>
      %537 = vector.broadcast %536 : vector<1x64xf32> to vector<2x64xf32>
      %538 = arith.addf %535, %537 : vector<2x64xf32>
      %cst_129 = arith.constant 0.000000e+00 : f32
      %539 = vector.broadcast %cst_129 : f32 to vector<2x64xf32>
      %540 = arith.maximumf %538, %539 : vector<2x64xf32>
      %c0_130 = arith.constant 0 : index
      %c0_131 = arith.constant 0 : index
      %541 = vector.load %arg12[%c0_130, %c0_131] : memref<64x3xf32, #tpu.memory_space<vmem>>, vector<64x3xf32>
      %cst_132 = arith.constant dense<0.000000e+00> : vector<2x3xf32>
      %542 = tpu.matmul %540, %541, %cst_132 {dimension_numbers = #tpu.dot_dimension_numbers<[1], [0], [0], [1], [0, 0, 1, 1], [], []>} : vector<2x64xf32>, vector<64x3xf32>, vector<2x3xf32> -> vector<2x3xf32>
      %c0_133 = arith.constant 0 : index
      %c0_134 = arith.constant 0 : index
      %543 = vector.load %arg13[%c0_133, %c0_134] : memref<1x3xf32, #tpu.memory_space<vmem>>, vector<1x3xf32>
      %544 = vector.broadcast %543 : vector<1x3xf32> to vector<2x3xf32>
      %545 = arith.addf %542, %544 : vector<2x3xf32>
      %c0_135 = arith.constant 0 : index
      %c0_136 = arith.constant 0 : index
      %546 = vector.load %arg14[%c0_135, %c0_136] : memref<2x3xf32, #tpu.memory_space<vmem>>, vector<2x3xf32>
      tpu.vector_store %arg14[%c0_135, %c0_136], %545 {strides = array<i32>} : memref<2x3xf32, #tpu.memory_space<vmem>>, vector<2x3xf32>,
    } else {
    }
    return
  }
  func.func @transform_0(%arg0: i32, %arg1: i32) -> (i32, i32, i32) {
    %c0_i32 = arith.constant 0 : i32
    %c0_i32_0 = arith.constant 0 : i32
    return %arg0, %arg1, %c0_i32 : i32, i32, i32
  }
  func.func @transform_1(%arg0: i32, %arg1: i32) -> (i32, i32) {
    %c0_i32 = arith.constant 0 : i32
    %c0_i32_0 = arith.constant 0 : i32
    %c0_i32_1 = arith.constant 0 : i32
    return %c0_i32, %c0_i32_0 : i32, i32
  }
  func.func @transform_2(%arg0: i32, %arg1: i32) -> (i32, i32) {
    %c0_i32 = arith.constant 0 : i32
    %c0_i32_0 = arith.constant 0 : i32
    %c0_i32_1 = arith.constant 0 : i32
    return %c0_i32, %c0_i32_0 : i32, i32
  }
  func.func @transform_3(%arg0: i32, %arg1: i32) -> (i32, i32) {
    %c0_i32 = arith.constant 0 : i32
    %c0_i32_0 = arith.constant 0 : i32
    %c0_i32_1 = arith.constant 0 : i32
    return %c0_i32, %c0_i32_0 : i32, i32
  }
  func.func @transform_4(%arg0: i32, %arg1: i32) -> (i32, i32) {
    %c0_i32 = arith.constant 0 : i32
    %c0_i32_0 = arith.constant 0 : i32
    %c0_i32_1 = arith.constant 0 : i32
    return %c0_i32, %c0_i32_0 : i32, i32
  }
  func.func @transform_5(%arg0: i32, %arg1: i32) -> (i32, i32) {
    %c0_i32 = arith.constant 0 : i32
    %c0_i32_0 = arith.constant 0 : i32
    %c0_i32_1 = arith.constant 0 : i32
    return %c0_i32, %c0_i32_0 : i32, i32
  }
  func.func @transform_6(%arg0: i32, %arg1: i32) -> (i32, i32) {
    %c0_i32 = arith.constant 0 : i32
    %c0_i32_0 = arith.constant 0 : i32
    %c0_i32_1 = arith.constant 0 : i32
    return %c0_i32, %c0_i32_0 : i32, i32
  }
  func.func @transform_7(%arg0: i32, %arg1: i32) -> (i32, i32) {
    %c0_i32 = arith.constant 0 : i32
    %c0_i32_0 = arith.constant 0 : i32
    %c0_i32_1 = arith.constant 0 : i32
    return %c0_i32, %c0_i32_0 : i32, i32
  }
  func.func @transform_8(%arg0: i32, %arg1: i32) -> (i32, i32) {
    %c0_i32 = arith.constant 0 : i32
    %c0_i32_0 = arith.constant 0 : i32
    %c0_i32_1 = arith.constant 0 : i32
    return %c0_i32, %c0_i32_0 : i32, i32
  }
  func.func @transform_9(%arg0: i32, %arg1: i32) -> (i32, i32) {
    %c0_i32 = arith.constant 0 : i32
    %c0_i32_0 = arith.constant 0 : i32
    %c0_i32_1 = arith.constant 0 : i32
    return %c0_i32, %c0_i32_0 : i32, i32
  }
  func.func @transform_10(%arg0: i32, %arg1: i32) -> (i32, i32) {
    %c0_i32 = arith.constant 0 : i32
    %c0_i32_0 = arith.constant 0 : i32
    %c0_i32_1 = arith.constant 0 : i32
    return %c0_i32, %c0_i32_0 : i32, i32
  }
  func.func @transform_11(%arg0: i32, %arg1: i32) -> (i32, i32) {
    %c0_i32 = arith.constant 0 : i32
    %c0_i32_0 = arith.constant 0 : i32
    %c0_i32_1 = arith.constant 0 : i32
    return %c0_i32, %c0_i32_0 : i32, i32
  }
  func.func @transform_12(%arg0: i32, %arg1: i32) -> (i32, i32) {
    %c0_i32 = arith.constant 0 : i32
    %c0_i32_0 = arith.constant 0 : i32
    return %arg0, %c0_i32 : i32, i32
  }
}

</mosaic_0001>

<llo_original>
// kernel: tpu_custom_call.1
$region0: #{tpu_custom_call.1}
  #allocation0 [shape = 'u32[]', space=smem, size = 0x4, offset = 0x4, fixed_abs, tag = 'smem constant byte address 0x4 - core index']
  #allocation1 [shape = 'u32[144,128]{1,0:T(1,128)}', space=vmem, size = 0x12000, scoped, tag = 'internal scratch']
  #allocation2 [shape = 'f32[2,8,512]{2,1,0:T(8,128)}', space=vmem, size = 0x8000, scoped, tag = 'scratch operand']
  #allocation3 [shape = 'f32[2,128]{1,0:T(2,128)}', space=vmem, size = 0x400, scoped, tag = 'scratch operand']
  #allocation4 [shape = 'f32[2,128]{1,0:T(2,128)}', space=vmem, size = 0x400, scoped, tag = 'scratch operand']
  #allocation5 [shape = 'f32[2,128]{1,0:T(2,128)}', space=vmem, size = 0x400, scoped, tag = 'scratch operand']
  #allocation6 [shape = 'f32[2,128]{1,0:T(2,128)}', space=vmem, size = 0x400, scoped, tag = 'scratch operand']
  %s0 = inlined_call_operand.vmem [shape: f32[2,16,4], index: 0, kind: input, shape index: {}]
  %s1 = inlined_call_operand.hbm [shape: bf16[4,512], index: 1, kind: input, shape index: {}]
  %s2 = inlined_call_operand.vmem [shape: bf16[128,512], index: 2, kind: input, shape index: {}]
  %s3 = inlined_call_operand.hbm [shape: f32[1,512], index: 3, kind: input, shape index: {}]
  %s4 = inlined_call_operand.hbm [shape: bf16[256,512], index: 4, kind: input, shape index: {}]
  %s5 = inlined_call_operand.hbm [shape: f32[1,512], index: 5, kind: input, shape index: {}]
  %s6 = inlined_call_operand.vmem [shape: f32[1,128], index: 6, kind: input, shape index: {}]
  %s7 = inlined_call_operand.vmem [shape: f32[1,128], index: 7, kind: input, shape index: {}]
  %s8 = inlined_call_operand.vmem [shape: f32[128,64], index: 8, kind: input, shape index: {}]
  %s9 = inlined_call_operand.vmem [shape: f32[1,64], index: 9, kind: input, shape index: {}]
  %s10 = inlined_call_operand.vmem [shape: f32[64,3], index: 10, kind: input, shape index: {}]
  %s11 = inlined_call_operand.vmem [shape: f32[1,3], index: 11, kind: input, shape index: {}]
  %s12 = inlined_call_operand.hbm [shape: f32[2,3], index: 12, kind: output, shape index: {}]
  %s13 = sld [smem:[#allocation0]]
  $region143: #{tpu_custom_call.1} parent=0
    _
  %s15 = ssub.s32 1, %s13
  %s16 = scalar_select 0, %s15, %s13
  $region1: #{tpu_custom_call.1} parent=0
    #allocation7 [shape = 'u8[16384]{0}', space=vmem, size = 0x4000, scoped, tag = 'input window, operand 0']
    #allocation8 [shape = 'u8[4096]{0}', space=vmem, size = 0x1000, scoped, tag = 'input window, operand 1, single buffered']
    #allocation9 [shape = 's32[2]{0}', space=sflag, size = 0x8, scoped, tag = 'scoped memory for tpu_custom_call.1']
    #allocation10 [shape = 's32[2]{0}', space=sflag, size = 0x8, scoped, tag = 'scoped memory for tpu_custom_call.1']
    #allocation11 [shape = 'u8[2048]{0}', space=vmem, size = 0x800, scoped, tag = 'input window, operand 3, single buffered']
    #allocation12 [shape = 's32[1]{0}', space=sflag, size = 0x4, scoped, tag = 'scoped memory for tpu_custom_call.1']
    #allocation13 [shape = 'u8[262144]{0}', space=vmem, size = 0x40000, scoped, tag = 'input window, operand 4, single buffered']
    #allocation14 [shape = 'u8[2048]{0}', space=vmem, size = 0x800, scoped, tag = 'input window, operand 5, single buffered']
    #allocation15 [shape = 's32[1]{0}', space=sflag, size = 0x4, scoped, tag = 'scoped memory for tpu_custom_call.1']
    #allocation16 [shape = 'u8[1024]{0}', space=vmem, size = 0x400, scoped, tag = 'output window, operand 0, single buffered']
    %17 = vsyncpa [#allocation9], 0
    %18 = vsyncpa [#allocation12], 0
    %19 = vsyncpa [#allocation15], 0
    %20 = vsyncpa [#allocation10], 0
    loop: start=0, step=1, limit=4
    $region2: #{tpu_custom_call.1} parent=1 // loop_pre_header
      _
    $region3: #{tpu_custom_call.1} parent=1 // loop_header
      %s22 = sphi 0, %s26
      %p23 = scmp.ge.s32.totalorder %s22, 4
      %s29 = sphi 0, %s41
      %s30 = sphi 0, %s37
      %s31 = sphi 0, %s29
      %s32 = sphi 0, %s30
      %s33 = sphi 0, %s31
      %s34 = sphi 0, %s32
      %s46 = sphi 0, %s48
      %s49 = sphi 0, %s46
      %s50 = sphi 0, %s49
      %s66 = sphi 0, %s50
      %s70 = sphi 0, %s70
      %s72 = sphi 0, %s70
      %s73 = sphi 0, %s72
      %s87 = sphi 0, %s73
      %s91 = sphi 0, %s91
      %s93 = sphi 0, %s91
      %s94 = sphi 0, %s93
      %s108 = sphi 0, %s94
      %s112 = sphi 0, %s112
      %s114 = sphi 0, %s112
      %s115 = sphi 0, %s114
      %s129 = sphi 0, %s115
      %s133 = sphi 0, %s133
      %s135 = sphi 0, %s133
      %s136 = sphi 0, %s135
      %s150 = sphi 0, %s136
      %s154 = sphi 0, %s154
      %s156 = sphi 0, %s154
      %s157 = sphi 0, %s156
      %s171 = sphi 0, %s157
      %s175 = sphi 0, %s175
      %s177 = sphi 0, %s175
      %s178 = sphi 0, %s177
      %s192 = sphi 0, %s178
      %s196 = sphi 0, %s196
      %s198 = sphi 0, %s196
      %s199 = sphi 0, %s198
      %s213 = sphi 0, %s199
      %s217 = sphi 0, %s217
      %s219 = sphi 0, %s217
      %s220 = sphi 0, %s219
      %s234 = sphi 0, %s220
      %s238 = sphi 0, %s238
      %s240 = sphi 0, %s238
      %s241 = sphi 0, %s240
      %s255 = sphi 0, %s241
      %s259 = sphi 0, %s259
      %s261 = sphi 0, %s259
      %s262 = sphi 0, %s261
      %s276 = sphi 0, %s262
      %s280 = sphi 0, %s280
      %s282 = sphi 0, %s280
      %s283 = sphi 0, %s282
      %s297 = sphi 0, %s283
      %s303 = sphi 0, %s305
      %s306 = sphi 0, %s303
      %s307 = sphi 0, %s306
      %s323 = sphi 0, %s307
    $region4: #{tpu_custom_call.1} parent=1 // loop_header_branch
      %25 = sbr.rel (%p23) target = $region8
    $region5: #{tpu_custom_call.1} parent=1 // loop_body
      %s27 = ssub.s32 %s22, 1
      %s28 = ssub.s32 %s22, 2
      %s35 = sadd.s32 1, %s30
      %p36 = scmp.ge.s32.totalorder %s35, 2
      %s37 = scalar_select %p36, 0, %s35
      %s38 = sadd.s32 1, %s29
      %s39 = scalar_select %p36, %s38, %s29
      %p40 = scmp.ge.s32.totalorder %s39, 1
      %s41 = scalar_select %p40, 0, %s39
      %s42 = ssub.s32 %s29, %s41
      %s43 = ssub.s32 %s30, %s37
      %s44 = sor.u32 %s42, %s43
      %p45 = scmp.eq.s32.totalorder %s44, 0
      %s47 = sadd.s32 %s46, 1
      %s48 = scalar_select %p45, %s46, %s47
      %p51 = pneg %p45
      %p52 = scmp.eq.s32.totalorder %s22, 1
      %p53 = por %p51, %p52
      %p54 = scmp.ne.s32.totalorder %s46, %s49
      %p55 = scmp.eq.s32.totalorder %s22, 0
      %p56 = por %p54, %p55
      %p57 = scmp.ne.s32.totalorder %s46, %s49
      %p58 = scmp.eq.s32.totalorder %s27, 1
      %p59 = por %p57, %p58
      %p60 = scmp.ne.s32.totalorder %s49, %s50
      %p61 = scmp.eq.s32.totalorder %s27, 0
      %p62 = por %p60, %p61
      %p63 = scmp.ne.s32.totalorder %s49, %s50
      %p64 = scmp.eq.s32.totalorder %s28, 1
      %p65 = por %p63, %p64
      %p67 = scmp.ne.s32.totalorder %s50, %s66
      %p68 = scmp.eq.s32.totalorder %s28, 0
      %p69 = por %p67, %p68
      %s71 = sadd.s32 %s70, 1
      %p74 = scmp.eq.s32.totalorder %s22, 1
      %p75 = scmp.ne.s32.totalorder %s70, %s72
      %p76 = scmp.eq.s32.totalorder %s22, 0
      %p77 = por %p75, %p76
      %p78 = scmp.ne.s32.totalorder %s70, %s72
      %p79 = scmp.eq.s32.totalorder %s27, 1
      %p80 = por %p78, %p79
      %p81 = scmp.ne.s32.totalorder %s72, %s73
      %p82 = scmp.eq.s32.totalorder %s27, 0
      %p83 = por %p81, %p82
      %p84 = scmp.ne.s32.totalorder %s72, %s73
      %p85 = scmp.eq.s32.totalorder %s28, 1
      %p86 = por %p84, %p85
      %p88 = scmp.ne.s32.totalorder %s73, %s87
      %p89 = scmp.eq.s32.totalorder %s28, 0
      %p90 = por %p88, %p89
      %s92 = sadd.s32 %s91, 1
      %p95 = scmp.eq.s32.totalorder %s22, 1
      %p96 = scmp.ne.s32.totalorder %s91, %s93
      %p97 = scmp.eq.s32.totalorder %s22, 0
      %p98 = por %p96, %p97
      %p99 = scmp.ne.s32.totalorder %s91, %s93
      %p100 = scmp.eq.s32.totalorder %s27, 1
      %p101 = por %p99, %p100
      %p102 = scmp.ne.s32.totalorder %s93, %s94
      %p103 = scmp.eq.s32.totalorder %s27, 0
      %p104 = por %p102, %p103
      %p105 = scmp.ne.s32.totalorder %s93, %s94
      %p106 = scmp.eq.s32.totalorder %s28, 1
      %p107 = por %p105, %p106
      %p109 = scmp.ne.s32.totalorder %s94, %s108
      %p110 = scmp.eq.s32.totalorder %s28, 0
      %p111 = por %p109, %p110
      %s113 = sadd.s32 %s112, 1
      %p116 = scmp.eq.s32.totalorder %s22, 1
      %p117 = scmp.ne.s32.totalorder %s112, %s114
      %p118 = scmp.eq.s32.totalorder %s22, 0
      %p119 = por %p117, %p118
      %p120 = scmp.ne.s32.totalorder %s112, %s114
      %p121 = scmp.eq.s32.totalorder %s27, 1
      %p122 = por %p120, %p121
      %p123 = scmp.ne.s32.totalorder %s114, %s115
      %p124 = scmp.eq.s32.totalorder %s27, 0
      %p125 = por %p123, %p124
      %p126 = scmp.ne.s32.totalorder %s114, %s115
      %p127 = scmp.eq.s32.totalorder %s28, 1
      %p128 = por %p126, %p127
      %p130 = scmp.ne.s32.totalorder %s115, %s129
      %p131 = scmp.eq.s32.totalorder %s28, 0
      %p132 = por %p130, %p131
      %s134 = sadd.s32 %s133, 1
      %p137 = scmp.eq.s32.totalorder %s22, 1
      %p138 = scmp.ne.s32.totalorder %s133, %s135
      %p139 = scmp.eq.s32.totalorder %s22, 0
      %p140 = por %p138, %p139
      %p141 = scmp.ne.s32.totalorder %s133, %s135
      %p142 = scmp.eq.s32.totalorder %s27, 1
      %p143 = por %p141, %p142
      %p144 = scmp.ne.s32.totalorder %s135, %s136
      %p145 = scmp.eq.s32.totalorder %s27, 0
      %p146 = por %p144, %p145
      %p147 = scmp.ne.s32.totalorder %s135, %s136
      %p148 = scmp.eq.s32.totalorder %s28, 1
      %p149 = por %p147, %p148
      %p151 = scmp.ne.s32.totalorder %s136, %s150
      %p152 = scmp.eq.s32.totalorder %s28, 0
      %p153 = por %p151, %p152
      %s155 = sadd.s32 %s154, 1
      %p158 = scmp.eq.s32.totalorder %s22, 1
      %p159 = scmp.ne.s32.totalorder %s154, %s156
      %p160 = scmp.eq.s32.totalorder %s22, 0
      %p161 = por %p159, %p160
      %p162 = scmp.ne.s32.totalorder %s154, %s156
      %p163 = scmp.eq.s32.totalorder %s27, 1
      %p164 = por %p162, %p163
      %p165 = scmp.ne.s32.totalorder %s156, %s157
      %p166 = scmp.eq.s32.totalorder %s27, 0
      %p167 = por %p165, %p166
      %p168 = scmp.ne.s32.totalorder %s156, %s157
      %p169 = scmp.eq.s32.totalorder %s28, 1
      %p170 = por %p168, %p169
      %p172 = scmp.ne.s32.totalorder %s157, %s171
      %p173 = scmp.eq.s32.totalorder %s28, 0
      %p174 = por %p172, %p173
      %s176 = sadd.s32 %s175, 1
      %p179 = scmp.eq.s32.totalorder %s22, 1
      %p180 = scmp.ne.s32.totalorder %s175, %s177
      %p181 = scmp.eq.s32.totalorder %s22, 0
      %p182 = por %p180, %p181
      %p183 = scmp.ne.s32.totalorder %s175, %s177
      %p184 = scmp.eq.s32.totalorder %s27, 1
      %p185 = por %p183, %p184
      %p186 = scmp.ne.s32.totalorder %s177, %s178
      %p187 = scmp.eq.s32.totalorder %s27, 0
      %p188 = por %p186, %p187
      %p189 = scmp.ne.s32.totalorder %s177, %s178
      %p190 = scmp.eq.s32.totalorder %s28, 1
      %p191 = por %p189, %p190
      %p193 = scmp.ne.s32.totalorder %s178, %s192
      %p194 = scmp.eq.s32.totalorder %s28, 0
      %p195 = por %p193, %p194
      %s197 = sadd.s32 %s196, 1
      %p200 = scmp.eq.s32.totalorder %s22, 1
      %p201 = scmp.ne.s32.totalorder %s196, %s198
      %p202 = scmp.eq.s32.totalorder %s22, 0
      %p203 = por %p201, %p202
      %p204 = scmp.ne.s32.totalorder %s196, %s198
      %p205 = scmp.eq.s32.totalorder %s27, 1
      %p206 = por %p204, %p205
      %p207 = scmp.ne.s32.totalorder %s198, %s199
      %p208 = scmp.eq.s32.totalorder %s27, 0
      %p209 = por %p207, %p208
      %p210 = scmp.ne.s32.totalorder %s198, %s199
      %p211 = scmp.eq.s32.totalorder %s28, 1
      %p212 = por %p210, %p211
      %p214 = scmp.ne.s32.totalorder %s199, %s213
      %p215 = scmp.eq.s32.totalorder %s28, 0
      %p216 = por %p214, %p215
      %s218 = sadd.s32 %s217, 1
      %p221 = scmp.eq.s32.totalorder %s22, 1
      %p222 = scmp.ne.s32.totalorder %s217, %s219
      %p223 = scmp.eq.s32.totalorder %s22, 0
      %p224 = por %p222, %p223
      %p225 = scmp.ne.s32.totalorder %s217, %s219
      %p226 = scmp.eq.s32.totalorder %s27, 1
      %p227 = por %p225, %p226
      %p228 = scmp.ne.s32.totalorder %s219, %s220
      %p229 = scmp.eq.s32.totalorder %s27, 0
      %p230 = por %p228, %p229
      %p231 = scmp.ne.s32.totalorder %s219, %s220
      %p232 = scmp.eq.s32.totalorder %s28, 1
      %p233 = por %p231, %p232
      %p235 = scmp.ne.s32.totalorder %s220, %s234
      %p236 = scmp.eq.s32.totalorder %s28, 0
      %p237 = por %p235, %p236
      %s239 = sadd.s32 %s238, 1
      %p242 = scmp.eq.s32.totalorder %s22, 1
      %p243 = scmp.ne.s32.totalorder %s238, %s240
      %p244 = scmp.eq.s32.totalorder %s22, 0
      %p245 = por %p243, %p244
      %p246 = scmp.ne.s32.totalorder %s238, %s240
      %p247 = scmp.eq.s32.totalorder %s27, 1
      %p248 = por %p246, %p247
      %p249 = scmp.ne.s32.totalorder %s240, %s241
      %p250 = scmp.eq.s32.totalorder %s27, 0
      %p251 = por %p249, %p250
      %p252 = scmp.ne.s32.totalorder %s240, %s241
      %p253 = scmp.eq.s32.totalorder %s28, 1
      %p254 = por %p252, %p253
      %p256 = scmp.ne.s32.totalorder %s241, %s255
      %p257 = scmp.eq.s32.totalorder %s28, 0
      %p258 = por %p256, %p257
      %s260 = sadd.s32 %s259, 1
      %p263 = scmp.eq.s32.totalorder %s22, 1
      %p264 = scmp.ne.s32.totalorder %s259, %s261
      %p265 = scmp.eq.s32.totalorder %s22, 0
      %p266 = por %p264, %p265
      %p267 = scmp.ne.s32.totalorder %s259, %s261
      %p268 = scmp.eq.s32.totalorder %s27, 1
      %p269 = por %p267, %p268
      %p270 = scmp.ne.s32.totalorder %s261, %s262
      %p271 = scmp.eq.s32.totalorder %s27, 0
      %p272 = por %p270, %p271
      %p273 = scmp.ne.s32.totalorder %s261, %s262
      %p274 = scmp.eq.s32.totalorder %s28, 1
      %p275 = por %p273, %p274
      %p277 = scmp.ne.s32.totalorder %s262, %s276
      %p278 = scmp.eq.s32.totalorder %s28, 0
      %p279 = por %p277, %p278
      %s281 = sadd.s32 %s280, 1
      %p284 = scmp.eq.s32.totalorder %s22, 1
      %p285 = scmp.ne.s32.totalorder %s280, %s282
      %p286 = scmp.eq.s32.totalorder %s22, 0
      %p287 = por %p285, %p286
      %p288 = scmp.ne.s32.totalorder %s280, %s282
      %p289 = scmp.eq.s32.totalorder %s27, 1
      %p290 = por %p288, %p289
      %p291 = scmp.ne.s32.totalorder %s282, %s283
      %p292 = scmp.eq.s32.totalorder %s27, 0
      %p293 = por %p291, %p292
      %p294 = scmp.ne.s32.totalorder %s282, %s283
      %p295 = scmp.eq.s32.totalorder %s28, 1
      %p296 = por %p294, %p295
      %p298 = scmp.ne.s32.totalorder %s283, %s297
      %p299 = scmp.eq.s32.totalorder %s28, 0
      %p300 = por %p298, %p299
      %s301 = ssub.s32 %s29, %s41
      %p302 = scmp.eq.s32.totalorder %s301, 0
      %s304 = sadd.s32 %s303, 1
      %s305 = scalar_select %p302, %s303, %s304
      %p308 = pneg %p302
      %p309 = scmp.eq.s32.totalorder %s22, 1
      %p310 = por %p308, %p309
      %p311 = scmp.ne.s32.totalorder %s303, %s306
      %p312 = scmp.eq.s32.totalorder %s22, 0
      %p313 = por %p311, %p312
      %p314 = scmp.ne.s32.totalorder %s303, %s306
      %p315 = scmp.eq.s32.totalorder %s27, 1
      %p316 = por %p314, %p315
      %p317 = scmp.ne.s32.totalorder %s306, %s307
      %p318 = scmp.eq.s32.totalorder %s27, 0
      %p319 = por %p317, %p318
      %p320 = scmp.ne.s32.totalorder %s306, %s307
      %p321 = scmp.eq.s32.totalorder %s28, 1
      %p322 = por %p320, %p321
      %p324 = scmp.ne.s32.totalorder %s307, %s323
      %p325 = scmp.eq.s32.totalorder %s28, 0
      %p326 = por %p324, %p325
      %p327 = scmp.le.s32.totalorder 1, %s22
      %p328 = scmp.lt.s32.totalorder %s22, 3
      %p329 = pnand %p327, %p328
      %p330 = pneg %p329
      // Predicated region
      $region9: #{tpu_custom_call.1} parent=5 // pred_check
        _
      $region10: #{tpu_custom_call.1} parent=5 // pred_check_branch
        %332 = sbr.rel (%p329) target = $region12
      $region11: #{tpu_custom_call.1} parent=5 // pred_region
        %s333 = ssub.s32 %s22, 1
        // Predicated region
        $region13: #{tpu_custom_call.1} parent=11 // pred_check
          %p334 = pneg %p83
        $region14: #{tpu_custom_call.1} parent=11 // pred_check_branch
          %336 = sbr.rel (%p334) target = $region16
        $region15: #{tpu_custom_call.1} parent=11 // pred_region
          %s338 = ssub.s32 128, 128
          %339 = vsyncadd [#allocation9], %s338
          %s341 = sshll.u32 [#allocation8], 4
          %s342 = int_to_ptr.vmem [resolvable:$true] %s341
          %344 = dma.hbm_to_vmem [thread:$0]  %s1, 128, %s342, [#allocation9]
        $region16: #{tpu_custom_call.1} parent=11 // pred_fallthru
          _
        // Predicated region
        $region17: #{tpu_custom_call.1} parent=11 // pred_check
          %p345 = pneg %p104
        $region18: #{tpu_custom_call.1} parent=11 // pred_check_branch
          %347 = sbr.rel (%p345) target = $region20
        $region19: #{tpu_custom_call.1} parent=11 // pred_region
          _
        $region20: #{tpu_custom_call.1} parent=11 // pred_fallthru
          _
        // Predicated region
        $region21: #{tpu_custom_call.1} parent=11 // pred_check
          %p348 = pneg %p125
        $region22: #{tpu_custom_call.1} parent=11 // pred_check_branch
          %350 = sbr.rel (%p348) target = $region24
        $region23: #{tpu_custom_call.1} parent=11 // pred_region
          %s352 = ssub.s32 64, 64
          %353 = vsyncadd [#allocation12], %s352
          %s355 = sshll.u32 [#allocation11], 4
          %s356 = int_to_ptr.vmem [resolvable:$true] %s355
          %358 = dma.hbm_to_vmem [thread:$0]  %s3, 64, %s356, [#allocation12]
        $region24: #{tpu_custom_call.1} parent=11 // pred_fallthru
          _
        // Predicated region
        $region25: #{tpu_custom_call.1} parent=11 // pred_check
          %p359 = pneg %p146
        $region26: #{tpu_custom_call.1} parent=11 // pred_check_branch
          %361 = sbr.rel (%p359) target = $region28
        $region27: #{tpu_custom_call.1} parent=11 // pred_region
          %s363 = ssub.s32 8192, 8192
          %364 = vsyncadd [#allocation12], %s363
          %s365 = sshll.u32 [#allocation13], 4
          %s366 = int_to_ptr.vmem [resolvable:$true] %s365
          %371 = dma.hbm_to_vmem [thread:$0]  %s4, 8192, %s366, [#allocation12], 256, 256, 16
        $region28: #{tpu_custom_call.1} parent=11 // pred_fallthru
          _
        // Predicated region
        $region29: #{tpu_custom_call.1} parent=11 // pred_check
          %p372 = pneg %p167
        $region30: #{tpu_custom_call.1} parent=11 // pred_check_branch
          %374 = sbr.rel (%p372) target = $region32
        $region31: #{tpu_custom_call.1} parent=11 // pred_region
          %s376 = ssub.s32 64, 64
          %377 = vsyncadd [#allocation15], %s376
          %s379 = sshll.u32 [#allocation14], 4
          %s380 = int_to_ptr.vmem [resolvable:$true] %s379
          %382 = dma.hbm_to_vmem [thread:$0]  %s5, 64, %s380, [#allocation15]
        $region32: #{tpu_custom_call.1} parent=11 // pred_fallthru
          _
        // Predicated region
        $region33: #{tpu_custom_call.1} parent=11 // pred_check
          %p383 = pneg %p188
        $region34: #{tpu_custom_call.1} parent=11 // pred_check_branch
          %385 = sbr.rel (%p383) target = $region36
        $region35: #{tpu_custom_call.1} parent=11 // pred_region
          _
        $region36: #{tpu_custom_call.1} parent=11 // pred_fallthru
          _
        // Predicated region
        $region37: #{tpu_custom_call.1} parent=11 // pred_check
          %p386 = pneg %p209
        $region38: #{tpu_custom_call.1} parent=11 // pred_check_branch
          %388 = sbr.rel (%p386) target = $region40
        $region39: #{tpu_custom_call.1} parent=11 // pred_region
          _
        $region40: #{tpu_custom_call.1} parent=11 // pred_fallthru
          _
        // Predicated region
        $region41: #{tpu_custom_call.1} parent=11 // pred_check
          %p389 = pneg %p230
        $region42: #{tpu_custom_call.1} parent=11 // pred_check_branch
          %391 = sbr.rel (%p389) target = $region44
        $region43: #{tpu_custom_call.1} parent=11 // pred_region
          _
        $region44: #{tpu_custom_call.1} parent=11 // pred_fallthru
          _
        // Predicated region
        $region45: #{tpu_custom_call.1} parent=11 // pred_check
          %p392 = pneg %p251
        $region46: #{tpu_custom_call.1} parent=11 // pred_check_branch
          %394 = sbr.rel (%p392) target = $region48
        $region47: #{tpu_custom_call.1} parent=11 // pred_region
          _
        $region48: #{tpu_custom_call.1} parent=11 // pred_fallthru
          _
        // Predicated region
        $region49: #{tpu_custom_call.1} parent=11 // pred_check
          %p395 = pneg %p272
        $region50: #{tpu_custom_call.1} parent=11 // pred_check_branch
          %397 = sbr.rel (%p395) target = $region52
        $region51: #{tpu_custom_call.1} parent=11 // pred_region
          _
        $region52: #{tpu_custom_call.1} parent=11 // pred_fallthru
          _
        // Predicated region
        $region53: #{tpu_custom_call.1} parent=11 // pred_check
          %p398 = pneg %p293
        $region54: #{tpu_custom_call.1} parent=11 // pred_check_branch
          %400 = sbr.rel (%p398) target = $region56
        $region55: #{tpu_custom_call.1} parent=11 // pred_region
          _
        $region56: #{tpu_custom_call.1} parent=11 // pred_fallthru
          _
      $region12: #{tpu_custom_call.1} parent=5 // pred_fallthru
        _
      %p401 = scmp.lt.s32.totalorder %s22, 2
      // Predicated region
      $region57: #{tpu_custom_call.1} parent=5 // pred_check
        %p402 = pneg %p401
      $region58: #{tpu_custom_call.1} parent=5 // pred_check_branch
        %404 = sbr.rel (%p402) target = $region60
      $region59: #{tpu_custom_call.1} parent=5 // pred_region
        // Predicated region
        $region61: #{tpu_custom_call.1} parent=59 // pred_check
          %p405 = pneg %p56
        $region62: #{tpu_custom_call.1} parent=59 // pred_check_branch
          %407 = sbr.rel (%p405) target = $region64
        $region63: #{tpu_custom_call.1} parent=59 // pred_region
          %s408 = sand.u32 %s46, 1
          %s409 = sand.u32 %s46, 1
          %s410 = smul.addr %s409, 16
          %s411 = scalar_lea.vmem [#allocation7], %s410
          %s412 = smul.u32 2, %s29
          %s413 = smul.addr %s412, 2
          %s414 = sadd.s32 %s30, %s413
          %s415 = smul.addr %s414, 8
          %s416 = scalar_lea.vmem %s0, %s415
          // Predicated region
          $region65: #{tpu_custom_call.1} parent=63 // pred_check
            _
          $region66: #{tpu_custom_call.1} parent=63 // pred_check_branch
            %418 = sbr.rel (0) target = $region68
          $region67: #{tpu_custom_call.1} parent=63 // pred_region
            // Predicated region
            $region69: #{tpu_custom_call.1} parent=67 // pred_check
              _
            $region70: #{tpu_custom_call.1} parent=67 // pred_check_branch
              %420 = sbr.rel (0) target = $region72
            $region71: #{tpu_custom_call.1} parent=67 // pred_region
              // Predicated region
              $region84: #{tpu_custom_call.1} parent=71 // pred_check
                _
              $region85: #{tpu_custom_call.1} parent=71 // pred_check_branch
                %437 = sbr.rel (0) target = $region87
              $region86: #{tpu_custom_call.1} parent=71 // pred_region
                loop: start=0, step=1, limit=1
                $region88: #{tpu_custom_call.1} parent=86 // loop_pre_header
                  _
                $region89: #{tpu_custom_call.1} parent=86 // loop_header
                  %s439 = sphi 0, %s443
                  %p440 = scmp.ge.s32.totalorder %s439, 1
                  %s444 = sphi %s416, %s416
                  %s445 = sphi %s411, %s411
                $region90: #{tpu_custom_call.1} parent=86 // loop_header_branch
                  %442 = sbr.rel (%p440) target = $region94
                $region91: #{tpu_custom_call.1} parent=86 // loop_body
                  %v446 = vld [vmem:[%s444] sm:$0xff]
                  %447 = vst [vmem:[%s445] sm:$0xff] %v446
                  %v448 = vld [vmem:[%s444 + $0x10] sm:$0xff]
                  %449 = vst [vmem:[%s445 + $0x8] sm:$0xff] %v448
                $region92: #{tpu_custom_call.1} parent=86 // loop_footer
                  %s443 = sadd.s32 1, %s439
                $region93: #{tpu_custom_call.1} parent=86 // loop_footer_branch
                  %438 = sbr.rel target = $region89
                $region94: #{tpu_custom_call.1} parent=86 // loop_exit
                  _
              $region87: #{tpu_custom_call.1} parent=71 // pred_fallthru
                _
              // Predicated region
              $region95: #{tpu_custom_call.1} parent=71 // pred_check
                _
              $region96: #{tpu_custom_call.1} parent=71 // pred_check_branch
                %451 = sbr.rel target = $region98
              $region97: #{tpu_custom_call.1} parent=71 // pred_region
                _
              $region98: #{tpu_custom_call.1} parent=71 // pred_fallthru
                _
            $region72: #{tpu_custom_call.1} parent=67 // pred_fallthru
              _
            // Predicated region
            $region73: #{tpu_custom_call.1} parent=67 // pred_check
              _
            $region74: #{tpu_custom_call.1} parent=67 // pred_check_branch
              %422 = sbr.rel target = $region76
            $region75: #{tpu_custom_call.1} parent=67 // pred_region
              loop: start=0, step=1, limit=1
              $region77: #{tpu_custom_call.1} parent=75 // loop_pre_header
                _
              $region78: #{tpu_custom_call.1} parent=75 // loop_header
                %s425 = sphi 0, %s429
                %p426 = scmp.ge.s32.totalorder %s425, 1
                %s430 = sphi %s416, %s416
                %s431 = sphi %s411, %s411
              $region79: #{tpu_custom_call.1} parent=75 // loop_header_branch
                %428 = sbr.rel (%p426) target = $region83
              $region80: #{tpu_custom_call.1} parent=75 // loop_body
                %v432 = vld [vmem:[%s430] sm:$0xff]
                %433 = vst [vmem:[%s431] sm:$0xff] %v432
                %v434 = vld [vmem:[%s430 + $0x10] sm:$0xff]
                %435 = vst [vmem:[%s431 + $0x8] sm:$0xff] %v434
              $region81: #{tpu_custom_call.1} parent=75 // loop_footer
                %s429 = sadd.s32 1, %s425
              $region82: #{tpu_custom_call.1} parent=75 // loop_footer_branch
                %424 = sbr.rel target = $region78
              $region83: #{tpu_custom_call.1} parent=75 // loop_exit
                _
            $region76: #{tpu_custom_call.1} parent=67 // pred_fallthru
              _
          $region68: #{tpu_custom_call.1} parent=63 // pred_fallthru
            _
          %452 = vnop
        $region64: #{tpu_custom_call.1} parent=59 // pred_fallthru
          _
      $region60: #{tpu_custom_call.1} parent=5 // pred_fallthru
        _
      %p453 = scmp.le.s32.totalorder 1, %s22
      %p454 = scmp.lt.s32.totalorder %s22, 3
      %p455 = pnand %p453, %p454
      %p456 = pneg %p455
      // Predicated region
      $region99: #{tpu_custom_call.1} parent=5 // pred_check
        _
      $region100: #{tpu_custom_call.1} parent=5 // pred_check_branch
        %458 = sbr.rel (%p455) target = $region102
      $region101: #{tpu_custom_call.1} parent=5 // pred_region
        %s459 = ssub.s32 %s22, 1
        %s460 = sand.u32 %s49, 1
        %s461 = sand.u32 %s49, 1
        %s462 = smul.addr %s461, 16
        %s463 = scalar_lea.vmem [#allocation7], %s462
        // Predicated region
        $region103: #{tpu_custom_call.1} parent=101 // pred_check
          %p464 = pneg %p62
        $region104: #{tpu_custom_call.1} parent=101 // pred_check_branch
          %466 = sbr.rel (%p464) target = $region106
        $region105: #{tpu_custom_call.1} parent=101 // pred_region
          _
        $region106: #{tpu_custom_call.1} parent=101 // pred_fallthru
          _
        // Predicated region
        $region107: #{tpu_custom_call.1} parent=101 // pred_check
          %p467 = pneg %p83
        $region108: #{tpu_custom_call.1} parent=101 // pred_check_branch
          %469 = sbr.rel (%p467) target = $region110
        $region109: #{tpu_custom_call.1} parent=101 // pred_region
          %470 = dma.done [#allocation9], 128
        $region110: #{tpu_custom_call.1} parent=101 // pred_fallthru
          _
        // Predicated region
        $region111: #{tpu_custom_call.1} parent=101 // pred_check
          %p471 = pneg %p125
        $region112: #{tpu_custom_call.1} parent=101 // pred_check_branch
          %473 = sbr.rel (%p471) target = $region114
        $region113: #{tpu_custom_call.1} parent=101 // pred_region
          %474 = dma.done [#allocation12], 64
        $region114: #{tpu_custom_call.1} parent=101 // pred_fallthru
          _
        // Predicated region
        $region115: #{tpu_custom_call.1} parent=101 // pred_check
          %p475 = pneg %p146
        $region116: #{tpu_custom_call.1} parent=101 // pred_check_branch
          %477 = sbr.rel (%p475) target = $region118
        $region117: #{tpu_custom_call.1} parent=101 // pred_region
          %478 = dma.done [#allocation12], 8192
        $region118: #{tpu_custom_call.1} parent=101 // pred_fallthru
          _
        // Predicated region
        $region119: #{tpu_custom_call.1} parent=101 // pred_check
          %p479 = pneg %p167
        $region120: #{tpu_custom_call.1} parent=101 // pred_check_branch
          %481 = sbr.rel (%p479) target = $region122
        $region121: #{tpu_custom_call.1} parent=101 // pred_region
          %482 = dma.done [#allocation15], 64
        $region122: #{tpu_custom_call.1} parent=101 // pred_fallthru
          _
        %s483 = sand.u32 %s49, 1
        %s484 = sand.u32 %s49, 1
        %s485 = smul.addr %s484, 16
        %s486 = scalar_lea.vmem [#allocation7], %s485
        %p487 = pneg %p62
        %p488 = pneg %p59
        %p489 = pneg %p83
        %p490 = pneg %p80
        %p491 = pneg %p104
        %p492 = pneg %p101
        %p493 = pneg %p125
        %p494 = pneg %p122
        %p495 = pneg %p146
        %p496 = pneg %p143
        %p497 = pneg %p167
        %p498 = pneg %p164
        %p499 = pneg %p188
        %p500 = pneg %p185
        %p501 = pneg %p209
        %p502 = pneg %p206
        %p503 = pneg %p230
        %p504 = pneg %p227
        %p505 = pneg %p251
        %p506 = pneg %p248
        %p507 = pneg %p272
        %p508 = pneg %p269
        %p509 = pneg %p293
        %p510 = pneg %p290
        %p511 = pneg %p319
        %p512 = pneg %p316
        %s513 = smul.u32 2, %s31
        %p515 = scmp.eq.s32.totalorder %s32, 0
        // Predicated region
        $region123: #{tpu_custom_call.1} parent=101 // pred_check
          %p516 = pneg %p515
        $region124: #{tpu_custom_call.1} parent=101 // pred_check_branch
          %518 = sbr.rel (%p516) target = $region126
        $region125: #{tpu_custom_call.1} parent=101 // pred_region
          %519 = vst [vmem:[#allocation3] sm:$0x3] 0.0
          %520 = vst [vmem:[#allocation4] sm:$0x3] 0.0
          %521 = vst [vmem:[#allocation5] sm:$0x3] 0.0
          %522 = vst [vmem:[#allocation6] sm:$0x3] 0.0
        $region126: #{tpu_custom_call.1} parent=101 // pred_fallthru
          _
        %v523 = vld [vmem:[%s463] sm:$0xff]
        %v524 = vld [vmem:[%s463 + $0x8] sm:$0xff]
        %v525 = vpack.c.bf16 %v523, %v523
        %v526 = vpack.c.bf16 %v524, %v524
        %v527 = vld [vmem:[#allocation8] sm:$0xff]
        %v530 = vunpack.c.l.b16 %v525
        %v531 = vunpack.c.l.b16 %v526
        %v532 = vpack.c.b16 %v531, %v530
        %v534 = vcombine.high %v527, %v527
        %v536 = vunpack.c.l.s4 1983009808
        %v537 = vunpack.c.0.s8 %v536
        %v538 = vlaneseq
        %v539 = vshrl.u32 %v538, 7
        %v540 = vsub.s32 %v537, %v539
        %v541 = vrot.slane %v527, %v540
        %v543 = vunpack.c.l.s4 1983009808
        %v544 = vunpack.c.0.s8 %v543
        %v545 = vlaneseq
        %v546 = vshrl.u32 %v545, 7
        %v547 = vsub.s32 %v544, %v546
        %v548 = vrot.slane %v534, %v547
        %v549 = vcombine.high %v541, %v541
        %v550 = vcombine.high %v548, %v548
        %vm551 = vcmask 31744
        %v553 = vsel %vm551, %v532, 0
        %vm555 = vcmask 1041408
        %v557 = vsel %vm555, %v541, 0
        %v560 = vsel %vm555, %v549, 0
        %v563 = vsel %vm555, %v548, 0
        %v566 = vsel %vm555, %v550, 0
        %568 = vmatprep.subr.bf16.mxu0 %v560
        %569 = vmatpush1.bf16.msra.mxu0 %v557
        %570 = vmatprep.subr.bf16.mxu0 0
        %571 = vmatpush1.bf16.msra.mxu0 0
        %572 = vmatprep.subr.bf16.mxu0 0
        %573 = vmatpush1.bf16.msra.mxu0 0
        %574 = vmatprep.subr.bf16.mxu0 0
        %575 = vmatpush1.bf16.msra.mxu0 0
        %576 = vmatprep.subr.bf16.mxu0 0
        %577 = vmatpush1.bf16.msra.mxu0 0
        %578 = vmatprep.subr.bf16.mxu0 0
        %579 = vmatpush1.bf16.msra.mxu0 0
        %580 = vmatprep.subr.bf16.mxu0 0
        %581 = vmatpush1.bf16.msra.mxu0 0
        %582 = vmatprep.subr.bf16.mxu0 0
        %583 = vmatpush1.bf16.msra.mxu0 0
        %584 = vmatprep.subr.bf16.mxu0 0
        %585 = vmatpush1.bf16.msra.mxu0 0
        %586 = vmatprep.subr.bf16.mxu0 0
        %587 = vmatpush1.bf16.msra.mxu0 0
        %588 = vmatprep.subr.bf16.mxu0 0
        %589 = vmatpush1.bf16.msra.mxu0 0
        %590 = vmatprep.subr.bf16.mxu0 0
        %591 = vmatpush1.bf16.msra.mxu0 0
        %592 = vmatprep.subr.bf16.mxu0 0
        %593 = vmatpush1.bf16.msra.mxu0 0
        %594 = vmatprep.subr.bf16.mxu0 0
        %595 = vmatpush1.bf16.msra.mxu0 0
        %596 = vmatprep.subr.bf16.mxu0 0
        %597 = vmatpush1.bf16.msra.mxu0 0
        %598 = vmatprep.subr.bf16.mxu0 0
        %599 = vmatpush1.bf16.msra.mxu0 0
        %600 = vmatprep.mubr.bf16.mxu0 0
        %601 = vmatmul.mubr.bf16.gmra.mrb[0].mxu0 %v553
        %v602 = vpop.f32.mrb[0].mxu0
        %v603 = vadd.f32 0.0, %v602
        %v604 = vpop.f32.mrb[0].mxu0
        %v605 = vadd.f32 0.0, %v604
        %v606 = vpop.f32.mrb[0].mxu0
        %v607 = vadd.f32 0.0, %v606
        %v608 = vpop.f32.mrb[0].mxu0
        %v609 = vadd.f32 0.0, %v608
        %610 = vdwg.mxu0
        %611 = vmatprep.subr.bf16.mxu0 %v566
        %612 = vmatpush1.bf16.msra.mxu0 %v563
        %613 = vmatprep.subr.bf16.mxu0 0
        %614 = vmatpush1.bf16.msra.mxu0 0
        %615 = vmatprep.subr.bf16.mxu0 0
        %616 = vmatpush1.bf16.msra.mxu0 0
        %617 = vmatprep.subr.bf16.mxu0 0
        %618 = vmatpush1.bf16.msra.mxu0 0
        %619 = vmatprep.subr.bf16.mxu0 0
        %620 = vmatpush1.bf16.msra.mxu0 0
        %621 = vmatprep.subr.bf16.mxu0 0
        %622 = vmatpush1.bf16.msra.mxu0 0
        %623 = vmatprep.subr.bf16.mxu0 0
        %624 = vmatpush1.bf16.msra.mxu0 0
        %625 = vmatprep.subr.bf16.mxu0 0
        %626 = vmatpush1.bf16.msra.mxu0 0
        %627 = vmatprep.subr.bf16.mxu0 0
        %628 = vmatpush1.bf16.msra.mxu0 0
        %629 = vmatprep.subr.bf16.mxu0 0
        %630 = vmatpush1.bf16.msra.mxu0 0
        %631 = vmatprep.subr.bf16.mxu0 0
        %632 = vmatpush1.bf16.msra.mxu0 0
        %633 = vmatprep.subr.bf16.mxu0 0
        %634 = vmatpush1.bf16.msra.mxu0 0
        %635 = vmatprep.subr.bf16.mxu0 0
        %636 = vmatpush1.bf16.msra.mxu0 0
        %637 = vmatprep.subr.bf16.mxu0 0
        %638 = vmatpush1.bf16.msra.mxu0 0
        %639 = vmatprep.subr.bf16.mxu0 0
        %640 = vmatpush1.bf16.msra.mxu0 0
        %641 = vmatprep.subr.bf16.mxu0 0
        %642 = vmatpush1.bf16.msra.mxu0 0
        %643 = vmatprep.mubr.bf16.mxu0 0
        %644 = vmatmul.mubr.bf16.gmra.mrb[0].mxu0 %v553
        %v645 = vpop.f32.mrb[0].mxu0
        %v646 = vadd.f32 0.0, %v645
        %v647 = vpop.f32.mrb[0].mxu0
        %v648 = vadd.f32 0.0, %v647
        %v649 = vpop.f32.mrb[0].mxu0
        %v650 = vadd.f32 0.0, %v649
        %v651 = vpop.f32.mrb[0].mxu0
        %v652 = vadd.f32 0.0, %v651
        %653 = vdwg.mxu0
        %v654 = vld [vmem:[#allocation11] sm:$0xf]
        %v656 = vlaneseq
        %v657 = vshrl.u32 %v656, 7
        %v658 = vsub.s32 0, %v657
        %v659 = vrot.slane %v654, %v658
        %v660 = vlaneseq
        %v661 = vshrl.u32 %v660, 7
        %v662 = vsub.s32 1, %v661
        %v663 = vrot.slane %v654, %v662
        %v664 = vlaneseq
        %v665 = vshrl.u32 %v664, 7
        %v666 = vsub.s32 2, %v665
        %v667 = vrot.slane %v654, %v666
        %v668 = vlaneseq
        %v669 = vshrl.u32 %v668, 7
        %v670 = vsub.s32 3, %v669
        %v671 = vrot.slane %v654, %v670
        %v676 = vadd.f32 %v603, %v659
        %v677 = vadd.f32 %v605, %v663
        %v678 = vadd.f32 %v646, %v667
        %v679 = vadd.f32 %v648, %v671
        %v680 = vadd.f32 %v607, %v659
        %v681 = vadd.f32 %v609, %v663
        %v682 = vadd.f32 %v650, %v667
        %v683 = vadd.f32 %v652, %v671
        %684 = vst [vmem:[#allocation2] sm:$0xff] %v676
        %685 = vst [vmem:[#allocation2 + $0x8] sm:$0xff] %v677
        %686 = vst [vmem:[#allocation2 + $0x10] sm:$0xff] %v678
        %687 = vst [vmem:[#allocation2 + $0x18] sm:$0xff] %v679
        %688 = vst [vmem:[#allocation2 + $0x20] sm:$0xff] %v680
        %689 = vst [vmem:[#allocation2 + $0x28] sm:$0xff] %v681
        %690 = vst [vmem:[#allocation2 + $0x30] sm:$0xff] %v682
        %691 = vst [vmem:[#allocation2 + $0x38] sm:$0xff] %v683
        %v692 = vld [vmem:[%s2] sm:$0xff]
        %v693 = vld [vmem:[%s2 + $0x8] sm:$0xff]
        %v694 = vld [vmem:[%s2 + $0x10] sm:$0xff]
        %v695 = vld [vmem:[%s2 + $0x18] sm:$0xff]
        %v696 = vld [vmem:[%s2 + $0x20] sm:$0xff]
        %v697 = vld [vmem:[%s2 + $0x28] sm:$0xff]
        %v698 = vld [vmem:[%s2 + $0x30] sm:$0xff]
        %v699 = vld [vmem:[%s2 + $0x38] sm:$0xff]
        %v700 = vld [vmem:[%s2 + $0x40] sm:$0xff]
        %v701 = vld [vmem:[%s2 + $0x48] sm:$0xff]
        %v702 = vld [vmem:[%s2 + $0x50] sm:$0xff]
        %v703 = vld [vmem:[%s2 + $0x58] sm:$0xff]
        %v704 = vld [vmem:[%s2 + $0x60] sm:$0xff]
        %v705 = vld [vmem:[%s2 + $0x68] sm:$0xff]
        %v706 = vld [vmem:[%s2 + $0x70] sm:$0xff]
        %v707 = vld [vmem:[%s2 + $0x78] sm:$0xff]
        %v708 = vld [vmem:[%s2 + $0x80] sm:$0xff]
        %v709 = vld [vmem:[%s2 + $0x88] sm:$0xff]
        %v710 = vld [vmem:[%s2 + $0x90] sm:$0xff]
        %v711 = vld [vmem:[%s2 + $0x98] sm:$0xff]
        %v712 = vld [vmem:[%s2 + $0xa0] sm:$0xff]
        %v713 = vld [vmem:[%s2 + $0xa8] sm:$0xff]
        %v714 = vld [vmem:[%s2 + $0xb0] sm:$0xff]
        %v715 = vld [vmem:[%s2 + $0xb8] sm:$0xff]
        %v716 = vld [vmem:[%s2 + $0xc0] sm:$0xff]
        %v717 = vld [vmem:[%s2 + $0xc8] sm:$0xff]
        %v718 = vld [vmem:[%s2 + $0xd0] sm:$0xff]
        %v719 = vld [vmem:[%s2 + $0xd8] sm:$0xff]
        %v720 = vld [vmem:[%s2 + $0xe0] sm:$0xff]
        %v721 = vld [vmem:[%s2 + $0xe8] sm:$0xff]
        %v722 = vld [vmem:[%s2 + $0xf0] sm:$0xff]
        %v723 = vld [vmem:[%s2 + $0xf8] sm:$0xff]
        %v724 = vld [vmem:[#allocation13] sm:$0xff]
        %v725 = vld [vmem:[#allocation13 + $0x8] sm:$0xff]
        %v726 = vld [vmem:[#allocation13 + $0x10] sm:$0xff]
        %v727 = vld [vmem:[#allocation13 + $0x18] sm:$0xff]
        %v728 = vld [vmem:[#allocation13 + $0x20] sm:$0xff]
        %v729 = vld [vmem:[#allocation13 + $0x28] sm:$0xff]
        %v730 = vld [vmem:[#allocation13 + $0x30] sm:$0xff]
        %v731 = vld [vmem:[#allocation13 + $0x38] sm:$0xff]
        %v732 = vld [vmem:[#allocation13 + $0x40] sm:$0xff]
        %v733 = vld [vmem:[#allocation13 + $0x48] sm:$0xff]
        %v734 = vld [vmem:[#allocation13 + $0x50] sm:$0xff]
        %v735 = vld [vmem:[#allocation13 + $0x58] sm:$0xff]
        %v736 = vld [vmem:[#allocation13 + $0x60] sm:$0xff]
        %v737 = vld [vmem:[#allocation13 + $0x68] sm:$0xff]
        %v738 = vld [vmem:[#allocation13 + $0x70] sm:$0xff]
        %v739 = vld [vmem:[#allocation13 + $0x78] sm:$0xff]
        %v740 = vld [vmem:[#allocation13 + $0x80] sm:$0xff]
        %v741 = vld [vmem:[#allocation13 + $0x88] sm:$0xff]
        %v742 = vld [vmem:[#allocation13 + $0x90] sm:$0xff]
        %v743 = vld [vmem:[#allocation13 + $0x98] sm:$0xff]
        %v744 = vld [vmem:[#allocation13 + $0xa0] sm:$0xff]
        %v745 = vld [vmem:[#allocation13 + $0xa8] sm:$0xff]
        %v746 = vld [vmem:[#allocation13 + $0xb0] sm:$0xff]
        %v747 = vld [vmem:[#allocation13 + $0xb8] sm:$0xff]
        %v748 = vld [vmem:[#allocation13 + $0xc0] sm:$0xff]
        %v749 = vld [vmem:[#allocation13 + $0xc8] sm:$0xff]
        %v750 = vld [vmem:[#allocation13 + $0xd0] sm:$0xff]
        %v751 = vld [vmem:[#allocation13 + $0xd8] sm:$0xff]
        %v752 = vld [vmem:[#allocation13 + $0xe0] sm:$0xff]
        %v753 = vld [vmem:[#allocation13 + $0xe8] sm:$0xff]
        %v754 = vld [vmem:[#allocation13 + $0xf0] sm:$0xff]
        %v755 = vld [vmem:[#allocation13 + $0xf8] sm:$0xff]
        %v756 = vld [vmem:[#allocation13 + $0x100] sm:$0xff]
        %v757 = vld [vmem:[#allocation13 + $0x108] sm:$0xff]
        %v758 = vld [vmem:[#allocation13 + $0x110] sm:$0xff]
        %v759 = vld [vmem:[#allocation13 + $0x118] sm:$0xff]
        %v760 = vld [vmem:[#allocation13 + $0x120] sm:$0xff]
        %v761 = vld [vmem:[#allocation13 + $0x128] sm:$0xff]
        %v762 = vld [vmem:[#allocation13 + $0x130] sm:$0xff]
        %v763 = vld [vmem:[#allocation13 + $0x138] sm:$0xff]
        %v764 = vld [vmem:[#allocation13 + $0x140] sm:$0xff]
        %v765 = vld [vmem:[#allocation13 + $0x148] sm:$0xff]
        %v766 = vld [vmem:[#allocation13 + $0x150] sm:$0xff]
        %v767 = vld [vmem:[#allocation13 + $0x158] sm:$0xff]
        %v768 = vld [vmem:[#allocation13 + $0x160] sm:$0xff]
        %v769 = vld [vmem:[#allocation13 + $0x168] sm:$0xff]
        %v770 = vld [vmem:[#allocation13 + $0x170] sm:$0xff]
        %v771 = vld [vmem:[#allocation13 + $0x178] sm:$0xff]
        %v772 = vld [vmem:[#allocation13 + $0x180] sm:$0xff]
        %v773 = vld [vmem:[#allocation13 + $0x188] sm:$0xff]
        %v774 = vld [vmem:[#allocation13 + $0x190] sm:$0xff]
        %v775 = vld [vmem:[#allocation13 + $0x198] sm:$0xff]
        %v776 = vld [vmem:[#allocation13 + $0x1a0] sm:$0xff]
        %v777 = vld [vmem:[#allocation13 + $0x1a8] sm:$0xff]
        %v778 = vld [vmem:[#allocation13 + $0x1b0] sm:$0xff]
        %v779 = vld [vmem:[#allocation13 + $0x1b8] sm:$0xff]
        %v780 = vld [vmem:[#allocation13 + $0x1c0] sm:$0xff]
        %v781 = vld [vmem:[#allocation13 + $0x1c8] sm:$0xff]
        %v782 = vld [vmem:[#allocation13 + $0x1d0] sm:$0xff]
        %v783 = vld [vmem:[#allocation13 + $0x1d8] sm:$0xff]
        %v784 = vld [vmem:[#allocation13 + $0x1e0] sm:$0xff]
        %v785 = vld [vmem:[#allocation13 + $0x1e8] sm:$0xff]
        %v786 = vld [vmem:[#allocation13 + $0x1f0] sm:$0xff]
        %v787 = vld [vmem:[#allocation13 + $0x1f8] sm:$0xff]
        %v788 = vld [vmem:[#allocation14] sm:$0xf]
        %v790 = vlaneseq
        %v791 = vshrl.u32 %v790, 7
        %v792 = vsub.s32 0, %v791
        %v793 = vrot.slane %v788, %v792
        %v794 = vlaneseq
        %v795 = vshrl.u32 %v794, 7
        %v796 = vsub.s32 1, %v795
        %v797 = vrot.slane %v788, %v796
        %v798 = vlaneseq
        %v799 = vshrl.u32 %v798, 7
        %v800 = vsub.s32 2, %v799
        %v801 = vrot.slane %v788, %v800
        %v802 = vlaneseq
        %v803 = vshrl.u32 %v802, 7
        %v804 = vsub.s32 3, %v803
        %v805 = vrot.slane %v788, %v804
        %v810 = vld [vmem:[#allocation3] sm:$0x3]
        %v811 = vld [vmem:[#allocation4] sm:$0x3]
        %v812 = vld [vmem:[#allocation5] sm:$0x3]
        %v813 = vld [vmem:[#allocation6] sm:$0x3]
        %v814 = vld [vmem:[#allocation2] ss:$8 sm:$0xf]
        %s815 = scalar_lea.vmem [#allocation2], 32
        %v816 = vld [vmem:[%s815] ss:$8 sm:$0xf]
        %v817 = vpack.c.bf16 %v810, %v810
        %v850 = vunpack.c.l.b16 %v692
        %v851 = vunpack.c.h.b16 %v692
        %v852 = vunpack.c.l.b16 %v693
        %v853 = vunpack.c.h.b16 %v693
        %v854 = vunpack.c.l.b16 %v694
        %v855 = vunpack.c.h.b16 %v694
        %v856 = vunpack.c.l.b16 %v695
        %v857 = vunpack.c.h.b16 %v695
        %v858 = vunpack.c.l.b16 %v696
        %v859 = vunpack.c.h.b16 %v696
        %v860 = vunpack.c.l.b16 %v697
        %v861 = vunpack.c.h.b16 %v697
        %v862 = vunpack.c.l.b16 %v698
        %v863 = vunpack.c.h.b16 %v698
        %v864 = vunpack.c.l.b16 %v699
        %v865 = vunpack.c.h.b16 %v699
        %v866 = vunpack.c.l.b16 %v700
        %v867 = vunpack.c.h.b16 %v700
        %v868 = vunpack.c.l.b16 %v701
        %v869 = vunpack.c.h.b16 %v701
        %v870 = vunpack.c.l.b16 %v702
        %v871 = vunpack.c.h.b16 %v702
        %v872 = vunpack.c.l.b16 %v703
        %v873 = vunpack.c.h.b16 %v703
        %v874 = vunpack.c.l.b16 %v704
        %v875 = vunpack.c.h.b16 %v704
        %v876 = vunpack.c.l.b16 %v705
        %v877 = vunpack.c.h.b16 %v705
        %v878 = vunpack.c.l.b16 %v706
        %v879 = vunpack.c.h.b16 %v706
        %v880 = vunpack.c.l.b16 %v707
        %v881 = vunpack.c.h.b16 %v707
        %v882 = vunpack.c.l.b16 %v708
        %v883 = vunpack.c.h.b16 %v708
        %v884 = vunpack.c.l.b16 %v709
        %v885 = vunpack.c.h.b16 %v709
        %v886 = vunpack.c.l.b16 %v710
        %v887 = vunpack.c.h.b16 %v710
        %v888 = vunpack.c.l.b16 %v711
        %v889 = vunpack.c.h.b16 %v711
        %v890 = vunpack.c.l.b16 %v712
        %v891 = vunpack.c.h.b16 %v712
        %v892 = vunpack.c.l.b16 %v713
        %v893 = vunpack.c.h.b16 %v713
        %v894 = vunpack.c.l.b16 %v714
        %v895 = vunpack.c.h.b16 %v714
        %v896 = vunpack.c.l.b16 %v715
        %v897 = vunpack.c.h.b16 %v715
        %v898 = vunpack.c.l.b16 %v716
        %v899 = vunpack.c.h.b16 %v716
        %v900 = vunpack.c.l.b16 %v717
        %v901 = vunpack.c.h.b16 %v717
        %v902 = vunpack.c.l.b16 %v718
        %v903 = vunpack.c.h.b16 %v718
        %v904 = vunpack.c.l.b16 %v719
        %v905 = vunpack.c.h.b16 %v719
        %v906 = vunpack.c.l.b16 %v720
        %v907 = vunpack.c.h.b16 %v720
        %v908 = vunpack.c.l.b16 %v721
        %v909 = vunpack.c.h.b16 %v721
        %v910 = vunpack.c.l.b16 %v722
        %v911 = vunpack.c.h.b16 %v722
        %v912 = vunpack.c.l.b16 %v723
        %v913 = vunpack.c.h.b16 %v723
        %v914 = vpack.c.b16 %v854, %v850
        %v915 = vpack.c.b16 %v855, %v851
        %v916 = vpack.c.b16 %v856, %v852
        %v917 = vpack.c.b16 %v857, %v853
        %v918 = vpack.c.b16 %v862, %v858
        %v919 = vpack.c.b16 %v863, %v859
        %v920 = vpack.c.b16 %v864, %v860
        %v921 = vpack.c.b16 %v865, %v861
        %v922 = vpack.c.b16 %v870, %v866
        %v923 = vpack.c.b16 %v871, %v867
        %v924 = vpack.c.b16 %v872, %v868
        %v925 = vpack.c.b16 %v873, %v869
        %v926 = vpack.c.b16 %v878, %v874
        %v927 = vpack.c.b16 %v879, %v875
        %v928 = vpack.c.b16 %v880, %v876
        %v929 = vpack.c.b16 %v881, %v877
        %v930 = vpack.c.b16 %v886, %v882
        %v931 = vpack.c.b16 %v887, %v883
        %v932 = vpack.c.b16 %v888, %v884
        %v933 = vpack.c.b16 %v889, %v885
        %v934 = vpack.c.b16 %v894, %v890
        %v935 = vpack.c.b16 %v895, %v891
        %v936 = vpack.c.b16 %v896, %v892
        %v937 = vpack.c.b16 %v897, %v893
        %v938 = vpack.c.b16 %v902, %v898
        %v939 = vpack.c.b16 %v903, %v899
        %v940 = vpack.c.b16 %v904, %v900
        %v941 = vpack.c.b16 %v905, %v901
        %v942 = vpack.c.b16 %v910, %v906
        %v943 = vpack.c.b16 %v911, %v907
        %v944 = vpack.c.b16 %v912, %v908
        %v945 = vpack.c.b16 %v913, %v909
        %978 = vmatprep.subr.bf16.mxu0 %v915
        %979 = vmatpush1.bf16.msra.mxu0 %v914
        %980 = vmatprep.subr.bf16.mxu0 %v919
        %981 = vmatpush1.bf16.msra.mxu0 %v918
        %982 = vmatprep.subr.bf16.mxu0 %v923
        %983 = vmatpush1.bf16.msra.mxu0 %v922
        %984 = vmatprep.subr.bf16.mxu0 %v927
        %985 = vmatpush1.bf16.msra.mxu0 %v926
        %986 = vmatprep.subr.bf16.mxu0 %v931
        %987 = vmatpush1.bf16.msra.mxu0 %v930
        %988 = vmatprep.subr.bf16.mxu0 %v935
        %989 = vmatpush1.bf16.msra.mxu0 %v934
        %990 = vmatprep.subr.bf16.mxu0 %v939
        %991 = vmatpush1.bf16.msra.mxu0 %v938
        %992 = vmatprep.subr.bf16.mxu0 %v943
        %993 = vmatpush1.bf16.msra.mxu0 %v942
        %994 = vmatprep.subr.bf16.mxu0 0
        %995 = vmatpush1.bf16.msra.mxu0 0
        %996 = vmatprep.subr.bf16.mxu0 0
        %997 = vmatpush1.bf16.msra.mxu0 0
        %998 = vmatprep.subr.bf16.mxu0 0
        %999 = vmatpush1.bf16.msra.mxu0 0
        %1000 = vmatprep.subr.bf16.mxu0 0
        %1001 = vmatpush1.bf16.msra.mxu0 0
        %1002 = vmatprep.subr.bf16.mxu0 0
        %1003 = vmatpush1.bf16.msra.mxu0 0
        %1004 = vmatprep.subr.bf16.mxu0 0
        %1005 = vmatpush1.bf16.msra.mxu0 0
        %1006 = vmatprep.subr.bf16.mxu0 0
        %1007 = vmatpush1.bf16.msra.mxu0 0
        %1008 = vmatprep.subr.bf16.mxu0 0
        %1009 = vmatpush1.bf16.msra.mxu0 0
        %1010 = vmatprep.mubr.bf16.mxu0 0
        %1011 = vmatmul.mubr.bf16.gmra.mrb[0].mxu0 %v817
        %v1012 = vpop.f32.mrb[0].mxu0
        %v1013 = vadd.f32 0.0, %v1012
        %v1014 = vpop.f32.mrb[0].mxu0
        %v1015 = vadd.f32 0.0, %v1014
        %v1016 = vpop.f32.mrb[0].mxu0
        %v1017 = vpop.f32.mrb[0].mxu0
        %1018 = vdwg.mxu0
        %1019 = vmatprep.subr.bf16.mxu0 %v917
        %1020 = vmatpush1.bf16.msra.mxu0 %v916
        %1021 = vmatprep.subr.bf16.mxu0 %v921
        %1022 = vmatpush1.bf16.msra.mxu0 %v920
        %1023 = vmatprep.subr.bf16.mxu0 %v925
        %1024 = vmatpush1.bf16.msra.mxu0 %v924
        %1025 = vmatprep.subr.bf16.mxu0 %v929
        %1026 = vmatpush1.bf16.msra.mxu0 %v928
        %1027 = vmatprep.subr.bf16.mxu0 %v933
        %1028 = vmatpush1.bf16.msra.mxu0 %v932
        %1029 = vmatprep.subr.bf16.mxu0 %v937
        %1030 = vmatpush1.bf16.msra.mxu0 %v936
        %1031 = vmatprep.subr.bf16.mxu0 %v941
        %1032 = vmatpush1.bf16.msra.mxu0 %v940
        %1033 = vmatprep.subr.bf16.mxu0 %v945
        %1034 = vmatpush1.bf16.msra.mxu0 %v944
        %1035 = vmatprep.subr.bf16.mxu0 0
        %1036 = vmatpush1.bf16.msra.mxu0 0
        %1037 = vmatprep.subr.bf16.mxu0 0
        %1038 = vmatpush1.bf16.msra.mxu0 0
        %1039 = vmatprep.subr.bf16.mxu0 0
        %1040 = vmatpush1.bf16.msra.mxu0 0
        %1041 = vmatprep.subr.bf16.mxu0 0
        %1042 = vmatpush1.bf16.msra.mxu0 0
        %1043 = vmatprep.subr.bf16.mxu0 0
        %1044 = vmatpush1.bf16.msra.mxu0 0
        %1045 = vmatprep.subr.bf16.mxu0 0
        %1046 = vmatpush1.bf16.msra.mxu0 0
        %1047 = vmatprep.subr.bf16.mxu0 0
        %1048 = vmatpush1.bf16.msra.mxu0 0
        %1049 = vmatprep.subr.bf16.mxu0 0
        %1050 = vmatpush1.bf16.msra.mxu0 0
        %1051 = vmatprep.mubr.bf16.mxu0 0
        %1052 = vmatmul.mubr.bf16.gmra.mrb[0].mxu0 %v817
        %v1053 = vpop.f32.mrb[0].mxu0
        %v1054 = vadd.f32 0.0, %v1053
        %v1055 = vpop.f32.mrb[0].mxu0
        %v1056 = vadd.f32 0.0, %v1055
        %v1057 = vpop.f32.mrb[0].mxu0
        %v1058 = vpop.f32.mrb[0].mxu0
        %1059 = vdwg.mxu0
        %v1064 = vcombine.low %v1013, %v1015
        %v1065 = vcombine.low %v1054, %v1056
        %v1067 = vunpack.c.l.s4 1966171168
        %v1068 = vunpack.c.0.s8 %v1067
        %v1069 = vlaneseq
        %v1070 = vshrl.u32 %v1069, 7
        %v1071 = vsub.s32 %v1068, %v1070
        %v1072 = vrot.slane %v1064, %v1071
        %v1074 = vunpack.c.l.s4 1966171168
        %v1075 = vunpack.c.0.s8 %v1074
        %v1076 = vlaneseq
        %v1077 = vshrl.u32 %v1076, 7
        %v1078 = vsub.s32 %v1075, %v1077
        %v1079 = vrot.slane %v1065, %v1078
        %v1080 = vcombine.low %v1072, %v1079
        %v1081 = vcombine.high %v1072, %v1079
        %v1083 = vunpack.c.l.s4 1966171168
        %v1084 = vunpack.c.0.s8 %v1083
        %v1085 = vlaneseq
        %v1086 = vshrl.u32 %v1085, 7
        %v1087 = vsub.s32 %v1084, %v1086
        %v1088 = vrot.slane %v1080, %v1087
        %v1090 = vunpack.c.l.s4 1966171168
        %v1091 = vunpack.c.0.s8 %v1090
        %v1092 = vlaneseq
        %v1093 = vshrl.u32 %v1092, 7
        %v1094 = vsub.s32 %v1091, %v1093
        %v1095 = vrot.slane %v1081, %v1094
        %v1098 = vadd.f32 %v814, %v1088
        %v1099 = vadd.f32 %v816, %v1095
        %v1100 = vxor.u32 %v1098, 2147483648
        %v1101 = vxor.u32 %v1099, 2147483648
        %v1102 = vmul.f32 %v1100, 1.442695
        %v1103 = vpow.pop %v1102
        %v1104 = vmul.f32 %v1101, 1.442695
        %v1105 = vpow.pop %v1104
        %v1106 = vadd.f32 %v1103, 1.0
        %v1107 = vadd.f32 %v1105, 1.0
        %v1108 = vrcp.pop %v1106
        %v1109 = vmul.f32 1.0, %v1108
        %v1110 = vrcp.pop %v1107
        %v1111 = vmul.f32 1.0, %v1110
        %v1114 = vrot.slane %v1098, 1
        %v1115 = vrot.slane %v1099, 1
        %v1118 = vxor.u32 %v1114, 2147483648
        %v1119 = vxor.u32 %v1115, 2147483648
        %v1120 = vmul.f32 %v1118, 1.442695
        %v1121 = vpow.pop %v1120
        %v1122 = vmul.f32 %v1119, 1.442695
        %v1123 = vpow.pop %v1122
        %v1124 = vadd.f32 %v1121, 1.0
        %v1125 = vadd.f32 %v1123, 1.0
        %v1126 = vrcp.pop %v1124
        %v1127 = vmul.f32 1.0, %v1126
        %v1128 = vrcp.pop %v1125
        %v1129 = vmul.f32 1.0, %v1128
        %v1130 = vrot.slane %v1098, 2
        %v1131 = vrot.slane %v1099, 2
        %v1134 = vtanh.pop %v1130
        %v1135 = vtanh.pop %v1131
        %v1136 = vrot.slane %v1098, 3
        %v1137 = vrot.slane %v1099, 3
        %v1140 = vxor.u32 %v1136, 2147483648
        %v1141 = vxor.u32 %v1137, 2147483648
        %v1142 = vmul.f32 %v1140, 1.442695
        %v1143 = vpow.pop %v1142
        %v1144 = vmul.f32 %v1141, 1.442695
        %v1145 = vpow.pop %v1144
        %v1146 = vadd.f32 %v1143, 1.0
        %v1147 = vadd.f32 %v1145, 1.0
        %v1148 = vrcp.pop %v1146
        %v1149 = vmul.f32 1.0, %v1148
        %v1150 = vrcp.pop %v1147
        %v1151 = vmul.f32 1.0, %v1150
        %v1154 = vunpack.c.l.s4 1966171168
        %v1155 = vunpack.c.0.s8 %v1154
        %v1156 = vlaneseq
        %v1157 = vshrl.u32 %v1156, 7
        %v1158 = vsub.s32 %v1155, %v1157
        %v1159 = vrot.slane %v811, %v1158
        %v1160 = vcombine.high %v1159, %v1159
        %v1162 = vunpack.c.l.s4 1966171168
        %v1163 = vunpack.c.0.s8 %v1162
        %v1164 = vlaneseq
        %v1165 = vshrl.u32 %v1164, 7
        %v1166 = vsub.s32 %v1163, %v1165
        %v1167 = vrot.slane %v1159, %v1166
        %v1169 = vunpack.c.l.s4 1966171168
        %v1170 = vunpack.c.0.s8 %v1169
        %v1171 = vlaneseq
        %v1172 = vshrl.u32 %v1171, 7
        %v1173 = vsub.s32 %v1170, %v1172
        %v1174 = vrot.slane %v1160, %v1173
        %v1177 = vmul.f32 %v1127, %v1167
        %v1178 = vmul.f32 %v1129, %v1174
        %v1179 = vmul.f32 %v1109, %v1134
        %v1180 = vmul.f32 %v1111, %v1135
        %v1181 = vadd.f32 %v1177, %v1179
        %v1182 = vadd.f32 %v1178, %v1180
        %v1183 = vtanh.pop %v1181
        %v1184 = vtanh.pop %v1182
        %v1185 = vmul.f32 %v1149, %v1183
        %v1186 = vmul.f32 %v1151, %v1184
        %v1189 = vcombine.low %v1185, %v1186
        %v1191 = vunpack.c.l.s4 1966171168
        %v1192 = vunpack.c.0.s8 %v1191
        %v1193 = vlaneseq
        %v1194 = vshrl.u32 %v1193, 7
        %v1195 = vsub.s32 %v1192, %v1194
        %v1196 = vrot.slane %v1189, %v1195
        %v1198 = vunpack.c.l.s4 1966171168
        %v1199 = vunpack.c.0.s8 %v1198
        %v1200 = vlaneseq
        %v1201 = vshrl.u32 %v1200, 7
        %v1202 = vsub.s32 %v1199, %v1201
        %v1203 = vrot.slane %v1196, %v1202
        %v1205 = vpack.c.bf16 %v1203, %v1203
        %v1206 = vpack.c.bf16 %v812, %v812
        %v1271 = vunpack.c.l.b16 %v724
        %v1272 = vunpack.c.h.b16 %v724
        %v1273 = vunpack.c.l.b16 %v725
        %v1274 = vunpack.c.h.b16 %v725
        %v1275 = vunpack.c.l.b16 %v726
        %v1276 = vunpack.c.h.b16 %v726
        %v1277 = vunpack.c.l.b16 %v727
        %v1278 = vunpack.c.h.b16 %v727
        %v1279 = vunpack.c.l.b16 %v728
        %v1280 = vunpack.c.h.b16 %v728
        %v1281 = vunpack.c.l.b16 %v729
        %v1282 = vunpack.c.h.b16 %v729
        %v1283 = vunpack.c.l.b16 %v730
        %v1284 = vunpack.c.h.b16 %v730
        %v1285 = vunpack.c.l.b16 %v731
        %v1286 = vunpack.c.h.b16 %v731
        %v1287 = vunpack.c.l.b16 %v732
        %v1288 = vunpack.c.h.b16 %v732
        %v1289 = vunpack.c.l.b16 %v733
        %v1290 = vunpack.c.h.b16 %v733
        %v1291 = vunpack.c.l.b16 %v734
        %v1292 = vunpack.c.h.b16 %v734
        %v1293 = vunpack.c.l.b16 %v735
        %v1294 = vunpack.c.h.b16 %v735
        %v1295 = vunpack.c.l.b16 %v736
        %v1296 = vunpack.c.h.b16 %v736
        %v1297 = vunpack.c.l.b16 %v737
        %v1298 = vunpack.c.h.b16 %v737
        %v1299 = vunpack.c.l.b16 %v738
        %v1300 = vunpack.c.h.b16 %v738
        %v1301 = vunpack.c.l.b16 %v739
        %v1302 = vunpack.c.h.b16 %v739
        %v1303 = vunpack.c.l.b16 %v740
        %v1304 = vunpack.c.h.b16 %v740
        %v1305 = vunpack.c.l.b16 %v741
        %v1306 = vunpack.c.h.b16 %v741
        %v1307 = vunpack.c.l.b16 %v742
        %v1308 = vunpack.c.h.b16 %v742
        %v1309 = vunpack.c.l.b16 %v743
        %v1310 = vunpack.c.h.b16 %v743
        %v1311 = vunpack.c.l.b16 %v744
        %v1312 = vunpack.c.h.b16 %v744
        %v1313 = vunpack.c.l.b16 %v745
        %v1314 = vunpack.c.h.b16 %v745
        %v1315 = vunpack.c.l.b16 %v746
        %v1316 = vunpack.c.h.b16 %v746
        %v1317 = vunpack.c.l.b16 %v747
        %v1318 = vunpack.c.h.b16 %v747
        %v1319 = vunpack.c.l.b16 %v748
        %v1320 = vunpack.c.h.b16 %v748
        %v1321 = vunpack.c.l.b16 %v749
        %v1322 = vunpack.c.h.b16 %v749
        %v1323 = vunpack.c.l.b16 %v750
        %v1324 = vunpack.c.h.b16 %v750
        %v1325 = vunpack.c.l.b16 %v751
        %v1326 = vunpack.c.h.b16 %v751
        %v1327 = vunpack.c.l.b16 %v752
        %v1328 = vunpack.c.h.b16 %v752
        %v1329 = vunpack.c.l.b16 %v753
        %v1330 = vunpack.c.h.b16 %v753
        %v1331 = vunpack.c.l.b16 %v754
        %v1332 = vunpack.c.h.b16 %v754
        %v1333 = vunpack.c.l.b16 %v755
        %v1334 = vunpack.c.h.b16 %v755
        %v1335 = vunpack.c.l.b16 %v756
        %v1336 = vunpack.c.h.b16 %v756
        %v1337 = vunpack.c.l.b16 %v757
        %v1338 = vunpack.c.h.b16 %v757
        %v1339 = vunpack.c.l.b16 %v758
        %v1340 = vunpack.c.h.b16 %v758
        %v1341 = vunpack.c.l.b16 %v759
        %v1342 = vunpack.c.h.b16 %v759
        %v1343 = vunpack.c.l.b16 %v760
        %v1344 = vunpack.c.h.b16 %v760
        %v1345 = vunpack.c.l.b16 %v761
        %v1346 = vunpack.c.h.b16 %v761
        %v1347 = vunpack.c.l.b16 %v762
        %v1348 = vunpack.c.h.b16 %v762
        %v1349 = vunpack.c.l.b16 %v763
        %v1350 = vunpack.c.h.b16 %v763
        %v1351 = vunpack.c.l.b16 %v764
        %v1352 = vunpack.c.h.b16 %v764
        %v1353 = vunpack.c.l.b16 %v765
        %v1354 = vunpack.c.h.b16 %v765
        %v1355 = vunpack.c.l.b16 %v766
        %v1356 = vunpack.c.h.b16 %v766
        %v1357 = vunpack.c.l.b16 %v767
        %v1358 = vunpack.c.h.b16 %v767
        %v1359 = vunpack.c.l.b16 %v768
        %v1360 = vunpack.c.h.b16 %v768
        %v1361 = vunpack.c.l.b16 %v769
        %v1362 = vunpack.c.h.b16 %v769
        %v1363 = vunpack.c.l.b16 %v770
        %v1364 = vunpack.c.h.b16 %v770
        %v1365 = vunpack.c.l.b16 %v771
        %v1366 = vunpack.c.h.b16 %v771
        %v1367 = vunpack.c.l.b16 %v772
        %v1368 = vunpack.c.h.b16 %v772
        %v1369 = vunpack.c.l.b16 %v773
        %v1370 = vunpack.c.h.b16 %v773
        %v1371 = vunpack.c.l.b16 %v774
        %v1372 = vunpack.c.h.b16 %v774
        %v1373 = vunpack.c.l.b16 %v775
        %v1374 = vunpack.c.h.b16 %v775
        %v1375 = vunpack.c.l.b16 %v776
        %v1376 = vunpack.c.h.b16 %v776
        %v1377 = vunpack.c.l.b16 %v777
        %v1378 = vunpack.c.h.b16 %v777
        %v1379 = vunpack.c.l.b16 %v778
        %v1380 = vunpack.c.h.b16 %v778
        %v1381 = vunpack.c.l.b16 %v779
        %v1382 = vunpack.c.h.b16 %v779
        %v1383 = vunpack.c.l.b16 %v780
        %v1384 = vunpack.c.h.b16 %v780
        %v1385 = vunpack.c.l.b16 %v781
        %v1386 = vunpack.c.h.b16 %v781
        %v1387 = vunpack.c.l.b16 %v782
        %v1388 = vunpack.c.h.b16 %v782
        %v1389 = vunpack.c.l.b16 %v783
        %v1390 = vunpack.c.h.b16 %v783
        %v1391 = vunpack.c.l.b16 %v784
        %v1392 = vunpack.c.h.b16 %v784
        %v1393 = vunpack.c.l.b16 %v785
        %v1394 = vunpack.c.h.b16 %v785
        %v1395 = vunpack.c.l.b16 %v786
        %v1396 = vunpack.c.h.b16 %v786
        %v1397 = vunpack.c.l.b16 %v787
        %v1398 = vunpack.c.h.b16 %v787
        %v1399 = vpack.c.b16 %v1275, %v1271
        %v1400 = vpack.c.b16 %v1276, %v1272
        %v1401 = vpack.c.b16 %v1277, %v1273
        %v1402 = vpack.c.b16 %v1278, %v1274
        %v1403 = vpack.c.b16 %v1283, %v1279
        %v1404 = vpack.c.b16 %v1284, %v1280
        %v1405 = vpack.c.b16 %v1285, %v1281
        %v1406 = vpack.c.b16 %v1286, %v1282
        %v1407 = vpack.c.b16 %v1291, %v1287
        %v1408 = vpack.c.b16 %v1292, %v1288
        %v1409 = vpack.c.b16 %v1293, %v1289
        %v1410 = vpack.c.b16 %v1294, %v1290
        %v1411 = vpack.c.b16 %v1299, %v1295
        %v1412 = vpack.c.b16 %v1300, %v1296
        %v1413 = vpack.c.b16 %v1301, %v1297
        %v1414 = vpack.c.b16 %v1302, %v1298
        %v1415 = vpack.c.b16 %v1307, %v1303
        %v1416 = vpack.c.b16 %v1308, %v1304
        %v1417 = vpack.c.b16 %v1309, %v1305
        %v1418 = vpack.c.b16 %v1310, %v1306
        %v1419 = vpack.c.b16 %v1315, %v1311
        %v1420 = vpack.c.b16 %v1316, %v1312
        %v1421 = vpack.c.b16 %v1317, %v1313
        %v1422 = vpack.c.b16 %v1318, %v1314
        %v1423 = vpack.c.b16 %v1323, %v1319
        %v1424 = vpack.c.b16 %v1324, %v1320
        %v1425 = vpack.c.b16 %v1325, %v1321
        %v1426 = vpack.c.b16 %v1326, %v1322
        %v1427 = vpack.c.b16 %v1331, %v1327
        %v1428 = vpack.c.b16 %v1332, %v1328
        %v1429 = vpack.c.b16 %v1333, %v1329
        %v1430 = vpack.c.b16 %v1334, %v1330
        %v1431 = vpack.c.b16 %v1339, %v1335
        %v1432 = vpack.c.b16 %v1340, %v1336
        %v1433 = vpack.c.b16 %v1341, %v1337
        %v1434 = vpack.c.b16 %v1342, %v1338
        %v1435 = vpack.c.b16 %v1347, %v1343
        %v1436 = vpack.c.b16 %v1348, %v1344
        %v1437 = vpack.c.b16 %v1349, %v1345
        %v1438 = vpack.c.b16 %v1350, %v1346
        %v1439 = vpack.c.b16 %v1355, %v1351
        %v1440 = vpack.c.b16 %v1356, %v1352
        %v1441 = vpack.c.b16 %v1357, %v1353
        %v1442 = vpack.c.b16 %v1358, %v1354
        %v1443 = vpack.c.b16 %v1363, %v1359
        %v1444 = vpack.c.b16 %v1364, %v1360
        %v1445 = vpack.c.b16 %v1365, %v1361
        %v1446 = vpack.c.b16 %v1366, %v1362
        %v1447 = vpack.c.b16 %v1371, %v1367
        %v1448 = vpack.c.b16 %v1372, %v1368
        %v1449 = vpack.c.b16 %v1373, %v1369
        %v1450 = vpack.c.b16 %v1374, %v1370
        %v1451 = vpack.c.b16 %v1379, %v1375
        %v1452 = vpack.c.b16 %v1380, %v1376
        %v1453 = vpack.c.b16 %v1381, %v1377
        %v1454 = vpack.c.b16 %v1382, %v1378
        %v1455 = vpack.c.b16 %v1387, %v1383
        %v1456 = vpack.c.b16 %v1388, %v1384
        %v1457 = vpack.c.b16 %v1389, %v1385
        %v1458 = vpack.c.b16 %v1390, %v1386
        %v1459 = vpack.c.b16 %v1395, %v1391
        %v1460 = vpack.c.b16 %v1396, %v1392
        %v1461 = vpack.c.b16 %v1397, %v1393
        %v1462 = vpack.c.b16 %v1398, %v1394
        %1527 = vmatprep.subr.bf16.mxu0 %v1400
        %1528 = vmatpush1.bf16.msra.mxu0 %v1399
        %1529 = vmatprep.subr.bf16.mxu0 %v1404
        %1530 = vmatpush1.bf16.msra.mxu0 %v1403
        %1531 = vmatprep.subr.bf16.mxu0 %v1408
        %1532 = vmatpush1.bf16.msra.mxu0 %v1407
        %1533 = vmatprep.subr.bf16.mxu0 %v1412
        %1534 = vmatpush1.bf16.msra.mxu0 %v1411
        %1535 = vmatprep.subr.bf16.mxu0 %v1416
        %1536 = vmatpush1.bf16.msra.mxu0 %v1415
        %1537 = vmatprep.subr.bf16.mxu0 %v1420
        %1538 = vmatpush1.bf16.msra.mxu0 %v1419
        %1539 = vmatprep.subr.bf16.mxu0 %v1424
        %1540 = vmatpush1.bf16.msra.mxu0 %v1423
        %1541 = vmatprep.subr.bf16.mxu0 %v1428
        %1542 = vmatpush1.bf16.msra.mxu0 %v1427
        %1543 = vmatprep.subr.bf16.mxu0 %v1432
        %1544 = vmatpush1.bf16.msra.mxu0 %v1431
        %1545 = vmatprep.subr.bf16.mxu0 %v1436
        %1546 = vmatpush1.bf16.msra.mxu0 %v1435
        %1547 = vmatprep.subr.bf16.mxu0 %v1440
        %1548 = vmatpush1.bf16.msra.mxu0 %v1439
        %1549 = vmatprep.subr.bf16.mxu0 %v1444
        %1550 = vmatpush1.bf16.msra.mxu0 %v1443
        %1551 = vmatprep.subr.bf16.mxu0 %v1448
        %1552 = vmatpush1.bf16.msra.mxu0 %v1447
        %1553 = vmatprep.subr.bf16.mxu0 %v1452
        %1554 = vmatpush1.bf16.msra.mxu0 %v1451
        %1555 = vmatprep.subr.bf16.mxu0 %v1456
        %1556 = vmatpush1.bf16.msra.mxu0 %v1455
        %1557 = vmatprep.subr.bf16.mxu0 %v1460
        %1558 = vmatpush1.bf16.msra.mxu0 %v1459
        %1559 = vmatprep.mubr.bf16.mxu0 %v1206
        %1560 = vmatmul.mubr.bf16.gmra.mrb[0].mxu0 %v1205
        %v1561 = vpop.f32.mrb[0].mxu0
        %v1562 = vadd.f32 %v793, %v1561
        %v1563 = vpop.f32.mrb[0].mxu0
        %v1564 = vadd.f32 %v797, %v1563
        %v1565 = vpop.f32.mrb[0].mxu0
        %v1566 = vpop.f32.mrb[0].mxu0
        %1567 = vdwg.mxu0
        %1568 = vmatprep.subr.bf16.mxu0 %v1402
        %1569 = vmatpush1.bf16.msra.mxu0 %v1401
        %1570 = vmatprep.subr.bf16.mxu0 %v1406
        %1571 = vmatpush1.bf16.msra.mxu0 %v1405
        %1572 = vmatprep.subr.bf16.mxu0 %v1410
        %1573 = vmatpush1.bf16.msra.mxu0 %v1409
        %1574 = vmatprep.subr.bf16.mxu0 %v1414
        %1575 = vmatpush1.bf16.msra.mxu0 %v1413
        %1576 = vmatprep.subr.bf16.mxu0 %v1418
        %1577 = vmatpush1.bf16.msra.mxu0 %v1417
        %1578 = vmatprep.subr.bf16.mxu0 %v1422
        %1579 = vmatpush1.bf16.msra.mxu0 %v1421
        %1580 = vmatprep.subr.bf16.mxu0 %v1426
        %1581 = vmatpush1.bf16.msra.mxu0 %v1425
        %1582 = vmatprep.subr.bf16.mxu0 %v1430
        %1583 = vmatpush1.bf16.msra.mxu0 %v1429
        %1584 = vmatprep.subr.bf16.mxu0 %v1434
        %1585 = vmatpush1.bf16.msra.mxu0 %v1433
        %1586 = vmatprep.subr.bf16.mxu0 %v1438
        %1587 = vmatpush1.bf16.msra.mxu0 %v1437
        %1588 = vmatprep.subr.bf16.mxu0 %v1442
        %1589 = vmatpush1.bf16.msra.mxu0 %v1441
        %1590 = vmatprep.subr.bf16.mxu0 %v1446
        %1591 = vmatpush1.bf16.msra.mxu0 %v1445
        %1592 = vmatprep.subr.bf16.mxu0 %v1450
        %1593 = vmatpush1.bf16.msra.mxu0 %v1449
        %1594 = vmatprep.subr.bf16.mxu0 %v1454
        %1595 = vmatpush1.bf16.msra.mxu0 %v1453
        %1596 = vmatprep.subr.bf16.mxu0 %v1458
        %1597 = vmatpush1.bf16.msra.mxu0 %v1457
        %1598 = vmatprep.subr.bf16.mxu0 %v1462
        %1599 = vmatpush1.bf16.msra.mxu0 %v1461
        %1600 = vmatprep.mubr.bf16.mxu0 %v1206
        %1601 = vmatmul.mubr.bf16.gmra.mrb[0].mxu0 %v1205
        %v1602 = vpop.f32.mrb[0].mxu0
        %v1603 = vadd.f32 %v801, %v1602
        %v1604 = vpop.f32.mrb[0].mxu0
        %v1605 = vadd.f32 %v805, %v1604
        %v1606 = vpop.f32.mrb[0].mxu0
        %v1607 = vpop.f32.mrb[0].mxu0
        %1608 = vdwg.mxu0
        %v1609 = vxor.u32 %v1562, 2147483648
        %v1610 = vmul.f32 %v1609, 1.442695
        %v1611 = vpow.pop %v1610
        %v1612 = vadd.f32 %v1611, 1.0
        %v1613 = vrcp.pop %v1612
        %v1614 = vmul.f32 1.0, %v1613
        %v1615 = vxor.u32 %v1564, 2147483648
        %v1616 = vmul.f32 %v1615, 1.442695
        %v1617 = vpow.pop %v1616
        %v1618 = vadd.f32 %v1617, 1.0
        %v1619 = vrcp.pop %v1618
        %v1620 = vmul.f32 1.0, %v1619
        %v1621 = vtanh.pop %v1603
        %v1622 = vxor.u32 %v1605, 2147483648
        %v1623 = vmul.f32 %v1622, 1.442695
        %v1624 = vpow.pop %v1623
        %v1625 = vadd.f32 %v1624, 1.0
        %v1626 = vrcp.pop %v1625
        %v1627 = vmul.f32 1.0, %v1626
        %v1628 = vmul.f32 %v1620, %v813
        %v1629 = vmul.f32 %v1614, %v1621
        %v1630 = vadd.f32 %v1628, %v1629
        %v1631 = vtanh.pop %v1630
        %v1632 = vmul.f32 %v1627, %v1631
        %s1633 = scalar_lea.vmem [#allocation2], 1
        %v1634 = vld [vmem:[%s1633] ss:$8 sm:$0xf]
        %s1635 = scalar_lea.vmem [#allocation2], 33
        %v1636 = vld [vmem:[%s1635] ss:$8 sm:$0xf]
        %v1637 = vpack.c.bf16 %v1185, %v1185
        %v1638 = vpack.c.bf16 %v1186, %v1186
        %v1641 = vunpack.c.l.b16 %v1637
        %v1642 = vunpack.c.l.b16 %v1638
        %v1643 = vrot.slane %v1642, 7
        %vm1644 = vcmask 1041409
        %v1645 = vsel %vm1644, %v1643, %v1641
        %v1646 = vpack.c.b16 %v1645, %v1645
        %1648 = vmatprep.subr.bf16.mxu0 %v915
        %1649 = vmatpush1.bf16.msra.mxu0 %v914
        %1650 = vmatprep.subr.bf16.mxu0 %v919
        %1651 = vmatpush1.bf16.msra.mxu0 %v918
        %1652 = vmatprep.subr.bf16.mxu0 %v923
        %1653 = vmatpush1.bf16.msra.mxu0 %v922
        %1654 = vmatprep.subr.bf16.mxu0 %v927
        %1655 = vmatpush1.bf16.msra.mxu0 %v926
        %1656 = vmatprep.subr.bf16.mxu0 %v931
        %1657 = vmatpush1.bf16.msra.mxu0 %v930
        %1658 = vmatprep.subr.bf16.mxu0 %v935
        %1659 = vmatpush1.bf16.msra.mxu0 %v934
        %1660 = vmatprep.subr.bf16.mxu0 %v939
        %1661 = vmatpush1.bf16.msra.mxu0 %v938
        %1662 = vmatprep.subr.bf16.mxu0 %v943
        %1663 = vmatpush1.bf16.msra.mxu0 %v942
        %1664 = vmatprep.subr.bf16.mxu0 0
        %1665 = vmatpush1.bf16.msra.mxu0 0
        %1666 = vmatprep.subr.bf16.mxu0 0
        %1667 = vmatpush1.bf16.msra.mxu0 0
        %1668 = vmatprep.subr.bf16.mxu0 0
        %1669 = vmatpush1.bf16.msra.mxu0 0
        %1670 = vmatprep.subr.bf16.mxu0 0
        %1671 = vmatpush1.bf16.msra.mxu0 0
        %1672 = vmatprep.subr.bf16.mxu0 0
        %1673 = vmatpush1.bf16.msra.mxu0 0
        %1674 = vmatprep.subr.bf16.mxu0 0
        %1675 = vmatpush1.bf16.msra.mxu0 0
        %1676 = vmatprep.subr.bf16.mxu0 0
        %1677 = vmatpush1.bf16.msra.mxu0 0
        %1678 = vmatprep.subr.bf16.mxu0 0
        %1679 = vmatpush1.bf16.msra.mxu0 0
        %1680 = vmatprep.mubr.bf16.mxu0 0
        %1681 = vmatmul.mubr.bf16.gmra.mrb[0].mxu0 %v1646
        %v1682 = vpop.f32.mrb[0].mxu0
        %v1683 = vadd.f32 0.0, %v1682
        %v1684 = vpop.f32.mrb[0].mxu0
        %v1685 = vadd.f32 0.0, %v1684
        %v1686 = vpop.f32.mrb[0].mxu0
        %v1687 = vpop.f32.mrb[0].mxu0
        %1688 = vdwg.mxu0
        %1689 = vmatprep.subr.bf16.mxu0 %v917
        %1690 = vmatpush1.bf16.msra.mxu0 %v916
        %1691 = vmatprep.subr.bf16.mxu0 %v921
        %1692 = vmatpush1.bf16.msra.mxu0 %v920
        %1693 = vmatprep.subr.bf16.mxu0 %v925
        %1694 = vmatpush1.bf16.msra.mxu0 %v924
        %1695 = vmatprep.subr.bf16.mxu0 %v929
        %1696 = vmatpush1.bf16.msra.mxu0 %v928
        %1697 = vmatprep.subr.bf16.mxu0 %v933
        %1698 = vmatpush1.bf16.msra.mxu0 %v932
        %1699 = vmatprep.subr.bf16.mxu0 %v937
        %1700 = vmatpush1.bf16.msra.mxu0 %v936
        %1701 = vmatprep.subr.bf16.mxu0 %v941
        %1702 = vmatpush1.bf16.msra.mxu0 %v940
        %1703 = vmatprep.subr.bf16.mxu0 %v945
        %1704 = vmatpush1.bf16.msra.mxu0 %v944
        %1705 = vmatprep.subr.bf16.mxu0 0
        %1706 = vmatpush1.bf16.msra.mxu0 0
        %1707 = vmatprep.subr.bf16.mxu0 0
        %1708 = vmatpush1.bf16.msra.mxu0 0
        %1709 = vmatprep.subr.bf16.mxu0 0
        %1710 = vmatpush1.bf16.msra.mxu0 0
        %1711 = vmatprep.subr.bf16.mxu0 0
        %1712 = vmatpush1.bf16.msra.mxu0 0
        %1713 = vmatprep.subr.bf16.mxu0 0
        %1714 = vmatpush1.bf16.msra.mxu0 0
        %1715 = vmatprep.subr.bf16.mxu0 0
        %1716 = vmatpush1.bf16.msra.mxu0 0
        %1717 = vmatprep.subr.bf16.mxu0 0
        %1718 = vmatpush1.bf16.msra.mxu0 0
        %1719 = vmatprep.subr.bf16.mxu0 0
        %1720 = vmatpush1.bf16.msra.mxu0 0
        %1721 = vmatprep.mubr.bf16.mxu0 0
        %1722 = vmatmul.mubr.bf16.gmra.mrb[0].mxu0 %v1646
        %v1723 = vpop.f32.mrb[0].mxu0
        %v1724 = vadd.f32 0.0, %v1723
        %v1725 = vpop.f32.mrb[0].mxu0
        %v1726 = vadd.f32 0.0, %v1725
        %v1727 = vpop.f32.mrb[0].mxu0
        %v1728 = vpop.f32.mrb[0].mxu0
        %1729 = vdwg.mxu0
        %v1734 = vcombine.low %v1683, %v1685
        %v1735 = vcombine.low %v1724, %v1726
        %v1737 = vunpack.c.l.s4 1966171168
        %v1738 = vunpack.c.0.s8 %v1737
        %v1739 = vlaneseq
        %v1740 = vshrl.u32 %v1739, 7
        %v1741 = vsub.s32 %v1738, %v1740
        %v1742 = vrot.slane %v1734, %v1741
        %v1744 = vunpack.c.l.s4 1966171168
        %v1745 = vunpack.c.0.s8 %v1744
        %v1746 = vlaneseq
        %v1747 = vshrl.u32 %v1746, 7
        %v1748 = vsub.s32 %v1745, %v1747
        %v1749 = vrot.slane %v1735, %v1748
        %v1750 = vcombine.low %v1742, %v1749
        %v1751 = vcombine.high %v1742, %v1749
        %v1753 = vunpack.c.l.s4 1966171168
        %v1754 = vunpack.c.0.s8 %v1753
        %v1755 = vlaneseq
        %v1756 = vshrl.u32 %v1755, 7
        %v1757 = vsub.s32 %v1754, %v1756
        %v1758 = vrot.slane %v1750, %v1757
        %v1760 = vunpack.c.l.s4 1966171168
        %v1761 = vunpack.c.0.s8 %v1760
        %v1762 = vlaneseq
        %v1763 = vshrl.u32 %v1762, 7
        %v1764 = vsub.s32 %v1761, %v1763
        %v1765 = vrot.slane %v1751, %v1764
        %v1768 = vadd.f32 %v1634, %v1758
        %v1769 = vadd.f32 %v1636, %v1765
        %v1770 = vxor.u32 %v1768, 2147483648
        %v1771 = vxor.u32 %v1769, 2147483648
        %v1772 = vmul.f32 %v1770, 1.442695
        %v1773 = vpow.pop %v1772
        %v1774 = vmul.f32 %v1771, 1.442695
        %v1775 = vpow.pop %v1774
        %v1776 = vadd.f32 %v1773, 1.0
        %v1777 = vadd.f32 %v1775, 1.0
        %v1778 = vrcp.pop %v1776
        %v1779 = vmul.f32 1.0, %v1778
        %v1780 = vrcp.pop %v1777
        %v1781 = vmul.f32 1.0, %v1780
        %v1784 = vrot.slane %v1768, 1
        %v1785 = vrot.slane %v1769, 1
        %v1788 = vxor.u32 %v1784, 2147483648
        %v1789 = vxor.u32 %v1785, 2147483648
        %v1790 = vmul.f32 %v1788, 1.442695
        %v1791 = vpow.pop %v1790
        %v1792 = vmul.f32 %v1789, 1.442695
        %v1793 = vpow.pop %v1792
        %v1794 = vadd.f32 %v1791, 1.0
        %v1795 = vadd.f32 %v1793, 1.0
        %v1796 = vrcp.pop %v1794
        %v1797 = vmul.f32 1.0, %v1796
        %v1798 = vrcp.pop %v1795
        %v1799 = vmul.f32 1.0, %v1798
        %v1800 = vrot.slane %v1768, 2
        %v1801 = vrot.slane %v1769, 2
        %v1804 = vtanh.pop %v1800
        %v1805 = vtanh.pop %v1801
        %v1806 = vrot.slane %v1768, 3
        %v1807 = vrot.slane %v1769, 3
        %v1810 = vxor.u32 %v1806, 2147483648
        %v1811 = vxor.u32 %v1807, 2147483648
        %v1812 = vmul.f32 %v1810, 1.442695
        %v1813 = vpow.pop %v1812
        %v1814 = vmul.f32 %v1811, 1.442695
        %v1815 = vpow.pop %v1814
        %v1816 = vadd.f32 %v1813, 1.0
        %v1817 = vadd.f32 %v1815, 1.0
        %v1818 = vrcp.pop %v1816
        %v1819 = vmul.f32 1.0, %v1818
        %v1820 = vrcp.pop %v1817
        %v1821 = vmul.f32 1.0, %v1820
        %v1822 = vmul.f32 %v1797, %v1181
        %v1823 = vmul.f32 %v1799, %v1182
        %v1824 = vmul.f32 %v1779, %v1804
        %v1825 = vmul.f32 %v1781, %v1805
        %v1826 = vadd.f32 %v1822, %v1824
        %v1827 = vadd.f32 %v1823, %v1825
        %v1828 = vtanh.pop %v1826
        %v1829 = vtanh.pop %v1827
        %v1830 = vmul.f32 %v1819, %v1828
        %v1831 = vmul.f32 %v1821, %v1829
        %v1834 = vcombine.low %v1830, %v1831
        %v1836 = vunpack.c.l.s4 1966171168
        %v1837 = vunpack.c.0.s8 %v1836
        %v1838 = vlaneseq
        %v1839 = vshrl.u32 %v1838, 7
        %v1840 = vsub.s32 %v1837, %v1839
        %v1841 = vrot.slane %v1834, %v1840
        %v1843 = vunpack.c.l.s4 1966171168
        %v1844 = vunpack.c.0.s8 %v1843
        %v1845 = vlaneseq
        %v1846 = vshrl.u32 %v1845, 7
        %v1847 = vsub.s32 %v1844, %v1846
        %v1848 = vrot.slane %v1841, %v1847
        %v1850 = vpack.c.bf16 %v1848, %v1848
        %v1851 = vpack.c.bf16 %v1632, %v1632
        %1852 = vmatprep.subr.bf16.mxu0 %v1400
        %1853 = vmatpush1.bf16.msra.mxu0 %v1399
        %1854 = vmatprep.subr.bf16.mxu0 %v1404
        %1855 = vmatpush1.bf16.msra.mxu0 %v1403
        %1856 = vmatprep.subr.bf16.mxu0 %v1408
        %1857 = vmatpush1.bf16.msra.mxu0 %v1407
        %1858 = vmatprep.subr.bf16.mxu0 %v1412
        %1859 = vmatpush1.bf16.msra.mxu0 %v1411
        %1860 = vmatprep.subr.bf16.mxu0 %v1416
        %1861 = vmatpush1.bf16.msra.mxu0 %v1415
        %1862 = vmatprep.subr.bf16.mxu0 %v1420
        %1863 = vmatpush1.bf16.msra.mxu0 %v1419
        %1864 = vmatprep.subr.bf16.mxu0 %v1424
        %1865 = vmatpush1.bf16.msra.mxu0 %v1423
        %1866 = vmatprep.subr.bf16.mxu0 %v1428
        %1867 = vmatpush1.bf16.msra.mxu0 %v1427
        %1868 = vmatprep.subr.bf16.mxu0 %v1432
        %1869 = vmatpush1.bf16.msra.mxu0 %v1431
        %1870 = vmatprep.subr.bf16.mxu0 %v1436
        %1871 = vmatpush1.bf16.msra.mxu0 %v1435
        %1872 = vmatprep.subr.bf16.mxu0 %v1440
        %1873 = vmatpush1.bf16.msra.mxu0 %v1439
        %1874 = vmatprep.subr.bf16.mxu0 %v1444
        %1875 = vmatpush1.bf16.msra.mxu0 %v1443
        %1876 = vmatprep.subr.bf16.mxu0 %v1448
        %1877 = vmatpush1.bf16.msra.mxu0 %v1447
        %1878 = vmatprep.subr.bf16.mxu0 %v1452
        %1879 = vmatpush1.bf16.msra.mxu0 %v1451
        %1880 = vmatprep.subr.bf16.mxu0 %v1456
        %1881 = vmatpush1.bf16.msra.mxu0 %v1455
        %1882 = vmatprep.subr.bf16.mxu0 %v1460
        %1883 = vmatpush1.bf16.msra.mxu0 %v1459
        %1884 = vmatprep.mubr.bf16.mxu0 %v1851
        %1885 = vmatmul.mubr.bf16.gmra.mrb[0].mxu0 %v1850
        %v1886 = vpop.f32.mrb[0].mxu0
        %v1887 = vadd.f32 %v793, %v1886
        %v1888 = vpop.f32.mrb[0].mxu0
        %v1889 = vadd.f32 %v797, %v1888
        %v1890 = vpop.f32.mrb[0].mxu0
        %v1891 = vpop.f32.mrb[0].mxu0
        %1892 = vdwg.mxu0
        %1893 = vmatprep.subr.bf16.mxu0 %v1402
        %1894 = vmatpush1.bf16.msra.mxu0 %v1401
        %1895 = vmatprep.subr.bf16.mxu0 %v1406
        %1896 = vmatpush1.bf16.msra.mxu0 %v1405
        %1897 = vmatprep.subr.bf16.mxu0 %v1410
        %1898 = vmatpush1.bf16.msra.mxu0 %v1409
        %1899 = vmatprep.subr.bf16.mxu0 %v1414
        %1900 = vmatpush1.bf16.msra.mxu0 %v1413
        %1901 = vmatprep.subr.bf16.mxu0 %v1418
        %1902 = vmatpush1.bf16.msra.mxu0 %v1417
        %1903 = vmatprep.subr.bf16.mxu0 %v1422
        %1904 = vmatpush1.bf16.msra.mxu0 %v1421
        %1905 = vmatprep.subr.bf16.mxu0 %v1426
        %1906 = vmatpush1.bf16.msra.mxu0 %v1425
        %1907 = vmatprep.subr.bf16.mxu0 %v1430
        %1908 = vmatpush1.bf16.msra.mxu0 %v1429
        %1909 = vmatprep.subr.bf16.mxu0 %v1434
        %1910 = vmatpush1.bf16.msra.mxu0 %v1433
        %1911 = vmatprep.subr.bf16.mxu0 %v1438
        %1912 = vmatpush1.bf16.msra.mxu0 %v1437
        %1913 = vmatprep.subr.bf16.mxu0 %v1442
        %1914 = vmatpush1.bf16.msra.mxu0 %v1441
        %1915 = vmatprep.subr.bf16.mxu0 %v1446
        %1916 = vmatpush1.bf16.msra.mxu0 %v1445
        %1917 = vmatprep.subr.bf16.mxu0 %v1450
        %1918 = vmatpush1.bf16.msra.mxu0 %v1449
        %1919 = vmatprep.subr.bf16.mxu0 %v1454
        %1920 = vmatpush1.bf16.msra.mxu0 %v1453
        %1921 = vmatprep.subr.bf16.mxu0 %v1458
        %1922 = vmatpush1.bf16.msra.mxu0 %v1457
        %1923 = vmatprep.subr.bf16.mxu0 %v1462
        %1924 = vmatpush1.bf16.msra.mxu0 %v1461
        %1925 = vmatprep.mubr.bf16.mxu0 %v1851
        %1926 = vmatmul.mubr.bf16.gmra.mrb[0].mxu0 %v1850
        %v1927 = vpop.f32.mrb[0].mxu0
        %v1928 = vadd.f32 %v801, %v1927
        %v1929 = vpop.f32.mrb[0].mxu0
        %v1930 = vadd.f32 %v805, %v1929
        %v1931 = vpop.f32.mrb[0].mxu0
        %v1932 = vpop.f32.mrb[0].mxu0
        %1933 = vdwg.mxu0
        %v1934 = vxor.u32 %v1887, 2147483648
        %v1935 = vmul.f32 %v1934, 1.442695
        %v1936 = vpow.pop %v1935
        %v1937 = vadd.f32 %v1936, 1.0
        %v1938 = vrcp.pop %v1937
        %v1939 = vmul.f32 1.0, %v1938
        %v1940 = vxor.u32 %v1889, 2147483648
        %v1941 = vmul.f32 %v1940, 1.442695
        %v1942 = vpow.pop %v1941
        %v1943 = vadd.f32 %v1942, 1.0
        %v1944 = vrcp.pop %v1943
        %v1945 = vmul.f32 1.0, %v1944
        %v1946 = vtanh.pop %v1928
        %v1947 = vxor.u32 %v1930, 2147483648
        %v1948 = vmul.f32 %v1947, 1.442695
        %v1949 = vpow.pop %v1948
        %v1950 = vadd.f32 %v1949, 1.0
        %v1951 = vrcp.pop %v1950
        %v1952 = vmul.f32 1.0, %v1951
        %v1953 = vmul.f32 %v1945, %v1630
        %v1954 = vmul.f32 %v1939, %v1946
        %v1955 = vadd.f32 %v1953, %v1954
        %v1956 = vtanh.pop %v1955
        %v1957 = vmul.f32 %v1952, %v1956
        %s1958 = scalar_lea.vmem [#allocation2], 2
        %v1959 = vld [vmem:[%s1958] ss:$8 sm:$0xf]
        %s1960 = scalar_lea.vmem [#allocation2], 34
        %v1961 = vld [vmem:[%s1960] ss:$8 sm:$0xf]
        %v1962 = vpack.c.bf16 %v1830, %v1830
        %v1963 = vpack.c.bf16 %v1831, %v1831
        %v1966 = vunpack.c.l.b16 %v1962
        %v1967 = vunpack.c.l.b16 %v1963
        %v1968 = vrot.slane %v1967, 7
        %v1969 = vsel %vm1644, %v1968, %v1966
        %v1970 = vpack.c.b16 %v1969, %v1969
        %1972 = vmatprep.subr.bf16.mxu0 %v915
        %1973 = vmatpush1.bf16.msra.mxu0 %v914
        %1974 = vmatprep.subr.bf16.mxu0 %v919
        %1975 = vmatpush1.bf16.msra.mxu0 %v918
        %1976 = vmatprep.subr.bf16.mxu0 %v923
        %1977 = vmatpush1.bf16.msra.mxu0 %v922
        %1978 = vmatprep.subr.bf16.mxu0 %v927
        %1979 = vmatpush1.bf16.msra.mxu0 %v926
        %1980 = vmatprep.subr.bf16.mxu0 %v931
        %1981 = vmatpush1.bf16.msra.mxu0 %v930
        %1982 = vmatprep.subr.bf16.mxu0 %v935
        %1983 = vmatpush1.bf16.msra.mxu0 %v934
        %1984 = vmatprep.subr.bf16.mxu0 %v939
        %1985 = vmatpush1.bf16.msra.mxu0 %v938
        %1986 = vmatprep.subr.bf16.mxu0 %v943
        %1987 = vmatpush1.bf16.msra.mxu0 %v942
        %1988 = vmatprep.subr.bf16.mxu0 0
        %1989 = vmatpush1.bf16.msra.mxu0 0
        %1990 = vmatprep.subr.bf16.mxu0 0
        %1991 = vmatpush1.bf16.msra.mxu0 0
        %1992 = vmatprep.subr.bf16.mxu0 0
        %1993 = vmatpush1.bf16.msra.mxu0 0
        %1994 = vmatprep.subr.bf16.mxu0 0
        %1995 = vmatpush1.bf16.msra.mxu0 0
        %1996 = vmatprep.subr.bf16.mxu0 0
        %1997 = vmatpush1.bf16.msra.mxu0 0
        %1998 = vmatprep.subr.bf16.mxu0 0
        %1999 = vmatpush1.bf16.msra.mxu0 0
        %2000 = vmatprep.subr.bf16.mxu0 0
        %2001 = vmatpush1.bf16.msra.mxu0 0
        %2002 = vmatprep.subr.bf16.mxu0 0
        %2003 = vmatpush1.bf16.msra.mxu0 0
        %2004 = vmatprep.mubr.bf16.mxu0 0
        %2005 = vmatmul.mubr.bf16.gmra.mrb[0].mxu0 %v1970
        %v2006 = vpop.f32.mrb[0].mxu0
        %v2007 = vadd.f32 0.0, %v2006
        %v2008 = vpop.f32.mrb[0].mxu0
        %v2009 = vadd.f32 0.0, %v2008
        %v2010 = vpop.f32.mrb[0].mxu0
        %v2011 = vpop.f32.mrb[0].mxu0
        %2012 = vdwg.mxu0
        %2013 = vmatprep.subr.bf16.mxu0 %v917
        %2014 = vmatpush1.bf16.msra.mxu0 %v916
        %2015 = vmatprep.subr.bf16.mxu0 %v921
        %2016 = vmatpush1.bf16.msra.mxu0 %v920
        %2017 = vmatprep.subr.bf16.mxu0 %v925
        %2018 = vmatpush1.bf16.msra.mxu0 %v924
        %2019 = vmatprep.subr.bf16.mxu0 %v929
        %2020 = vmatpush1.bf16.msra.mxu0 %v928
        %2021 = vmatprep.subr.bf16.mxu0 %v933
        %2022 = vmatpush1.bf16.msra.mxu0 %v932
        %2023 = vmatprep.subr.bf16.mxu0 %v937
        %2024 = vmatpush1.bf16.msra.mxu0 %v936
        %2025 = vmatprep.subr.bf16.mxu0 %v941
        %2026 = vmatpush1.bf16.msra.mxu0 %v940
        %2027 = vmatprep.subr.bf16.mxu0 %v945
        %2028 = vmatpush1.bf16.msra.mxu0 %v944
        %2029 = vmatprep.subr.bf16.mxu0 0
        %2030 = vmatpush1.bf16.msra.mxu0 0
        %2031 = vmatprep.subr.bf16.mxu0 0
        %2032 = vmatpush1.bf16.msra.mxu0 0
        %2033 = vmatprep.subr.bf16.mxu0 0
        %2034 = vmatpush1.bf16.msra.mxu0 0
        %2035 = vmatprep.subr.bf16.mxu0 0
        %2036 = vmatpush1.bf16.msra.mxu0 0
        %2037 = vmatprep.subr.bf16.mxu0 0
        %2038 = vmatpush1.bf16.msra.mxu0 0
        %2039 = vmatprep.subr.bf16.mxu0 0
        %2040 = vmatpush1.bf16.msra.mxu0 0
        %2041 = vmatprep.subr.bf16.mxu0 0
        %2042 = vmatpush1.bf16.msra.mxu0 0
        %2043 = vmatprep.subr.bf16.mxu0 0
        %2044 = vmatpush1.bf16.msra.mxu0 0
        %2045 = vmatprep.mubr.bf16.mxu0 0
        %2046 = vmatmul.mubr.bf16.gmra.mrb[0].mxu0 %v1970
        %v2047 = vpop.f32.mrb[0].mxu0
        %v2048 = vadd.f32 0.0, %v2047
        %v2049 = vpop.f32.mrb[0].mxu0
        %v2050 = vadd.f32 0.0, %v2049
        %v2051 = vpop.f32.mrb[0].mxu0
        %v2052 = vpop.f32.mrb[0].mxu0
        %2053 = vdwg.mxu0
        %v2058 = vcombine.low %v2007, %v2009
        %v2059 = vcombine.low %v2048, %v2050
        %v2061 = vunpack.c.l.s4 1966171168
        %v2062 = vunpack.c.0.s8 %v2061
        %v2063 = vlaneseq
        %v2064 = vshrl.u32 %v2063, 7
        %v2065 = vsub.s32 %v2062, %v2064
        %v2066 = vrot.slane %v2058, %v2065
        %v2068 = vunpack.c.l.s4 1966171168
        %v2069 = vunpack.c.0.s8 %v2068
        %v2070 = vlaneseq
        %v2071 = vshrl.u32 %v2070, 7
        %v2072 = vsub.s32 %v2069, %v2071
        %v2073 = vrot.slane %v2059, %v2072
        %v2074 = vcombine.low %v2066, %v2073
        %v2075 = vcombine.high %v2066, %v2073
        %v2077 = vunpack.c.l.s4 1966171168
        %v2078 = vunpack.c.0.s8 %v2077
        %v2079 = vlaneseq
        %v2080 = vshrl.u32 %v2079, 7
        %v2081 = vsub.s32 %v2078, %v2080
        %v2082 = vrot.slane %v2074, %v2081
        %v2084 = vunpack.c.l.s4 1966171168
        %v2085 = vunpack.c.0.s8 %v2084
        %v2086 = vlaneseq
        %v2087 = vshrl.u32 %v2086, 7
        %v2088 = vsub.s32 %v2085, %v2087
        %v2089 = vrot.slane %v2075, %v2088
        %v2092 = vadd.f32 %v1959, %v2082
        %v2093 = vadd.f32 %v1961, %v2089
        %v2094 = vxor.u32 %v2092, 2147483648
        %v2095 = vxor.u32 %v2093, 2147483648
        %v2096 = vmul.f32 %v2094, 1.442695
        %v2097 = vpow.pop %v2096
        %v2098 = vmul.f32 %v2095, 1.442695
        %v2099 = vpow.pop %v2098
        %v2100 = vadd.f32 %v2097, 1.0
        %v2101 = vadd.f32 %v2099, 1.0
        %v2102 = vrcp.pop %v2100
        %v2103 = vmul.f32 1.0, %v2102
        %v2104 = vrcp.pop %v2101
        %v2105 = vmul.f32 1.0, %v2104
        %v2108 = vrot.slane %v2092, 1
        %v2109 = vrot.slane %v2093, 1
        %v2112 = vxor.u32 %v2108, 2147483648
        %v2113 = vxor.u32 %v2109, 2147483648
        %v2114 = vmul.f32 %v2112, 1.442695
        %v2115 = vpow.pop %v2114
        %v2116 = vmul.f32 %v2113, 1.442695
        %v2117 = vpow.pop %v2116
        %v2118 = vadd.f32 %v2115, 1.0
        %v2119 = vadd.f32 %v2117, 1.0
        %v2120 = vrcp.pop %v2118
        %v2121 = vmul.f32 1.0, %v2120
        %v2122 = vrcp.pop %v2119
        %v2123 = vmul.f32 1.0, %v2122
        %v2124 = vrot.slane %v2092, 2
        %v2125 = vrot.slane %v2093, 2
        %v2128 = vtanh.pop %v2124
        %v2129 = vtanh.pop %v2125
        %v2130 = vrot.slane %v2092, 3
        %v2131 = vrot.slane %v2093, 3
        %v2134 = vxor.u32 %v2130, 2147483648
        %v2135 = vxor.u32 %v2131, 2147483648
        %v2136 = vmul.f32 %v2134, 1.442695
        %v2137 = vpow.pop %v2136
        %v2138 = vmul.f32 %v2135, 1.442695
        %v2139 = vpow.pop %v2138
        %v2140 = vadd.f32 %v2137, 1.0
        %v2141 = vadd.f32 %v2139, 1.0
        %v2142 = vrcp.pop %v2140
        %v2143 = vmul.f32 1.0, %v2142
        %v2144 = vrcp.pop %v2141
        %v2145 = vmul.f32 1.0, %v2144
        %v2146 = vmul.f32 %v2121, %v1826
        %v2147 = vmul.f32 %v2123, %v1827
        %v2148 = vmul.f32 %v2103, %v2128
        %v2149 = vmul.f32 %v2105, %v2129
        %v2150 = vadd.f32 %v2146, %v2148
        %v2151 = vadd.f32 %v2147, %v2149
        %v2152 = vtanh.pop %v2150
        %v2153 = vtanh.pop %v2151
        %v2154 = vmul.f32 %v2143, %v2152
        %v2155 = vmul.f32 %v2145, %v2153
        %v2158 = vcombine.low %v2154, %v2155
        %v2160 = vunpack.c.l.s4 1966171168
        %v2161 = vunpack.c.0.s8 %v2160
        %v2162 = vlaneseq
        %v2163 = vshrl.u32 %v2162, 7
        %v2164 = vsub.s32 %v2161, %v2163
        %v2165 = vrot.slane %v2158, %v2164
        %v2167 = vunpack.c.l.s4 1966171168
        %v2168 = vunpack.c.0.s8 %v2167
        %v2169 = vlaneseq
        %v2170 = vshrl.u32 %v2169, 7
        %v2171 = vsub.s32 %v2168, %v2170
        %v2172 = vrot.slane %v2165, %v2171
        %v2174 = vpack.c.bf16 %v2172, %v2172
        %v2175 = vpack.c.bf16 %v1957, %v1957
        %2176 = vmatprep.subr.bf16.mxu0 %v1400
        %2177 = vmatpush1.bf16.msra.mxu0 %v1399
        %2178 = vmatprep.subr.bf16.mxu0 %v1404
        %2179 = vmatpush1.bf16.msra.mxu0 %v1403
        %2180 = vmatprep.subr.bf16.mxu0 %v1408
        %2181 = vmatpush1.bf16.msra.mxu0 %v1407
        %2182 = vmatprep.subr.bf16.mxu0 %v1412
        %2183 = vmatpush1.bf16.msra.mxu0 %v1411
        %2184 = vmatprep.subr.bf16.mxu0 %v1416
        %2185 = vmatpush1.bf16.msra.mxu0 %v1415
        %2186 = vmatprep.subr.bf16.mxu0 %v1420
        %2187 = vmatpush1.bf16.msra.mxu0 %v1419
        %2188 = vmatprep.subr.bf16.mxu0 %v1424
        %2189 = vmatpush1.bf16.msra.mxu0 %v1423
        %2190 = vmatprep.subr.bf16.mxu0 %v1428
        %2191 = vmatpush1.bf16.msra.mxu0 %v1427
        %2192 = vmatprep.subr.bf16.mxu0 %v1432
        %2193 = vmatpush1.bf16.msra.mxu0 %v1431
        %2194 = vmatprep.subr.bf16.mxu0 %v1436
        %2195 = vmatpush1.bf16.msra.mxu0 %v1435
        %2196 = vmatprep.subr.bf16.mxu0 %v1440
        %2197 = vmatpush1.bf16.msra.mxu0 %v1439
        %2198 = vmatprep.subr.bf16.mxu0 %v1444
        %2199 = vmatpush1.bf16.msra.mxu0 %v1443
        %2200 = vmatprep.subr.bf16.mxu0 %v1448
        %2201 = vmatpush1.bf16.msra.mxu0 %v1447
        %2202 = vmatprep.subr.bf16.mxu0 %v1452
        %2203 = vmatpush1.bf16.msra.mxu0 %v1451
        %2204 = vmatprep.subr.bf16.mxu0 %v1456
        %2205 = vmatpush1.bf16.msra.mxu0 %v1455
        %2206 = vmatprep.subr.bf16.mxu0 %v1460
        %2207 = vmatpush1.bf16.msra.mxu0 %v1459
        %2208 = vmatprep.mubr.bf16.mxu0 %v2175
        %2209 = vmatmul.mubr.bf16.gmra.mrb[0].mxu0 %v2174
        %v2210 = vpop.f32.mrb[0].mxu0
        %v2211 = vadd.f32 %v793, %v2210
        %v2212 = vpop.f32.mrb[0].mxu0
        %v2213 = vadd.f32 %v797, %v2212
        %v2214 = vpop.f32.mrb[0].mxu0
        %v2215 = vpop.f32.mrb[0].mxu0
        %2216 = vdwg.mxu0
        %2217 = vmatprep.subr.bf16.mxu0 %v1402
        %2218 = vmatpush1.bf16.msra.mxu0 %v1401
        %2219 = vmatprep.subr.bf16.mxu0 %v1406
        %2220 = vmatpush1.bf16.msra.mxu0 %v1405
        %2221 = vmatprep.subr.bf16.mxu0 %v1410
        %2222 = vmatpush1.bf16.msra.mxu0 %v1409
        %2223 = vmatprep.subr.bf16.mxu0 %v1414
        %2224 = vmatpush1.bf16.msra.mxu0 %v1413
        %2225 = vmatprep.subr.bf16.mxu0 %v1418
        %2226 = vmatpush1.bf16.msra.mxu0 %v1417
        %2227 = vmatprep.subr.bf16.mxu0 %v1422
        %2228 = vmatpush1.bf16.msra.mxu0 %v1421
        %2229 = vmatprep.subr.bf16.mxu0 %v1426
        %2230 = vmatpush1.bf16.msra.mxu0 %v1425
        %2231 = vmatprep.subr.bf16.mxu0 %v1430
        %2232 = vmatpush1.bf16.msra.mxu0 %v1429
        %2233 = vmatprep.subr.bf16.mxu0 %v1434
        %2234 = vmatpush1.bf16.msra.mxu0 %v1433
        %2235 = vmatprep.subr.bf16.mxu0 %v1438
        %2236 = vmatpush1.bf16.msra.mxu0 %v1437
        %2237 = vmatprep.subr.bf16.mxu0 %v1442
        %2238 = vmatpush1.bf16.msra.mxu0 %v1441
        %2239 = vmatprep.subr.bf16.mxu0 %v1446
        %2240 = vmatpush1.bf16.msra.mxu0 %v1445
        %2241 = vmatprep.subr.bf16.mxu0 %v1450
        %2242 = vmatpush1.bf16.msra.mxu0 %v1449
        %2243 = vmatprep.subr.bf16.mxu0 %v1454
        %2244 = vmatpush1.bf16.msra.mxu0 %v1453
        %2245 = vmatprep.subr.bf16.mxu0 %v1458
        %2246 = vmatpush1.bf16.msra.mxu0 %v1457
        %2247 = vmatprep.subr.bf16.mxu0 %v1462
        %2248 = vmatpush1.bf16.msra.mxu0 %v1461
        %2249 = vmatprep.mubr.bf16.mxu0 %v2175
        %2250 = vmatmul.mubr.bf16.gmra.mrb[0].mxu0 %v2174
        %v2251 = vpop.f32.mrb[0].mxu0
        %v2252 = vadd.f32 %v801, %v2251
        %v2253 = vpop.f32.mrb[0].mxu0
        %v2254 = vadd.f32 %v805, %v2253
        %v2255 = vpop.f32.mrb[0].mxu0
        %v2256 = vpop.f32.mrb[0].mxu0
        %2257 = vdwg.mxu0
        %v2258 = vxor.u32 %v2211, 2147483648
        %v2259 = vmul.f32 %v2258, 1.442695
        %v2260 = vpow.pop %v2259
        %v2261 = vadd.f32 %v2260, 1.0
        %v2262 = vrcp.pop %v2261
        %v2263 = vmul.f32 1.0, %v2262
        %v2264 = vxor.u32 %v2213, 2147483648
        %v2265 = vmul.f32 %v2264, 1.442695
        %v2266 = vpow.pop %v2265
        %v2267 = vadd.f32 %v2266, 1.0
        %v2268 = vrcp.pop %v2267
        %v2269 = vmul.f32 1.0, %v2268
        %v2270 = vtanh.pop %v2252
        %v2271 = vxor.u32 %v2254, 2147483648
        %v2272 = vmul.f32 %v2271, 1.442695
        %v2273 = vpow.pop %v2272
        %v2274 = vadd.f32 %v2273, 1.0
        %v2275 = vrcp.pop %v2274
        %v2276 = vmul.f32 1.0, %v2275
        %v2277 = vmul.f32 %v2269, %v1955
        %v2278 = vmul.f32 %v2263, %v2270
        %v2279 = vadd.f32 %v2277, %v2278
        %v2280 = vtanh.pop %v2279
        %v2281 = vmul.f32 %v2276, %v2280
        %s2282 = scalar_lea.vmem [#allocation2], 3
        %v2283 = vld [vmem:[%s2282] ss:$8 sm:$0xf]
        %s2284 = scalar_lea.vmem [#allocation2], 35
        %v2285 = vld [vmem:[%s2284] ss:$8 sm:$0xf]
        %v2286 = vpack.c.bf16 %v2154, %v2154
        %v2287 = vpack.c.bf16 %v2155, %v2155
        %v2290 = vunpack.c.l.b16 %v2286
        %v2291 = vunpack.c.l.b16 %v2287
        %v2292 = vrot.slane %v2291, 7
        %v2293 = vsel %vm1644, %v2292, %v2290
        %v2294 = vpack.c.b16 %v2293, %v2293
        %2296 = vmatprep.subr.bf16.mxu0 %v915
        %2297 = vmatpush1.bf16.msra.mxu0 %v914
        %2298 = vmatprep.subr.bf16.mxu0 %v919
        %2299 = vmatpush1.bf16.msra.mxu0 %v918
        %2300 = vmatprep.subr.bf16.mxu0 %v923
        %2301 = vmatpush1.bf16.msra.mxu0 %v922
        %2302 = vmatprep.subr.bf16.mxu0 %v927
        %2303 = vmatpush1.bf16.msra.mxu0 %v926
        %2304 = vmatprep.subr.bf16.mxu0 %v931
        %2305 = vmatpush1.bf16.msra.mxu0 %v930
        %2306 = vmatprep.subr.bf16.mxu0 %v935
        %2307 = vmatpush1.bf16.msra.mxu0 %v934
        %2308 = vmatprep.subr.bf16.mxu0 %v939
        %2309 = vmatpush1.bf16.msra.mxu0 %v938
        %2310 = vmatprep.subr.bf16.mxu0 %v943
        %2311 = vmatpush1.bf16.msra.mxu0 %v942
        %2312 = vmatprep.subr.bf16.mxu0 0
        %2313 = vmatpush1.bf16.msra.mxu0 0
        %2314 = vmatprep.subr.bf16.mxu0 0
        %2315 = vmatpush1.bf16.msra.mxu0 0
        %2316 = vmatprep.subr.bf16.mxu0 0
        %2317 = vmatpush1.bf16.msra.mxu0 0
        %2318 = vmatprep.subr.bf16.mxu0 0
        %2319 = vmatpush1.bf16.msra.mxu0 0
        %2320 = vmatprep.subr.bf16.mxu0 0
        %2321 = vmatpush1.bf16.msra.mxu0 0
        %2322 = vmatprep.subr.bf16.mxu0 0
        %2323 = vmatpush1.bf16.msra.mxu0 0
        %2324 = vmatprep.subr.bf16.mxu0 0
        %2325 = vmatpush1.bf16.msra.mxu0 0
        %2326 = vmatprep.subr.bf16.mxu0 0
        %2327 = vmatpush1.bf16.msra.mxu0 0
        %2328 = vmatprep.mubr.bf16.mxu0 0
        %2329 = vmatmul.mubr.bf16.gmra.mrb[0].mxu0 %v2294
        %v2330 = vpop.f32.mrb[0].mxu0
        %v2331 = vadd.f32 0.0, %v2330
        %v2332 = vpop.f32.mrb[0].mxu0
        %v2333 = vadd.f32 0.0, %v2332
        %v2334 = vpop.f32.mrb[0].mxu0
        %v2335 = vpop.f32.mrb[0].mxu0
        %2336 = vdwg.mxu0
        %2337 = vmatprep.subr.bf16.mxu0 %v917
        %2338 = vmatpush1.bf16.msra.mxu0 %v916
        %2339 = vmatprep.subr.bf16.mxu0 %v921
        %2340 = vmatpush1.bf16.msra.mxu0 %v920
        %2341 = vmatprep.subr.bf16.mxu0 %v925
        %2342 = vmatpush1.bf16.msra.mxu0 %v924
        %2343 = vmatprep.subr.bf16.mxu0 %v929
        %2344 = vmatpush1.bf16.msra.mxu0 %v928
        %2345 = vmatprep.subr.bf16.mxu0 %v933
        %2346 = vmatpush1.bf16.msra.mxu0 %v932
        %2347 = vmatprep.subr.bf16.mxu0 %v937
        %2348 = vmatpush1.bf16.msra.mxu0 %v936
        %2349 = vmatprep.subr.bf16.mxu0 %v941
        %2350 = vmatpush1.bf16.msra.mxu0 %v940
        %2351 = vmatprep.subr.bf16.mxu0 %v945
        %2352 = vmatpush1.bf16.msra.mxu0 %v944
        %2353 = vmatprep.subr.bf16.mxu0 0
        %2354 = vmatpush1.bf16.msra.mxu0 0
        %2355 = vmatprep.subr.bf16.mxu0 0
        %2356 = vmatpush1.bf16.msra.mxu0 0
        %2357 = vmatprep.subr.bf16.mxu0 0
        %2358 = vmatpush1.bf16.msra.mxu0 0
        %2359 = vmatprep.subr.bf16.mxu0 0
        %2360 = vmatpush1.bf16.msra.mxu0 0
        %2361 = vmatprep.subr.bf16.mxu0 0
        %2362 = vmatpush1.bf16.msra.mxu0 0
        %2363 = vmatprep.subr.bf16.mxu0 0
        %2364 = vmatpush1.bf16.msra.mxu0 0
        %2365 = vmatprep.subr.bf16.mxu0 0
        %2366 = vmatpush1.bf16.msra.mxu0 0
        %2367 = vmatprep.subr.bf16.mxu0 0
        %2368 = vmatpush1.bf16.msra.mxu0 0
        %2369 = vmatprep.mubr.bf16.mxu0 0
        %2370 = vmatmul.mubr.bf16.gmra.mrb[0].mxu0 %v2294
        %v2371 = vpop.f32.mrb[0].mxu0
        %v2372 = vadd.f32 0.0, %v2371
        %v2373 = vpop.f32.mrb[0].mxu0
        %v2374 = vadd.f32 0.0, %v2373
        %v2375 = vpop.f32.mrb[0].mxu0
        %v2376 = vpop.f32.mrb[0].mxu0
        %2377 = vdwg.mxu0
        %v2382 = vcombine.low %v2331, %v2333
        %v2383 = vcombine.low %v2372, %v2374
        %v2385 = vunpack.c.l.s4 1966171168
        %v2386 = vunpack.c.0.s8 %v2385
        %v2387 = vlaneseq
        %v2388 = vshrl.u32 %v2387, 7
        %v2389 = vsub.s32 %v2386, %v2388
        %v2390 = vrot.slane %v2382, %v2389
        %v2392 = vunpack.c.l.s4 1966171168
        %v2393 = vunpack.c.0.s8 %v2392
        %v2394 = vlaneseq
        %v2395 = vshrl.u32 %v2394, 7
        %v2396 = vsub.s32 %v2393, %v2395
        %v2397 = vrot.slane %v2383, %v2396
        %v2398 = vcombine.low %v2390, %v2397
        %v2399 = vcombine.high %v2390, %v2397
        %v2401 = vunpack.c.l.s4 1966171168
        %v2402 = vunpack.c.0.s8 %v2401
        %v2403 = vlaneseq
        %v2404 = vshrl.u32 %v2403, 7
        %v2405 = vsub.s32 %v2402, %v2404
        %v2406 = vrot.slane %v2398, %v2405
        %v2408 = vunpack.c.l.s4 1966171168
        %v2409 = vunpack.c.0.s8 %v2408
        %v2410 = vlaneseq
        %v2411 = vshrl.u32 %v2410, 7
        %v2412 = vsub.s32 %v2409, %v2411
        %v2413 = vrot.slane %v2399, %v2412
        %v2416 = vadd.f32 %v2283, %v2406
        %v2417 = vadd.f32 %v2285, %v2413
        %v2418 = vxor.u32 %v2416, 2147483648
        %v2419 = vxor.u32 %v2417, 2147483648
        %v2420 = vmul.f32 %v2418, 1.442695
        %v2421 = vpow.pop %v2420
        %v2422 = vmul.f32 %v2419, 1.442695
        %v2423 = vpow.pop %v2422
        %v2424 = vadd.f32 %v2421, 1.0
        %v2425 = vadd.f32 %v2423, 1.0
        %v2426 = vrcp.pop %v2424
        %v2427 = vmul.f32 1.0, %v2426
        %v2428 = vrcp.pop %v2425
        %v2429 = vmul.f32 1.0, %v2428
        %v2432 = vrot.slane %v2416, 1
        %v2433 = vrot.slane %v2417, 1
        %v2436 = vxor.u32 %v2432, 2147483648
        %v2437 = vxor.u32 %v2433, 2147483648
        %v2438 = vmul.f32 %v2436, 1.442695
        %v2439 = vpow.pop %v2438
        %v2440 = vmul.f32 %v2437, 1.442695
        %v2441 = vpow.pop %v2440
        %v2442 = vadd.f32 %v2439, 1.0
        %v2443 = vadd.f32 %v2441, 1.0
        %v2444 = vrcp.pop %v2442
        %v2445 = vmul.f32 1.0, %v2444
        %v2446 = vrcp.pop %v2443
        %v2447 = vmul.f32 1.0, %v2446
        %v2448 = vrot.slane %v2416, 2
        %v2449 = vrot.slane %v2417, 2
        %v2452 = vtanh.pop %v2448
        %v2453 = vtanh.pop %v2449
        %v2454 = vrot.slane %v2416, 3
        %v2455 = vrot.slane %v2417, 3
        %v2458 = vxor.u32 %v2454, 2147483648
        %v2459 = vxor.u32 %v2455, 2147483648
        %v2460 = vmul.f32 %v2458, 1.442695
        %v2461 = vpow.pop %v2460
        %v2462 = vmul.f32 %v2459, 1.442695
        %v2463 = vpow.pop %v2462
        %v2464 = vadd.f32 %v2461, 1.0
        %v2465 = vadd.f32 %v2463, 1.0
        %v2466 = vrcp.pop %v2464
        %v2467 = vmul.f32 1.0, %v2466
        %v2468 = vrcp.pop %v2465
        %v2469 = vmul.f32 1.0, %v2468
        %v2470 = vmul.f32 %v2445, %v2150
        %v2471 = vmul.f32 %v2447, %v2151
        %v2472 = vmul.f32 %v2427, %v2452
        %v2473 = vmul.f32 %v2429, %v2453
        %v2474 = vadd.f32 %v2470, %v2472
        %v2475 = vadd.f32 %v2471, %v2473
        %v2476 = vtanh.pop %v2474
        %v2477 = vtanh.pop %v2475
        %v2478 = vmul.f32 %v2467, %v2476
        %v2479 = vmul.f32 %v2469, %v2477
        %v2482 = vcombine.low %v2478, %v2479
        %v2484 = vunpack.c.l.s4 1966171168
        %v2485 = vunpack.c.0.s8 %v2484
        %v2486 = vlaneseq
        %v2487 = vshrl.u32 %v2486, 7
        %v2488 = vsub.s32 %v2485, %v2487
        %v2489 = vrot.slane %v2482, %v2488
        %v2491 = vunpack.c.l.s4 1966171168
        %v2492 = vunpack.c.0.s8 %v2491
        %v2493 = vlaneseq
        %v2494 = vshrl.u32 %v2493, 7
        %v2495 = vsub.s32 %v2492, %v2494
        %v2496 = vrot.slane %v2489, %v2495
        %v2498 = vpack.c.bf16 %v2496, %v2496
        %v2499 = vpack.c.bf16 %v2281, %v2281
        %2500 = vmatprep.subr.bf16.mxu0 %v1400
        %2501 = vmatpush1.bf16.msra.mxu0 %v1399
        %2502 = vmatprep.subr.bf16.mxu0 %v1404
        %2503 = vmatpush1.bf16.msra.mxu0 %v1403
        %2504 = vmatprep.subr.bf16.mxu0 %v1408
        %2505 = vmatpush1.bf16.msra.mxu0 %v1407
        %2506 = vmatprep.subr.bf16.mxu0 %v1412
        %2507 = vmatpush1.bf16.msra.mxu0 %v1411
        %2508 = vmatprep.subr.bf16.mxu0 %v1416
        %2509 = vmatpush1.bf16.msra.mxu0 %v1415
        %2510 = vmatprep.subr.bf16.mxu0 %v1420
        %2511 = vmatpush1.bf16.msra.mxu0 %v1419
        %2512 = vmatprep.subr.bf16.mxu0 %v1424
        %2513 = vmatpush1.bf16.msra.mxu0 %v1423
        %2514 = vmatprep.subr.bf16.mxu0 %v1428
        %2515 = vmatpush1.bf16.msra.mxu0 %v1427
        %2516 = vmatprep.subr.bf16.mxu0 %v1432
        %2517 = vmatpush1.bf16.msra.mxu0 %v1431
        %2518 = vmatprep.subr.bf16.mxu0 %v1436
        %2519 = vmatpush1.bf16.msra.mxu0 %v1435
        %2520 = vmatprep.subr.bf16.mxu0 %v1440
        %2521 = vmatpush1.bf16.msra.mxu0 %v1439
        %2522 = vmatprep.subr.bf16.mxu0 %v1444
        %2523 = vmatpush1.bf16.msra.mxu0 %v1443
        %2524 = vmatprep.subr.bf16.mxu0 %v1448
        %2525 = vmatpush1.bf16.msra.mxu0 %v1447
        %2526 = vmatprep.subr.bf16.mxu0 %v1452
        %2527 = vmatpush1.bf16.msra.mxu0 %v1451
        %2528 = vmatprep.subr.bf16.mxu0 %v1456
        %2529 = vmatpush1.bf16.msra.mxu0 %v1455
        %2530 = vmatprep.subr.bf16.mxu0 %v1460
        %2531 = vmatpush1.bf16.msra.mxu0 %v1459
        %2532 = vmatprep.mubr.bf16.mxu0 %v2499
        %2533 = vmatmul.mubr.bf16.gmra.mrb[0].mxu0 %v2498
        %v2534 = vpop.f32.mrb[0].mxu0
        %v2535 = vadd.f32 %v793, %v2534
        %v2536 = vpop.f32.mrb[0].mxu0
        %v2537 = vadd.f32 %v797, %v2536
        %v2538 = vpop.f32.mrb[0].mxu0
        %v2539 = vpop.f32.mrb[0].mxu0
        %2540 = vdwg.mxu0
        %2541 = vmatprep.subr.bf16.mxu0 %v1402
        %2542 = vmatpush1.bf16.msra.mxu0 %v1401
        %2543 = vmatprep.subr.bf16.mxu0 %v1406
        %2544 = vmatpush1.bf16.msra.mxu0 %v1405
        %2545 = vmatprep.subr.bf16.mxu0 %v1410
        %2546 = vmatpush1.bf16.msra.mxu0 %v1409
        %2547 = vmatprep.subr.bf16.mxu0 %v1414
        %2548 = vmatpush1.bf16.msra.mxu0 %v1413
        %2549 = vmatprep.subr.bf16.mxu0 %v1418
        %2550 = vmatpush1.bf16.msra.mxu0 %v1417
        %2551 = vmatprep.subr.bf16.mxu0 %v1422
        %2552 = vmatpush1.bf16.msra.mxu0 %v1421
        %2553 = vmatprep.subr.bf16.mxu0 %v1426
        %2554 = vmatpush1.bf16.msra.mxu0 %v1425
        %2555 = vmatprep.subr.bf16.mxu0 %v1430
        %2556 = vmatpush1.bf16.msra.mxu0 %v1429
        %2557 = vmatprep.subr.bf16.mxu0 %v1434
        %2558 = vmatpush1.bf16.msra.mxu0 %v1433
        %2559 = vmatprep.subr.bf16.mxu0 %v1438
        %2560 = vmatpush1.bf16.msra.mxu0 %v1437
        %2561 = vmatprep.subr.bf16.mxu0 %v1442
        %2562 = vmatpush1.bf16.msra.mxu0 %v1441
        %2563 = vmatprep.subr.bf16.mxu0 %v1446
        %2564 = vmatpush1.bf16.msra.mxu0 %v1445
        %2565 = vmatprep.subr.bf16.mxu0 %v1450
        %2566 = vmatpush1.bf16.msra.mxu0 %v1449
        %2567 = vmatprep.subr.bf16.mxu0 %v1454
        %2568 = vmatpush1.bf16.msra.mxu0 %v1453
        %2569 = vmatprep.subr.bf16.mxu0 %v1458
        %2570 = vmatpush1.bf16.msra.mxu0 %v1457
        %2571 = vmatprep.subr.bf16.mxu0 %v1462
        %2572 = vmatpush1.bf16.msra.mxu0 %v1461
        %2573 = vmatprep.mubr.bf16.mxu0 %v2499
        %2574 = vmatmul.mubr.bf16.gmra.mrb[0].mxu0 %v2498
        %v2575 = vpop.f32.mrb[0].mxu0
        %v2576 = vadd.f32 %v801, %v2575
        %v2577 = vpop.f32.mrb[0].mxu0
        %v2578 = vadd.f32 %v805, %v2577
        %v2579 = vpop.f32.mrb[0].mxu0
        %v2580 = vpop.f32.mrb[0].mxu0
        %2581 = vdwg.mxu0
        %v2582 = vxor.u32 %v2535, 2147483648
        %v2583 = vmul.f32 %v2582, 1.442695
        %v2584 = vpow.pop %v2583
        %v2585 = vadd.f32 %v2584, 1.0
        %v2586 = vrcp.pop %v2585
        %v2587 = vmul.f32 1.0, %v2586
        %v2588 = vxor.u32 %v2537, 2147483648
        %v2589 = vmul.f32 %v2588, 1.442695
        %v2590 = vpow.pop %v2589
        %v2591 = vadd.f32 %v2590, 1.0
        %v2592 = vrcp.pop %v2591
        %v2593 = vmul.f32 1.0, %v2592
        %v2594 = vtanh.pop %v2576
        %v2595 = vxor.u32 %v2578, 2147483648
        %v2596 = vmul.f32 %v2595, 1.442695
        %v2597 = vpow.pop %v2596
        %v2598 = vadd.f32 %v2597, 1.0
        %v2599 = vrcp.pop %v2598
        %v2600 = vmul.f32 1.0, %v2599
        %v2601 = vmul.f32 %v2593, %v2279
        %v2602 = vmul.f32 %v2587, %v2594
        %v2603 = vadd.f32 %v2601, %v2602
        %v2604 = vtanh.pop %v2603
        %v2605 = vmul.f32 %v2600, %v2604
        %s2606 = scalar_lea.vmem [#allocation2], 4
        %v2607 = vld [vmem:[%s2606] ss:$8 sm:$0xf]
        %s2608 = scalar_lea.vmem [#allocation2], 36
        %v2609 = vld [vmem:[%s2608] ss:$8 sm:$0xf]
        %v2610 = vpack.c.bf16 %v2478, %v2478
        %v2611 = vpack.c.bf16 %v2479, %v2479
        %v2614 = vunpack.c.l.b16 %v2610
        %v2615 = vunpack.c.l.b16 %v2611
        %v2616 = vrot.slane %v2615, 7
        %v2617 = vsel %vm1644, %v2616, %v2614
        %v2618 = vpack.c.b16 %v2617, %v2617
        %2620 = vmatprep.subr.bf16.mxu0 %v915
        %2621 = vmatpush1.bf16.msra.mxu0 %v914
        %2622 = vmatprep.subr.bf16.mxu0 %v919
        %2623 = vmatpush1.bf16.msra.mxu0 %v918
        %2624 = vmatprep.subr.bf16.mxu0 %v923
        %2625 = vmatpush1.bf16.msra.mxu0 %v922
        %2626 = vmatprep.subr.bf16.mxu0 %v927
        %2627 = vmatpush1.bf16.msra.mxu0 %v926
        %2628 = vmatprep.subr.bf16.mxu0 %v931
        %2629 = vmatpush1.bf16.msra.mxu0 %v930
        %2630 = vmatprep.subr.bf16.mxu0 %v935
        %2631 = vmatpush1.bf16.msra.mxu0 %v934
        %2632 = vmatprep.subr.bf16.mxu0 %v939
        %2633 = vmatpush1.bf16.msra.mxu0 %v938
        %2634 = vmatprep.subr.bf16.mxu0 %v943
        %2635 = vmatpush1.bf16.msra.mxu0 %v942
        %2636 = vmatprep.subr.bf16.mxu0 0
        %2637 = vmatpush1.bf16.msra.mxu0 0
        %2638 = vmatprep.subr.bf16.mxu0 0
        %2639 = vmatpush1.bf16.msra.mxu0 0
        %2640 = vmatprep.subr.bf16.mxu0 0
        %2641 = vmatpush1.bf16.msra.mxu0 0
        %2642 = vmatprep.subr.bf16.mxu0 0
        %2643 = vmatpush1.bf16.msra.mxu0 0
        %2644 = vmatprep.subr.bf16.mxu0 0
        %2645 = vmatpush1.bf16.msra.mxu0 0
        %2646 = vmatprep.subr.bf16.mxu0 0
        %2647 = vmatpush1.bf16.msra.mxu0 0
        %2648 = vmatprep.subr.bf16.mxu0 0
        %2649 = vmatpush1.bf16.msra.mxu0 0
        %2650 = vmatprep.subr.bf16.mxu0 0
        %2651 = vmatpush1.bf16.msra.mxu0 0
        %2652 = vmatprep.mubr.bf16.mxu0 0
        %2653 = vmatmul.mubr.bf16.gmra.mrb[0].mxu0 %v2618
        %v2654 = vpop.f32.mrb[0].mxu0
        %v2655 = vadd.f32 0.0, %v2654
        %v2656 = vpop.f32.mrb[0].mxu0
        %v2657 = vadd.f32 0.0, %v2656
        %v2658 = vpop.f32.mrb[0].mxu0
        %v2659 = vpop.f32.mrb[0].mxu0
        %2660 = vdwg.mxu0
        %2661 = vmatprep.subr.bf16.mxu0 %v917
        %2662 = vmatpush1.bf16.msra.mxu0 %v916
        %2663 = vmatprep.subr.bf16.mxu0 %v921
        %2664 = vmatpush1.bf16.msra.mxu0 %v920
        %2665 = vmatprep.subr.bf16.mxu0 %v925
        %2666 = vmatpush1.bf16.msra.mxu0 %v924
        %2667 = vmatprep.subr.bf16.mxu0 %v929
        %2668 = vmatpush1.bf16.msra.mxu0 %v928
        %2669 = vmatprep.subr.bf16.mxu0 %v933
        %2670 = vmatpush1.bf16.msra.mxu0 %v932
        %2671 = vmatprep.subr.bf16.mxu0 %v937
        %2672 = vmatpush1.bf16.msra.mxu0 %v936
        %2673 = vmatprep.subr.bf16.mxu0 %v941
        %2674 = vmatpush1.bf16.msra.mxu0 %v940
        %2675 = vmatprep.subr.bf16.mxu0 %v945
        %2676 = vmatpush1.bf16.msra.mxu0 %v944
        %2677 = vmatprep.subr.bf16.mxu0 0
        %2678 = vmatpush1.bf16.msra.mxu0 0
        %2679 = vmatprep.subr.bf16.mxu0 0
        %2680 = vmatpush1.bf16.msra.mxu0 0
        %2681 = vmatprep.subr.bf16.mxu0 0
        %2682 = vmatpush1.bf16.msra.mxu0 0
        %2683 = vmatprep.subr.bf16.mxu0 0
        %2684 = vmatpush1.bf16.msra.mxu0 0
        %2685 = vmatprep.subr.bf16.mxu0 0
        %2686 = vmatpush1.bf16.msra.mxu0 0
        %2687 = vmatprep.subr.bf16.mxu0 0
        %2688 = vmatpush1.bf16.msra.mxu0 0
        %2689 = vmatprep.subr.bf16.mxu0 0
        %2690 = vmatpush1.bf16.msra.mxu0 0
        %2691 = vmatprep.subr.bf16.mxu0 0
        %2692 = vmatpush1.bf16.msra.mxu0 0
        %2693 = vmatprep.mubr.bf16.mxu0 0
        %2694 = vmatmul.mubr.bf16.gmra.mrb[0].mxu0 %v2618
        %v2695 = vpop.f32.mrb[0].mxu0
        %v2696 = vadd.f32 0.0, %v2695
        %v2697 = vpop.f32.mrb[0].mxu0
        %v2698 = vadd.f32 0.0, %v2697
        %v2699 = vpop.f32.mrb[0].mxu0
        %v2700 = vpop.f32.mrb[0].mxu0
        %2701 = vdwg.mxu0
        %v2706 = vcombine.low %v2655, %v2657
        %v2707 = vcombine.low %v2696, %v2698
        %v2709 = vunpack.c.l.s4 1966171168
        %v2710 = vunpack.c.0.s8 %v2709
        %v2711 = vlaneseq
        %v2712 = vshrl.u32 %v2711, 7
        %v2713 = vsub.s32 %v2710, %v2712
        %v2714 = vrot.slane %v2706, %v2713
        %v2716 = vunpack.c.l.s4 1966171168
        %v2717 = vunpack.c.0.s8 %v2716
        %v2718 = vlaneseq
        %v2719 = vshrl.u32 %v2718, 7
        %v2720 = vsub.s32 %v2717, %v2719
        %v2721 = vrot.slane %v2707, %v2720
        %v2722 = vcombine.low %v2714, %v2721
        %v2723 = vcombine.high %v2714, %v2721
        %v2725 = vunpack.c.l.s4 1966171168
        %v2726 = vunpack.c.0.s8 %v2725
        %v2727 = vlaneseq
        %v2728 = vshrl.u32 %v2727, 7
        %v2729 = vsub.s32 %v2726, %v2728
        %v2730 = vrot.slane %v2722, %v2729
        %v2732 = vunpack.c.l.s4 1966171168
        %v2733 = vunpack.c.0.s8 %v2732
        %v2734 = vlaneseq
        %v2735 = vshrl.u32 %v2734, 7
        %v2736 = vsub.s32 %v2733, %v2735
        %v2737 = vrot.slane %v2723, %v2736
        %v2740 = vadd.f32 %v2607, %v2730
        %v2741 = vadd.f32 %v2609, %v2737
        %v2742 = vxor.u32 %v2740, 2147483648
        %v2743 = vxor.u32 %v2741, 2147483648
        %v2744 = vmul.f32 %v2742, 1.442695
        %v2745 = vpow.pop %v2744
        %v2746 = vmul.f32 %v2743, 1.442695
        %v2747 = vpow.pop %v2746
        %v2748 = vadd.f32 %v2745, 1.0
        %v2749 = vadd.f32 %v2747, 1.0
        %v2750 = vrcp.pop %v2748
        %v2751 = vmul.f32 1.0, %v2750
        %v2752 = vrcp.pop %v2749
        %v2753 = vmul.f32 1.0, %v2752
        %v2756 = vrot.slane %v2740, 1
        %v2757 = vrot.slane %v2741, 1
        %v2760 = vxor.u32 %v2756, 2147483648
        %v2761 = vxor.u32 %v2757, 2147483648
        %v2762 = vmul.f32 %v2760, 1.442695
        %v2763 = vpow.pop %v2762
        %v2764 = vmul.f32 %v2761, 1.442695
        %v2765 = vpow.pop %v2764
        %v2766 = vadd.f32 %v2763, 1.0
        %v2767 = vadd.f32 %v2765, 1.0
        %v2768 = vrcp.pop %v2766
        %v2769 = vmul.f32 1.0, %v2768
        %v2770 = vrcp.pop %v2767
        %v2771 = vmul.f32 1.0, %v2770
        %v2772 = vrot.slane %v2740, 2
        %v2773 = vrot.slane %v2741, 2
        %v2776 = vtanh.pop %v2772
        %v2777 = vtanh.pop %v2773
        %v2778 = vrot.slane %v2740, 3
        %v2779 = vrot.slane %v2741, 3
        %v2782 = vxor.u32 %v2778, 2147483648
        %v2783 = vxor.u32 %v2779, 2147483648
        %v2784 = vmul.f32 %v2782, 1.442695
        %v2785 = vpow.pop %v2784
        %v2786 = vmul.f32 %v2783, 1.442695
        %v2787 = vpow.pop %v2786
        %v2788 = vadd.f32 %v2785, 1.0
        %v2789 = vadd.f32 %v2787, 1.0
        %v2790 = vrcp.pop %v2788
        %v2791 = vmul.f32 1.0, %v2790
        %v2792 = vrcp.pop %v2789
        %v2793 = vmul.f32 1.0, %v2792
        %v2794 = vmul.f32 %v2769, %v2474
        %v2795 = vmul.f32 %v2771, %v2475
        %v2796 = vmul.f32 %v2751, %v2776
        %v2797 = vmul.f32 %v2753, %v2777
        %v2798 = vadd.f32 %v2794, %v2796
        %v2799 = vadd.f32 %v2795, %v2797
        %v2800 = vtanh.pop %v2798
        %v2801 = vtanh.pop %v2799
        %v2802 = vmul.f32 %v2791, %v2800
        %v2803 = vmul.f32 %v2793, %v2801
        %v2806 = vcombine.low %v2802, %v2803
        %v2808 = vunpack.c.l.s4 1966171168
        %v2809 = vunpack.c.0.s8 %v2808
        %v2810 = vlaneseq
        %v2811 = vshrl.u32 %v2810, 7
        %v2812 = vsub.s32 %v2809, %v2811
        %v2813 = vrot.slane %v2806, %v2812
        %v2815 = vunpack.c.l.s4 1966171168
        %v2816 = vunpack.c.0.s8 %v2815
        %v2817 = vlaneseq
        %v2818 = vshrl.u32 %v2817, 7
        %v2819 = vsub.s32 %v2816, %v2818
        %v2820 = vrot.slane %v2813, %v2819
        %v2822 = vpack.c.bf16 %v2820, %v2820
        %v2823 = vpack.c.bf16 %v2605, %v2605
        %2824 = vmatprep.subr.bf16.mxu0 %v1400
        %2825 = vmatpush1.bf16.msra.mxu0 %v1399
        %2826 = vmatprep.subr.bf16.mxu0 %v1404
        %2827 = vmatpush1.bf16.msra.mxu0 %v1403
        %2828 = vmatprep.subr.bf16.mxu0 %v1408
        %2829 = vmatpush1.bf16.msra.mxu0 %v1407
        %2830 = vmatprep.subr.bf16.mxu0 %v1412
        %2831 = vmatpush1.bf16.msra.mxu0 %v1411
        %2832 = vmatprep.subr.bf16.mxu0 %v1416
        %2833 = vmatpush1.bf16.msra.mxu0 %v1415
        %2834 = vmatprep.subr.bf16.mxu0 %v1420
        %2835 = vmatpush1.bf16.msra.mxu0 %v1419
        %2836 = vmatprep.subr.bf16.mxu0 %v1424
        %2837 = vmatpush1.bf16.msra.mxu0 %v1423
        %2838 = vmatprep.subr.bf16.mxu0 %v1428
        %2839 = vmatpush1.bf16.msra.mxu0 %v1427
        %2840 = vmatprep.subr.bf16.mxu0 %v1432
        %2841 = vmatpush1.bf16.msra.mxu0 %v1431
        %2842 = vmatprep.subr.bf16.mxu0 %v1436
        %2843 = vmatpush1.bf16.msra.mxu0 %v1435
        %2844 = vmatprep.subr.bf16.mxu0 %v1440
        %2845 = vmatpush1.bf16.msra.mxu0 %v1439
        %2846 = vmatprep.subr.bf16.mxu0 %v1444
        %2847 = vmatpush1.bf16.msra.mxu0 %v1443
        %2848 = vmatprep.subr.bf16.mxu0 %v1448
        %2849 = vmatpush1.bf16.msra.mxu0 %v1447
        %2850 = vmatprep.subr.bf16.mxu0 %v1452
        %2851 = vmatpush1.bf16.msra.mxu0 %v1451
        %2852 = vmatprep.subr.bf16.mxu0 %v1456
        %2853 = vmatpush1.bf16.msra.mxu0 %v1455
        %2854 = vmatprep.subr.bf16.mxu0 %v1460
        %2855 = vmatpush1.bf16.msra.mxu0 %v1459
        %2856 = vmatprep.mubr.bf16.mxu0 %v2823
        %2857 = vmatmul.mubr.bf16.gmra.mrb[0].mxu0 %v2822
        %v2858 = vpop.f32.mrb[0].mxu0
        %v2859 = vadd.f32 %v793, %v2858
        %v2860 = vpop.f32.mrb[0].mxu0
        %v2861 = vadd.f32 %v797, %v2860
        %v2862 = vpop.f32.mrb[0].mxu0
        %v2863 = vpop.f32.mrb[0].mxu0
        %2864 = vdwg.mxu0
        %2865 = vmatprep.subr.bf16.mxu0 %v1402
        %2866 = vmatpush1.bf16.msra.mxu0 %v1401
        %2867 = vmatprep.subr.bf16.mxu0 %v1406
        %2868 = vmatpush1.bf16.msra.mxu0 %v1405
        %2869 = vmatprep.subr.bf16.mxu0 %v1410
        %2870 = vmatpush1.bf16.msra.mxu0 %v1409
        %2871 = vmatprep.subr.bf16.mxu0 %v1414
        %2872 = vmatpush1.bf16.msra.mxu0 %v1413
        %2873 = vmatprep.subr.bf16.mxu0 %v1418
        %2874 = vmatpush1.bf16.msra.mxu0 %v1417
        %2875 = vmatprep.subr.bf16.mxu0 %v1422
        %2876 = vmatpush1.bf16.msra.mxu0 %v1421
        %2877 = vmatprep.subr.bf16.mxu0 %v1426
        %2878 = vmatpush1.bf16.msra.mxu0 %v1425
        %2879 = vmatprep.subr.bf16.mxu0 %v1430
        %2880 = vmatpush1.bf16.msra.mxu0 %v1429
        %2881 = vmatprep.subr.bf16.mxu0 %v1434
        %2882 = vmatpush1.bf16.msra.mxu0 %v1433
        %2883 = vmatprep.subr.bf16.mxu0 %v1438
        %2884 = vmatpush1.bf16.msra.mxu0 %v1437
        %2885 = vmatprep.subr.bf16.mxu0 %v1442
        %2886 = vmatpush1.bf16.msra.mxu0 %v1441
        %2887 = vmatprep.subr.bf16.mxu0 %v1446
        %2888 = vmatpush1.bf16.msra.mxu0 %v1445
        %2889 = vmatprep.subr.bf16.mxu0 %v1450
        %2890 = vmatpush1.bf16.msra.mxu0 %v1449
        %2891 = vmatprep.subr.bf16.mxu0 %v1454
        %2892 = vmatpush1.bf16.msra.mxu0 %v1453
        %2893 = vmatprep.subr.bf16.mxu0 %v1458
        %2894 = vmatpush1.bf16.msra.mxu0 %v1457
        %2895 = vmatprep.subr.bf16.mxu0 %v1462
        %2896 = vmatpush1.bf16.msra.mxu0 %v1461
        %2897 = vmatprep.mubr.bf16.mxu0 %v2823
        %2898 = vmatmul.mubr.bf16.gmra.mrb[0].mxu0 %v2822
        %v2899 = vpop.f32.mrb[0].mxu0
        %v2900 = vadd.f32 %v801, %v2899
        %v2901 = vpop.f32.mrb[0].mxu0
        %v2902 = vadd.f32 %v805, %v2901
        %v2903 = vpop.f32.mrb[0].mxu0
        %v2904 = vpop.f32.mrb[0].mxu0
        %2905 = vdwg.mxu0
        %v2906 = vxor.u32 %v2859, 2147483648
        %v2907 = vmul.f32 %v2906, 1.442695
        %v2908 = vpow.pop %v2907
        %v2909 = vadd.f32 %v2908, 1.0
        %v2910 = vrcp.pop %v2909
        %v2911 = vmul.f32 1.0, %v2910
        %v2912 = vxor.u32 %v2861, 2147483648
        %v2913 = vmul.f32 %v2912, 1.442695
        %v2914 = vpow.pop %v2913
        %v2915 = vadd.f32 %v2914, 1.0
        %v2916 = vrcp.pop %v2915
        %v2917 = vmul.f32 1.0, %v2916
        %v2918 = vtanh.pop %v2900
        %v2919 = vxor.u32 %v2902, 2147483648
        %v2920 = vmul.f32 %v2919, 1.442695
        %v2921 = vpow.pop %v2920
        %v2922 = vadd.f32 %v2921, 1.0
        %v2923 = vrcp.pop %v2922
        %v2924 = vmul.f32 1.0, %v2923
        %v2925 = vmul.f32 %v2917, %v2603
        %v2926 = vmul.f32 %v2911, %v2918
        %v2927 = vadd.f32 %v2925, %v2926
        %v2928 = vtanh.pop %v2927
        %v2929 = vmul.f32 %v2924, %v2928
        %s2930 = scalar_lea.vmem [#allocation2], 5
        %v2931 = vld [vmem:[%s2930] ss:$8 sm:$0xf]
        %s2932 = scalar_lea.vmem [#allocation2], 37
        %v2933 = vld [vmem:[%s2932] ss:$8 sm:$0xf]
        %v2934 = vpack.c.bf16 %v2802, %v2802
        %v2935 = vpack.c.bf16 %v2803, %v2803
        %v2938 = vunpack.c.l.b16 %v2934
        %v2939 = vunpack.c.l.b16 %v2935
        %v2940 = vrot.slane %v2939, 7
        %v2941 = vsel %vm1644, %v2940, %v2938
        %v2942 = vpack.c.b16 %v2941, %v2941
        %2944 = vmatprep.subr.bf16.mxu0 %v915
        %2945 = vmatpush1.bf16.msra.mxu0 %v914
        %2946 = vmatprep.subr.bf16.mxu0 %v919
        %2947 = vmatpush1.bf16.msra.mxu0 %v918
        %2948 = vmatprep.subr.bf16.mxu0 %v923
        %2949 = vmatpush1.bf16.msra.mxu0 %v922
        %2950 = vmatprep.subr.bf16.mxu0 %v927
        %2951 = vmatpush1.bf16.msra.mxu0 %v926
        %2952 = vmatprep.subr.bf16.mxu0 %v931
        %2953 = vmatpush1.bf16.msra.mxu0 %v930
        %2954 = vmatprep.subr.bf16.mxu0 %v935
        %2955 = vmatpush1.bf16.msra.mxu0 %v934
        %2956 = vmatprep.subr.bf16.mxu0 %v939
        %2957 = vmatpush1.bf16.msra.mxu0 %v938
        %2958 = vmatprep.subr.bf16.mxu0 %v943
        %2959 = vmatpush1.bf16.msra.mxu0 %v942
        %2960 = vmatprep.subr.bf16.mxu0 0
        %2961 = vmatpush1.bf16.msra.mxu0 0
        %2962 = vmatprep.subr.bf16.mxu0 0
        %2963 = vmatpush1.bf16.msra.mxu0 0
        %2964 = vmatprep.subr.bf16.mxu0 0
        %2965 = vmatpush1.bf16.msra.mxu0 0
        %2966 = vmatprep.subr.bf16.mxu0 0
        %2967 = vmatpush1.bf16.msra.mxu0 0
        %2968 = vmatprep.subr.bf16.mxu0 0
        %2969 = vmatpush1.bf16.msra.mxu0 0
        %2970 = vmatprep.subr.bf16.mxu0 0
        %2971 = vmatpush1.bf16.msra.mxu0 0
        %2972 = vmatprep.subr.bf16.mxu0 0
        %2973 = vmatpush1.bf16.msra.mxu0 0
        %2974 = vmatprep.subr.bf16.mxu0 0
        %2975 = vmatpush1.bf16.msra.mxu0 0
        %2976 = vmatprep.mubr.bf16.mxu0 0
        %2977 = vmatmul.mubr.bf16.gmra.mrb[0].mxu0 %v2942
        %v2978 = vpop.f32.mrb[0].mxu0
        %v2979 = vadd.f32 0.0, %v2978
        %v2980 = vpop.f32.mrb[0].mxu0
        %v2981 = vadd.f32 0.0, %v2980
        %v2982 = vpop.f32.mrb[0].mxu0
        %v2983 = vpop.f32.mrb[0].mxu0
        %2984 = vdwg.mxu0
        %2985 = vmatprep.subr.bf16.mxu0 %v917
        %2986 = vmatpush1.bf16.msra.mxu0 %v916
        %2987 = vmatprep.subr.bf16.mxu0 %v921
        %2988 = vmatpush1.bf16.msra.mxu0 %v920
        %2989 = vmatprep.subr.bf16.mxu0 %v925
        %2990 = vmatpush1.bf16.msra.mxu0 %v924
        %2991 = vmatprep.subr.bf16.mxu0 %v929
        %2992 = vmatpush1.bf16.msra.mxu0 %v928
        %2993 = vmatprep.subr.bf16.mxu0 %v933
        %2994 = vmatpush1.bf16.msra.mxu0 %v932
        %2995 = vmatprep.subr.bf16.mxu0 %v937
        %2996 = vmatpush1.bf16.msra.mxu0 %v936
        %2997 = vmatprep.subr.bf16.mxu0 %v941
        %2998 = vmatpush1.bf16.msra.mxu0 %v940
        %2999 = vmatprep.subr.bf16.mxu0 %v945
        %3000 = vmatpush1.bf16.msra.mxu0 %v944
        %3001 = vmatprep.subr.bf16.mxu0 0
        %3002 = vmatpush1.bf16.msra.mxu0 0
        %3003 = vmatprep.subr.bf16.mxu0 0
        %3004 = vmatpush1.bf16.msra.mxu0 0
        %3005 = vmatprep.subr.bf16.mxu0 0
        %3006 = vmatpush1.bf16.msra.mxu0 0
        %3007 = vmatprep.subr.bf16.mxu0 0
        %3008 = vmatpush1.bf16.msra.mxu0 0
        %3009 = vmatprep.subr.bf16.mxu0 0
        %3010 = vmatpush1.bf16.msra.mxu0 0
        %3011 = vmatprep.subr.bf16.mxu0 0
        %3012 = vmatpush1.bf16.msra.mxu0 0
        %3013 = vmatprep.subr.bf16.mxu0 0
        %3014 = vmatpush1.bf16.msra.mxu0 0
        %3015 = vmatprep.subr.bf16.mxu0 0
        %3016 = vmatpush1.bf16.msra.mxu0 0
        %3017 = vmatprep.mubr.bf16.mxu0 0
        %3018 = vmatmul.mubr.bf16.gmra.mrb[0].mxu0 %v2942
        %v3019 = vpop.f32.mrb[0].mxu0
        %v3020 = vadd.f32 0.0, %v3019
        %v3021 = vpop.f32.mrb[0].mxu0
        %v3022 = vadd.f32 0.0, %v3021
        %v3023 = vpop.f32.mrb[0].mxu0
        %v3024 = vpop.f32.mrb[0].mxu0
        %3025 = vdwg.mxu0
        %v3030 = vcombine.low %v2979, %v2981
        %v3031 = vcombine.low %v3020, %v3022
        %v3033 = vunpack.c.l.s4 1966171168
        %v3034 = vunpack.c.0.s8 %v3033
        %v3035 = vlaneseq
        %v3036 = vshrl.u32 %v3035, 7
        %v3037 = vsub.s32 %v3034, %v3036
        %v3038 = vrot.slane %v3030, %v3037
        %v3040 = vunpack.c.l.s4 1966171168
        %v3041 = vunpack.c.0.s8 %v3040
        %v3042 = vlaneseq
        %v3043 = vshrl.u32 %v3042, 7
        %v3044 = vsub.s32 %v3041, %v3043
        %v3045 = vrot.slane %v3031, %v3044
        %v3046 = vcombine.low %v3038, %v3045
        %v3047 = vcombine.high %v3038, %v3045
        %v3049 = vunpack.c.l.s4 1966171168
        %v3050 = vunpack.c.0.s8 %v3049
        %v3051 = vlaneseq
        %v3052 = vshrl.u32 %v3051, 7
        %v3053 = vsub.s32 %v3050, %v3052
        %v3054 = vrot.slane %v3046, %v3053
        %v3056 = vunpack.c.l.s4 1966171168
        %v3057 = vunpack.c.0.s8 %v3056
        %v3058 = vlaneseq
        %v3059 = vshrl.u32 %v3058, 7
        %v3060 = vsub.s32 %v3057, %v3059
        %v3061 = vrot.slane %v3047, %v3060
        %v3064 = vadd.f32 %v2931, %v3054
        %v3065 = vadd.f32 %v2933, %v3061
        %v3066 = vxor.u32 %v3064, 2147483648
        %v3067 = vxor.u32 %v3065, 2147483648
        %v3068 = vmul.f32 %v3066, 1.442695
        %v3069 = vpow.pop %v3068
        %v3070 = vmul.f32 %v3067, 1.442695
        %v3071 = vpow.pop %v3070
        %v3072 = vadd.f32 %v3069, 1.0
        %v3073 = vadd.f32 %v3071, 1.0
        %v3074 = vrcp.pop %v3072
        %v3075 = vmul.f32 1.0, %v3074
        %v3076 = vrcp.pop %v3073
        %v3077 = vmul.f32 1.0, %v3076
        %v3080 = vrot.slane %v3064, 1
        %v3081 = vrot.slane %v3065, 1
        %v3084 = vxor.u32 %v3080, 2147483648
        %v3085 = vxor.u32 %v3081, 2147483648
        %v3086 = vmul.f32 %v3084, 1.442695
        %v3087 = vpow.pop %v3086
        %v3088 = vmul.f32 %v3085, 1.442695
        %v3089 = vpow.pop %v3088
        %v3090 = vadd.f32 %v3087, 1.0
        %v3091 = vadd.f32 %v3089, 1.0
        %v3092 = vrcp.pop %v3090
        %v3093 = vmul.f32 1.0, %v3092
        %v3094 = vrcp.pop %v3091
        %v3095 = vmul.f32 1.0, %v3094
        %v3096 = vrot.slane %v3064, 2
        %v3097 = vrot.slane %v3065, 2
        %v3100 = vtanh.pop %v3096
        %v3101 = vtanh.pop %v3097
        %v3102 = vrot.slane %v3064, 3
        %v3103 = vrot.slane %v3065, 3
        %v3106 = vxor.u32 %v3102, 2147483648
        %v3107 = vxor.u32 %v3103, 2147483648
        %v3108 = vmul.f32 %v3106, 1.442695
        %v3109 = vpow.pop %v3108
        %v3110 = vmul.f32 %v3107, 1.442695
        %v3111 = vpow.pop %v3110
        %v3112 = vadd.f32 %v3109, 1.0
        %v3113 = vadd.f32 %v3111, 1.0
        %v3114 = vrcp.pop %v3112
        %v3115 = vmul.f32 1.0, %v3114
        %v3116 = vrcp.pop %v3113
        %v3117 = vmul.f32 1.0, %v3116
        %v3118 = vmul.f32 %v3093, %v2798
        %v3119 = vmul.f32 %v3095, %v2799
        %v3120 = vmul.f32 %v3075, %v3100
        %v3121 = vmul.f32 %v3077, %v3101
        %v3122 = vadd.f32 %v3118, %v3120
        %v3123 = vadd.f32 %v3119, %v3121
        %v3124 = vtanh.pop %v3122
        %v3125 = vtanh.pop %v3123
        %v3126 = vmul.f32 %v3115, %v3124
        %v3127 = vmul.f32 %v3117, %v3125
        %v3130 = vcombine.low %v3126, %v3127
        %v3132 = vunpack.c.l.s4 1966171168
        %v3133 = vunpack.c.0.s8 %v3132
        %v3134 = vlaneseq
        %v3135 = vshrl.u32 %v3134, 7
        %v3136 = vsub.s32 %v3133, %v3135
        %v3137 = vrot.slane %v3130, %v3136
        %v3139 = vunpack.c.l.s4 1966171168
        %v3140 = vunpack.c.0.s8 %v3139
        %v3141 = vlaneseq
        %v3142 = vshrl.u32 %v3141, 7
        %v3143 = vsub.s32 %v3140, %v3142
        %v3144 = vrot.slane %v3137, %v3143
        %v3146 = vpack.c.bf16 %v3144, %v3144
        %v3147 = vpack.c.bf16 %v2929, %v2929
        %3148 = vmatprep.subr.bf16.mxu0 %v1400
        %3149 = vmatpush1.bf16.msra.mxu0 %v1399
        %3150 = vmatprep.subr.bf16.mxu0 %v1404
        %3151 = vmatpush1.bf16.msra.mxu0 %v1403
        %3152 = vmatprep.subr.bf16.mxu0 %v1408
        %3153 = vmatpush1.bf16.msra.mxu0 %v1407
        %3154 = vmatprep.subr.bf16.mxu0 %v1412
        %3155 = vmatpush1.bf16.msra.mxu0 %v1411
        %3156 = vmatprep.subr.bf16.mxu0 %v1416
        %3157 = vmatpush1.bf16.msra.mxu0 %v1415
        %3158 = vmatprep.subr.bf16.mxu0 %v1420
        %3159 = vmatpush1.bf16.msra.mxu0 %v1419
        %3160 = vmatprep.subr.bf16.mxu0 %v1424
        %3161 = vmatpush1.bf16.msra.mxu0 %v1423
        %3162 = vmatprep.subr.bf16.mxu0 %v1428
        %3163 = vmatpush1.bf16.msra.mxu0 %v1427
        %3164 = vmatprep.subr.bf16.mxu0 %v1432
        %3165 = vmatpush1.bf16.msra.mxu0 %v1431
        %3166 = vmatprep.subr.bf16.mxu0 %v1436
        %3167 = vmatpush1.bf16.msra.mxu0 %v1435
        %3168 = vmatprep.subr.bf16.mxu0 %v1440
        %3169 = vmatpush1.bf16.msra.mxu0 %v1439
        %3170 = vmatprep.subr.bf16.mxu0 %v1444
        %3171 = vmatpush1.bf16.msra.mxu0 %v1443
        %3172 = vmatprep.subr.bf16.mxu0 %v1448
        %3173 = vmatpush1.bf16.msra.mxu0 %v1447
        %3174 = vmatprep.subr.bf16.mxu0 %v1452
        %3175 = vmatpush1.bf16.msra.mxu0 %v1451
        %3176 = vmatprep.subr.bf16.mxu0 %v1456
        %3177 = vmatpush1.bf16.msra.mxu0 %v1455
        %3178 = vmatprep.subr.bf16.mxu0 %v1460
        %3179 = vmatpush1.bf16.msra.mxu0 %v1459
        %3180 = vmatprep.mubr.bf16.mxu0 %v3147
        %3181 = vmatmul.mubr.bf16.gmra.mrb[0].mxu0 %v3146
        %v3182 = vpop.f32.mrb[0].mxu0
        %v3183 = vadd.f32 %v793, %v3182
        %v3184 = vpop.f32.mrb[0].mxu0
        %v3185 = vadd.f32 %v797, %v3184
        %v3186 = vpop.f32.mrb[0].mxu0
        %v3187 = vpop.f32.mrb[0].mxu0
        %3188 = vdwg.mxu0
        %3189 = vmatprep.subr.bf16.mxu0 %v1402
        %3190 = vmatpush1.bf16.msra.mxu0 %v1401
        %3191 = vmatprep.subr.bf16.mxu0 %v1406
        %3192 = vmatpush1.bf16.msra.mxu0 %v1405
        %3193 = vmatprep.subr.bf16.mxu0 %v1410
        %3194 = vmatpush1.bf16.msra.mxu0 %v1409
        %3195 = vmatprep.subr.bf16.mxu0 %v1414
        %3196 = vmatpush1.bf16.msra.mxu0 %v1413
        %3197 = vmatprep.subr.bf16.mxu0 %v1418
        %3198 = vmatpush1.bf16.msra.mxu0 %v1417
        %3199 = vmatprep.subr.bf16.mxu0 %v1422
        %3200 = vmatpush1.bf16.msra.mxu0 %v1421
        %3201 = vmatprep.subr.bf16.mxu0 %v1426
        %3202 = vmatpush1.bf16.msra.mxu0 %v1425
        %3203 = vmatprep.subr.bf16.mxu0 %v1430
        %3204 = vmatpush1.bf16.msra.mxu0 %v1429
        %3205 = vmatprep.subr.bf16.mxu0 %v1434
        %3206 = vmatpush1.bf16.msra.mxu0 %v1433
        %3207 = vmatprep.subr.bf16.mxu0 %v1438
        %3208 = vmatpush1.bf16.msra.mxu0 %v1437
        %3209 = vmatprep.subr.bf16.mxu0 %v1442
        %3210 = vmatpush1.bf16.msra.mxu0 %v1441
        %3211 = vmatprep.subr.bf16.mxu0 %v1446
        %3212 = vmatpush1.bf16.msra.mxu0 %v1445
        %3213 = vmatprep.subr.bf16.mxu0 %v1450
        %3214 = vmatpush1.bf16.msra.mxu0 %v1449
        %3215 = vmatprep.subr.bf16.mxu0 %v1454
        %3216 = vmatpush1.bf16.msra.mxu0 %v1453
        %3217 = vmatprep.subr.bf16.mxu0 %v1458
        %3218 = vmatpush1.bf16.msra.mxu0 %v1457
        %3219 = vmatprep.subr.bf16.mxu0 %v1462
        %3220 = vmatpush1.bf16.msra.mxu0 %v1461
        %3221 = vmatprep.mubr.bf16.mxu0 %v3147
        %3222 = vmatmul.mubr.bf16.gmra.mrb[0].mxu0 %v3146
        %v3223 = vpop.f32.mrb[0].mxu0
        %v3224 = vadd.f32 %v801, %v3223
        %v3225 = vpop.f32.mrb[0].mxu0
        %v3226 = vadd.f32 %v805, %v3225
        %v3227 = vpop.f32.mrb[0].mxu0
        %v3228 = vpop.f32.mrb[0].mxu0
        %3229 = vdwg.mxu0
        %v3230 = vxor.u32 %v3183, 2147483648
        %v3231 = vmul.f32 %v3230, 1.442695
        %v3232 = vpow.pop %v3231
        %v3233 = vadd.f32 %v3232, 1.0
        %v3234 = vrcp.pop %v3233
        %v3235 = vmul.f32 1.0, %v3234
        %v3236 = vxor.u32 %v3185, 2147483648
        %v3237 = vmul.f32 %v3236, 1.442695
        %v3238 = vpow.pop %v3237
        %v3239 = vadd.f32 %v3238, 1.0
        %v3240 = vrcp.pop %v3239
        %v3241 = vmul.f32 1.0, %v3240
        %v3242 = vtanh.pop %v3224
        %v3243 = vxor.u32 %v3226, 2147483648
        %v3244 = vmul.f32 %v3243, 1.442695
        %v3245 = vpow.pop %v3244
        %v3246 = vadd.f32 %v3245, 1.0
        %v3247 = vrcp.pop %v3246
        %v3248 = vmul.f32 1.0, %v3247
        %v3249 = vmul.f32 %v3241, %v2927
        %v3250 = vmul.f32 %v3235, %v3242
        %v3251 = vadd.f32 %v3249, %v3250
        %v3252 = vtanh.pop %v3251
        %v3253 = vmul.f32 %v3248, %v3252
        %s3254 = scalar_lea.vmem [#allocation2], 6
        %v3255 = vld [vmem:[%s3254] ss:$8 sm:$0xf]
        %s3256 = scalar_lea.vmem [#allocation2], 38
        %v3257 = vld [vmem:[%s3256] ss:$8 sm:$0xf]
        %v3258 = vpack.c.bf16 %v3126, %v3126
        %v3259 = vpack.c.bf16 %v3127, %v3127
        %v3262 = vunpack.c.l.b16 %v3258
        %v3263 = vunpack.c.l.b16 %v3259
        %v3264 = vrot.slane %v3263, 7
        %v3265 = vsel %vm1644, %v3264, %v3262
        %v3266 = vpack.c.b16 %v3265, %v3265
        %3268 = vmatprep.subr.bf16.mxu0 %v915
        %3269 = vmatpush1.bf16.msra.mxu0 %v914
        %3270 = vmatprep.subr.bf16.mxu0 %v919
        %3271 = vmatpush1.bf16.msra.mxu0 %v918
        %3272 = vmatprep.subr.bf16.mxu0 %v923
        %3273 = vmatpush1.bf16.msra.mxu0 %v922
        %3274 = vmatprep.subr.bf16.mxu0 %v927
        %3275 = vmatpush1.bf16.msra.mxu0 %v926
        %3276 = vmatprep.subr.bf16.mxu0 %v931
        %3277 = vmatpush1.bf16.msra.mxu0 %v930
        %3278 = vmatprep.subr.bf16.mxu0 %v935
        %3279 = vmatpush1.bf16.msra.mxu0 %v934
        %3280 = vmatprep.subr.bf16.mxu0 %v939
        %3281 = vmatpush1.bf16.msra.mxu0 %v938
        %3282 = vmatprep.subr.bf16.mxu0 %v943
        %3283 = vmatpush1.bf16.msra.mxu0 %v942
        %3284 = vmatprep.subr.bf16.mxu0 0
        %3285 = vmatpush1.bf16.msra.mxu0 0
        %3286 = vmatprep.subr.bf16.mxu0 0
        %3287 = vmatpush1.bf16.msra.mxu0 0
        %3288 = vmatprep.subr.bf16.mxu0 0
        %3289 = vmatpush1.bf16.msra.mxu0 0
        %3290 = vmatprep.subr.bf16.mxu0 0
        %3291 = vmatpush1.bf16.msra.mxu0 0
        %3292 = vmatprep.subr.bf16.mxu0 0
        %3293 = vmatpush1.bf16.msra.mxu0 0
        %3294 = vmatprep.subr.bf16.mxu0 0
        %3295 = vmatpush1.bf16.msra.mxu0 0
        %3296 = vmatprep.subr.bf16.mxu0 0
        %3297 = vmatpush1.bf16.msra.mxu0 0
        %3298 = vmatprep.subr.bf16.mxu0 0
        %3299 = vmatpush1.bf16.msra.mxu0 0
        %3300 = vmatprep.mubr.bf16.mxu0 0
        %3301 = vmatmul.mubr.bf16.gmra.mrb[0].mxu0 %v3266
        %v3302 = vpop.f32.mrb[0].mxu0
        %v3303 = vadd.f32 0.0, %v3302
        %v3304 = vpop.f32.mrb[0].mxu0
        %v3305 = vadd.f32 0.0, %v3304
        %v3306 = vpop.f32.mrb[0].mxu0
        %v3307 = vpop.f32.mrb[0].mxu0
        %3308 = vdwg.mxu0
        %3309 = vmatprep.subr.bf16.mxu0 %v917
        %3310 = vmatpush1.bf16.msra.mxu0 %v916
        %3311 = vmatprep.subr.bf16.mxu0 %v921
        %3312 = vmatpush1.bf16.msra.mxu0 %v920
        %3313 = vmatprep.subr.bf16.mxu0 %v925
        %3314 = vmatpush1.bf16.msra.mxu0 %v924
        %3315 = vmatprep.subr.bf16.mxu0 %v929
        %3316 = vmatpush1.bf16.msra.mxu0 %v928
        %3317 = vmatprep.subr.bf16.mxu0 %v933
        %3318 = vmatpush1.bf16.msra.mxu0 %v932
        %3319 = vmatprep.subr.bf16.mxu0 %v937
        %3320 = vmatpush1.bf16.msra.mxu0 %v936
        %3321 = vmatprep.subr.bf16.mxu0 %v941
        %3322 = vmatpush1.bf16.msra.mxu0 %v940
        %3323 = vmatprep.subr.bf16.mxu0 %v945
        %3324 = vmatpush1.bf16.msra.mxu0 %v944
        %3325 = vmatprep.subr.bf16.mxu0 0
        %3326 = vmatpush1.bf16.msra.mxu0 0
        %3327 = vmatprep.subr.bf16.mxu0 0
        %3328 = vmatpush1.bf16.msra.mxu0 0
        %3329 = vmatprep.subr.bf16.mxu0 0
        %3330 = vmatpush1.bf16.msra.mxu0 0
        %3331 = vmatprep.subr.bf16.mxu0 0
        %3332 = vmatpush1.bf16.msra.mxu0 0
        %3333 = vmatprep.subr.bf16.mxu0 0
        %3334 = vmatpush1.bf16.msra.mxu0 0
        %3335 = vmatprep.subr.bf16.mxu0 0
        %3336 = vmatpush1.bf16.msra.mxu0 0
        %3337 = vmatprep.subr.bf16.mxu0 0
        %3338 = vmatpush1.bf16.msra.mxu0 0
        %3339 = vmatprep.subr.bf16.mxu0 0
        %3340 = vmatpush1.bf16.msra.mxu0 0
        %3341 = vmatprep.mubr.bf16.mxu0 0
        %3342 = vmatmul.mubr.bf16.gmra.mrb[0].mxu0 %v3266
        %v3343 = vpop.f32.mrb[0].mxu0
        %v3344 = vadd.f32 0.0, %v3343
        %v3345 = vpop.f32.mrb[0].mxu0
        %v3346 = vadd.f32 0.0, %v3345
        %v3347 = vpop.f32.mrb[0].mxu0
        %v3348 = vpop.f32.mrb[0].mxu0
        %3349 = vdwg.mxu0
        %v3354 = vcombine.low %v3303, %v3305
        %v3355 = vcombine.low %v3344, %v3346
        %v3357 = vunpack.c.l.s4 1966171168
        %v3358 = vunpack.c.0.s8 %v3357
        %v3359 = vlaneseq
        %v3360 = vshrl.u32 %v3359, 7
        %v3361 = vsub.s32 %v3358, %v3360
        %v3362 = vrot.slane %v3354, %v3361
        %v3364 = vunpack.c.l.s4 1966171168
        %v3365 = vunpack.c.0.s8 %v3364
        %v3366 = vlaneseq
        %v3367 = vshrl.u32 %v3366, 7
        %v3368 = vsub.s32 %v3365, %v3367
        %v3369 = vrot.slane %v3355, %v3368
        %v3370 = vcombine.low %v3362, %v3369
        %v3371 = vcombine.high %v3362, %v3369
        %v3373 = vunpack.c.l.s4 1966171168
        %v3374 = vunpack.c.0.s8 %v3373
        %v3375 = vlaneseq
        %v3376 = vshrl.u32 %v3375, 7
        %v3377 = vsub.s32 %v3374, %v3376
        %v3378 = vrot.slane %v3370, %v3377
        %v3380 = vunpack.c.l.s4 1966171168
        %v3381 = vunpack.c.0.s8 %v3380
        %v3382 = vlaneseq
        %v3383 = vshrl.u32 %v3382, 7
        %v3384 = vsub.s32 %v3381, %v3383
        %v3385 = vrot.slane %v3371, %v3384
        %v3388 = vadd.f32 %v3255, %v3378
        %v3389 = vadd.f32 %v3257, %v3385
        %v3390 = vxor.u32 %v3388, 2147483648
        %v3391 = vxor.u32 %v3389, 2147483648
        %v3392 = vmul.f32 %v3390, 1.442695
        %v3393 = vpow.pop %v3392
        %v3394 = vmul.f32 %v3391, 1.442695
        %v3395 = vpow.pop %v3394
        %v3396 = vadd.f32 %v3393, 1.0
        %v3397 = vadd.f32 %v3395, 1.0
        %v3398 = vrcp.pop %v3396
        %v3399 = vmul.f32 1.0, %v3398
        %v3400 = vrcp.pop %v3397
        %v3401 = vmul.f32 1.0, %v3400
        %v3404 = vrot.slane %v3388, 1
        %v3405 = vrot.slane %v3389, 1
        %v3408 = vxor.u32 %v3404, 2147483648
        %v3409 = vxor.u32 %v3405, 2147483648
        %v3410 = vmul.f32 %v3408, 1.442695
        %v3411 = vpow.pop %v3410
        %v3412 = vmul.f32 %v3409, 1.442695
        %v3413 = vpow.pop %v3412
        %v3414 = vadd.f32 %v3411, 1.0
        %v3415 = vadd.f32 %v3413, 1.0
        %v3416 = vrcp.pop %v3414
        %v3417 = vmul.f32 1.0, %v3416
        %v3418 = vrcp.pop %v3415
        %v3419 = vmul.f32 1.0, %v3418
        %v3420 = vrot.slane %v3388, 2
        %v3421 = vrot.slane %v3389, 2
        %v3424 = vtanh.pop %v3420
        %v3425 = vtanh.pop %v3421
        %v3426 = vrot.slane %v3388, 3
        %v3427 = vrot.slane %v3389, 3
        %v3430 = vxor.u32 %v3426, 2147483648
        %v3431 = vxor.u32 %v3427, 2147483648
        %v3432 = vmul.f32 %v3430, 1.442695
        %v3433 = vpow.pop %v3432
        %v3434 = vmul.f32 %v3431, 1.442695
        %v3435 = vpow.pop %v3434
        %v3436 = vadd.f32 %v3433, 1.0
        %v3437 = vadd.f32 %v3435, 1.0
        %v3438 = vrcp.pop %v3436
        %v3439 = vmul.f32 1.0, %v3438
        %v3440 = vrcp.pop %v3437
        %v3441 = vmul.f32 1.0, %v3440
        %v3442 = vmul.f32 %v3417, %v3122
        %v3443 = vmul.f32 %v3419, %v3123
        %v3444 = vmul.f32 %v3399, %v3424
        %v3445 = vmul.f32 %v3401, %v3425
        %v3446 = vadd.f32 %v3442, %v3444
        %v3447 = vadd.f32 %v3443, %v3445
        %v3448 = vtanh.pop %v3446
        %v3449 = vtanh.pop %v3447
        %v3450 = vmul.f32 %v3439, %v3448
        %v3451 = vmul.f32 %v3441, %v3449
        %v3454 = vcombine.low %v3450, %v3451
        %v3456 = vunpack.c.l.s4 1966171168
        %v3457 = vunpack.c.0.s8 %v3456
        %v3458 = vlaneseq
        %v3459 = vshrl.u32 %v3458, 7
        %v3460 = vsub.s32 %v3457, %v3459
        %v3461 = vrot.slane %v3454, %v3460
        %v3463 = vunpack.c.l.s4 1966171168
        %v3464 = vunpack.c.0.s8 %v3463
        %v3465 = vlaneseq
        %v3466 = vshrl.u32 %v3465, 7
        %v3467 = vsub.s32 %v3464, %v3466
        %v3468 = vrot.slane %v3461, %v3467
        %v3470 = vpack.c.bf16 %v3468, %v3468
        %v3471 = vpack.c.bf16 %v3253, %v3253
        %3472 = vmatprep.subr.bf16.mxu0 %v1400
        %3473 = vmatpush1.bf16.msra.mxu0 %v1399
        %3474 = vmatprep.subr.bf16.mxu0 %v1404
        %3475 = vmatpush1.bf16.msra.mxu0 %v1403
        %3476 = vmatprep.subr.bf16.mxu0 %v1408
        %3477 = vmatpush1.bf16.msra.mxu0 %v1407
        %3478 = vmatprep.subr.bf16.mxu0 %v1412
        %3479 = vmatpush1.bf16.msra.mxu0 %v1411
        %3480 = vmatprep.subr.bf16.mxu0 %v1416
        %3481 = vmatpush1.bf16.msra.mxu0 %v1415
        %3482 = vmatprep.subr.bf16.mxu0 %v1420
        %3483 = vmatpush1.bf16.msra.mxu0 %v1419
        %3484 = vmatprep.subr.bf16.mxu0 %v1424
        %3485 = vmatpush1.bf16.msra.mxu0 %v1423
        %3486 = vmatprep.subr.bf16.mxu0 %v1428
        %3487 = vmatpush1.bf16.msra.mxu0 %v1427
        %3488 = vmatprep.subr.bf16.mxu0 %v1432
        %3489 = vmatpush1.bf16.msra.mxu0 %v1431
        %3490 = vmatprep.subr.bf16.mxu0 %v1436
        %3491 = vmatpush1.bf16.msra.mxu0 %v1435
        %3492 = vmatprep.subr.bf16.mxu0 %v1440
        %3493 = vmatpush1.bf16.msra.mxu0 %v1439
        %3494 = vmatprep.subr.bf16.mxu0 %v1444
        %3495 = vmatpush1.bf16.msra.mxu0 %v1443
        %3496 = vmatprep.subr.bf16.mxu0 %v1448
        %3497 = vmatpush1.bf16.msra.mxu0 %v1447
        %3498 = vmatprep.subr.bf16.mxu0 %v1452
        %3499 = vmatpush1.bf16.msra.mxu0 %v1451
        %3500 = vmatprep.subr.bf16.mxu0 %v1456
        %3501 = vmatpush1.bf16.msra.mxu0 %v1455
        %3502 = vmatprep.subr.bf16.mxu0 %v1460
        %3503 = vmatpush1.bf16.msra.mxu0 %v1459
        %3504 = vmatprep.mubr.bf16.mxu0 %v3471
        %3505 = vmatmul.mubr.bf16.gmra.mrb[0].mxu0 %v3470
        %v3506 = vpop.f32.mrb[0].mxu0
        %v3507 = vadd.f32 %v793, %v3506
        %v3508 = vpop.f32.mrb[0].mxu0
        %v3509 = vadd.f32 %v797, %v3508
        %v3510 = vpop.f32.mrb[0].mxu0
        %v3511 = vpop.f32.mrb[0].mxu0
        %3512 = vdwg.mxu0
        %3513 = vmatprep.subr.bf16.mxu0 %v1402
        %3514 = vmatpush1.bf16.msra.mxu0 %v1401
        %3515 = vmatprep.subr.bf16.mxu0 %v1406
        %3516 = vmatpush1.bf16.msra.mxu0 %v1405
        %3517 = vmatprep.subr.bf16.mxu0 %v1410
        %3518 = vmatpush1.bf16.msra.mxu0 %v1409
        %3519 = vmatprep.subr.bf16.mxu0 %v1414
        %3520 = vmatpush1.bf16.msra.mxu0 %v1413
        %3521 = vmatprep.subr.bf16.mxu0 %v1418
        %3522 = vmatpush1.bf16.msra.mxu0 %v1417
        %3523 = vmatprep.subr.bf16.mxu0 %v1422
        %3524 = vmatpush1.bf16.msra.mxu0 %v1421
        %3525 = vmatprep.subr.bf16.mxu0 %v1426
        %3526 = vmatpush1.bf16.msra.mxu0 %v1425
        %3527 = vmatprep.subr.bf16.mxu0 %v1430
        %3528 = vmatpush1.bf16.msra.mxu0 %v1429
        %3529 = vmatprep.subr.bf16.mxu0 %v1434
        %3530 = vmatpush1.bf16.msra.mxu0 %v1433
        %3531 = vmatprep.subr.bf16.mxu0 %v1438
        %3532 = vmatpush1.bf16.msra.mxu0 %v1437
        %3533 = vmatprep.subr.bf16.mxu0 %v1442
        %3534 = vmatpush1.bf16.msra.mxu0 %v1441
        %3535 = vmatprep.subr.bf16.mxu0 %v1446
        %3536 = vmatpush1.bf16.msra.mxu0 %v1445
        %3537 = vmatprep.subr.bf16.mxu0 %v1450
        %3538 = vmatpush1.bf16.msra.mxu0 %v1449
        %3539 = vmatprep.subr.bf16.mxu0 %v1454
        %3540 = vmatpush1.bf16.msra.mxu0 %v1453
        %3541 = vmatprep.subr.bf16.mxu0 %v1458
        %3542 = vmatpush1.bf16.msra.mxu0 %v1457
        %3543 = vmatprep.subr.bf16.mxu0 %v1462
        %3544 = vmatpush1.bf16.msra.mxu0 %v1461
        %3545 = vmatprep.mubr.bf16.mxu0 %v3471
        %3546 = vmatmul.mubr.bf16.gmra.mrb[0].mxu0 %v3470
        %v3547 = vpop.f32.mrb[0].mxu0
        %v3548 = vadd.f32 %v801, %v3547
        %v3549 = vpop.f32.mrb[0].mxu0
        %v3550 = vadd.f32 %v805, %v3549
        %v3551 = vpop.f32.mrb[0].mxu0
        %v3552 = vpop.f32.mrb[0].mxu0
        %3553 = vdwg.mxu0
        %v3554 = vxor.u32 %v3507, 2147483648
        %v3555 = vmul.f32 %v3554, 1.442695
        %v3556 = vpow.pop %v3555
        %v3557 = vadd.f32 %v3556, 1.0
        %v3558 = vrcp.pop %v3557
        %v3559 = vmul.f32 1.0, %v3558
        %v3560 = vxor.u32 %v3509, 2147483648
        %v3561 = vmul.f32 %v3560, 1.442695
        %v3562 = vpow.pop %v3561
        %v3563 = vadd.f32 %v3562, 1.0
        %v3564 = vrcp.pop %v3563
        %v3565 = vmul.f32 1.0, %v3564
        %v3566 = vtanh.pop %v3548
        %v3567 = vxor.u32 %v3550, 2147483648
        %v3568 = vmul.f32 %v3567, 1.442695
        %v3569 = vpow.pop %v3568
        %v3570 = vadd.f32 %v3569, 1.0
        %v3571 = vrcp.pop %v3570
        %v3572 = vmul.f32 1.0, %v3571
        %v3573 = vmul.f32 %v3565, %v3251
        %v3574 = vmul.f32 %v3559, %v3566
        %v3575 = vadd.f32 %v3573, %v3574
        %v3576 = vtanh.pop %v3575
        %v3577 = vmul.f32 %v3572, %v3576
        %s3578 = scalar_lea.vmem [#allocation2], 7
        %v3579 = vld [vmem:[%s3578] ss:$8 sm:$0xf]
        %s3580 = scalar_lea.vmem [#allocation2], 39
        %v3581 = vld [vmem:[%s3580] ss:$8 sm:$0xf]
        %v3582 = vpack.c.bf16 %v3450, %v3450
        %v3583 = vpack.c.bf16 %v3451, %v3451
        %v3586 = vunpack.c.l.b16 %v3582
        %v3587 = vunpack.c.l.b16 %v3583
        %v3588 = vrot.slane %v3587, 7
        %v3589 = vsel %vm1644, %v3588, %v3586
        %v3590 = vpack.c.b16 %v3589, %v3589
        %3592 = vmatprep.subr.bf16.mxu0 %v915
        %3593 = vmatpush1.bf16.msra.mxu0 %v914
        %3594 = vmatprep.subr.bf16.mxu0 %v919
        %3595 = vmatpush1.bf16.msra.mxu0 %v918
        %3596 = vmatprep.subr.bf16.mxu0 %v923
        %3597 = vmatpush1.bf16.msra.mxu0 %v922
        %3598 = vmatprep.subr.bf16.mxu0 %v927
        %3599 = vmatpush1.bf16.msra.mxu0 %v926
        %3600 = vmatprep.subr.bf16.mxu0 %v931
        %3601 = vmatpush1.bf16.msra.mxu0 %v930
        %3602 = vmatprep.subr.bf16.mxu0 %v935
        %3603 = vmatpush1.bf16.msra.mxu0 %v934
        %3604 = vmatprep.subr.bf16.mxu0 %v939
        %3605 = vmatpush1.bf16.msra.mxu0 %v938
        %3606 = vmatprep.subr.bf16.mxu0 %v943
        %3607 = vmatpush1.bf16.msra.mxu0 %v942
        %3608 = vmatprep.subr.bf16.mxu0 0
        %3609 = vmatpush1.bf16.msra.mxu0 0
        %3610 = vmatprep.subr.bf16.mxu0 0
        %3611 = vmatpush1.bf16.msra.mxu0 0
        %3612 = vmatprep.subr.bf16.mxu0 0
        %3613 = vmatpush1.bf16.msra.mxu0 0
        %3614 = vmatprep.subr.bf16.mxu0 0
        %3615 = vmatpush1.bf16.msra.mxu0 0
        %3616 = vmatprep.subr.bf16.mxu0 0
        %3617 = vmatpush1.bf16.msra.mxu0 0
        %3618 = vmatprep.subr.bf16.mxu0 0
        %3619 = vmatpush1.bf16.msra.mxu0 0
        %3620 = vmatprep.subr.bf16.mxu0 0
        %3621 = vmatpush1.bf16.msra.mxu0 0
        %3622 = vmatprep.subr.bf16.mxu0 0
        %3623 = vmatpush1.bf16.msra.mxu0 0
        %3624 = vmatprep.mubr.bf16.mxu0 0
        %3625 = vmatmul.mubr.bf16.gmra.mrb[0].mxu0 %v3590
        %v3626 = vpop.f32.mrb[0].mxu0
        %v3627 = vadd.f32 0.0, %v3626
        %v3628 = vpop.f32.mrb[0].mxu0
        %v3629 = vadd.f32 0.0, %v3628
        %v3630 = vpop.f32.mrb[0].mxu0
        %v3631 = vpop.f32.mrb[0].mxu0
        %3632 = vdwg.mxu0
        %3633 = vmatprep.subr.bf16.mxu0 %v917
        %3634 = vmatpush1.bf16.msra.mxu0 %v916
        %3635 = vmatprep.subr.bf16.mxu0 %v921
        %3636 = vmatpush1.bf16.msra.mxu0 %v920
        %3637 = vmatprep.subr.bf16.mxu0 %v925
        %3638 = vmatpush1.bf16.msra.mxu0 %v924
        %3639 = vmatprep.subr.bf16.mxu0 %v929
        %3640 = vmatpush1.bf16.msra.mxu0 %v928
        %3641 = vmatprep.subr.bf16.mxu0 %v933
        %3642 = vmatpush1.bf16.msra.mxu0 %v932
        %3643 = vmatprep.subr.bf16.mxu0 %v937
        %3644 = vmatpush1.bf16.msra.mxu0 %v936
        %3645 = vmatprep.subr.bf16.mxu0 %v941
        %3646 = vmatpush1.bf16.msra.mxu0 %v940
        %3647 = vmatprep.subr.bf16.mxu0 %v945
        %3648 = vmatpush1.bf16.msra.mxu0 %v944
        %3649 = vmatprep.subr.bf16.mxu0 0
        %3650 = vmatpush1.bf16.msra.mxu0 0
        %3651 = vmatprep.subr.bf16.mxu0 0
        %3652 = vmatpush1.bf16.msra.mxu0 0
        %3653 = vmatprep.subr.bf16.mxu0 0
        %3654 = vmatpush1.bf16.msra.mxu0 0
        %3655 = vmatprep.subr.bf16.mxu0 0
        %3656 = vmatpush1.bf16.msra.mxu0 0
        %3657 = vmatprep.subr.bf16.mxu0 0
        %3658 = vmatpush1.bf16.msra.mxu0 0
        %3659 = vmatprep.subr.bf16.mxu0 0
        %3660 = vmatpush1.bf16.msra.mxu0 0
        %3661 = vmatprep.subr.bf16.mxu0 0
        %3662 = vmatpush1.bf16.msra.mxu0 0
        %3663 = vmatprep.subr.bf16.mxu0 0
        %3664 = vmatpush1.bf16.msra.mxu0 0
        %3665 = vmatprep.mubr.bf16.mxu0 0
        %3666 = vmatmul.mubr.bf16.gmra.mrb[0].mxu0 %v3590
        %v3667 = vpop.f32.mrb[0].mxu0
        %v3668 = vadd.f32 0.0, %v3667
        %v3669 = vpop.f32.mrb[0].mxu0
        %v3670 = vadd.f32 0.0, %v3669
        %v3671 = vpop.f32.mrb[0].mxu0
        %v3672 = vpop.f32.mrb[0].mxu0
        %3673 = vdwg.mxu0
        %v3678 = vcombine.low %v3627, %v3629
        %v3679 = vcombine.low %v3668, %v3670
        %v3681 = vunpack.c.l.s4 1966171168
        %v3682 = vunpack.c.0.s8 %v3681
        %v3683 = vlaneseq
        %v3684 = vshrl.u32 %v3683, 7
        %v3685 = vsub.s32 %v3682, %v3684
        %v3686 = vrot.slane %v3678, %v3685
        %v3688 = vunpack.c.l.s4 1966171168
        %v3689 = vunpack.c.0.s8 %v3688
        %v3690 = vlaneseq
        %v3691 = vshrl.u32 %v3690, 7
        %v3692 = vsub.s32 %v3689, %v3691
        %v3693 = vrot.slane %v3679, %v3692
        %v3694 = vcombine.low %v3686, %v3693
        %v3695 = vcombine.high %v3686, %v3693
        %v3697 = vunpack.c.l.s4 1966171168
        %v3698 = vunpack.c.0.s8 %v3697
        %v3699 = vlaneseq
        %v3700 = vshrl.u32 %v3699, 7
        %v3701 = vsub.s32 %v3698, %v3700
        %v3702 = vrot.slane %v3694, %v3701
        %v3704 = vunpack.c.l.s4 1966171168
        %v3705 = vunpack.c.0.s8 %v3704
        %v3706 = vlaneseq
        %v3707 = vshrl.u32 %v3706, 7
        %v3708 = vsub.s32 %v3705, %v3707
        %v3709 = vrot.slane %v3695, %v3708
        %v3712 = vadd.f32 %v3579, %v3702
        %v3713 = vadd.f32 %v3581, %v3709
        %v3714 = vxor.u32 %v3712, 2147483648
        %v3715 = vxor.u32 %v3713, 2147483648
        %v3716 = vmul.f32 %v3714, 1.442695
        %v3717 = vpow.pop %v3716
        %v3718 = vmul.f32 %v3715, 1.442695
        %v3719 = vpow.pop %v3718
        %v3720 = vadd.f32 %v3717, 1.0
        %v3721 = vadd.f32 %v3719, 1.0
        %v3722 = vrcp.pop %v3720
        %v3723 = vmul.f32 1.0, %v3722
        %v3724 = vrcp.pop %v3721
        %v3725 = vmul.f32 1.0, %v3724
        %v3728 = vrot.slane %v3712, 1
        %v3729 = vrot.slane %v3713, 1
        %v3732 = vxor.u32 %v3728, 2147483648
        %v3733 = vxor.u32 %v3729, 2147483648
        %v3734 = vmul.f32 %v3732, 1.442695
        %v3735 = vpow.pop %v3734
        %v3736 = vmul.f32 %v3733, 1.442695
        %v3737 = vpow.pop %v3736
        %v3738 = vadd.f32 %v3735, 1.0
        %v3739 = vadd.f32 %v3737, 1.0
        %v3740 = vrcp.pop %v3738
        %v3741 = vmul.f32 1.0, %v3740
        %v3742 = vrcp.pop %v3739
        %v3743 = vmul.f32 1.0, %v3742
        %v3744 = vrot.slane %v3712, 2
        %v3745 = vrot.slane %v3713, 2
        %v3748 = vtanh.pop %v3744
        %v3749 = vtanh.pop %v3745
        %v3750 = vrot.slane %v3712, 3
        %v3751 = vrot.slane %v3713, 3
        %v3754 = vxor.u32 %v3750, 2147483648
        %v3755 = vxor.u32 %v3751, 2147483648
        %v3756 = vmul.f32 %v3754, 1.442695
        %v3757 = vpow.pop %v3756
        %v3758 = vmul.f32 %v3755, 1.442695
        %v3759 = vpow.pop %v3758
        %v3760 = vadd.f32 %v3757, 1.0
        %v3761 = vadd.f32 %v3759, 1.0
        %v3762 = vrcp.pop %v3760
        %v3763 = vmul.f32 1.0, %v3762
        %v3764 = vrcp.pop %v3761
        %v3765 = vmul.f32 1.0, %v3764
        %v3766 = vmul.f32 %v3741, %v3446
        %v3767 = vmul.f32 %v3743, %v3447
        %v3768 = vmul.f32 %v3723, %v3748
        %v3769 = vmul.f32 %v3725, %v3749
        %v3770 = vadd.f32 %v3766, %v3768
        %v3771 = vadd.f32 %v3767, %v3769
        %v3772 = vtanh.pop %v3770
        %v3773 = vtanh.pop %v3771
        %v3774 = vmul.f32 %v3763, %v3772
        %v3775 = vmul.f32 %v3765, %v3773
        %v3778 = vcombine.low %v3774, %v3775
        %v3780 = vunpack.c.l.s4 1966171168
        %v3781 = vunpack.c.0.s8 %v3780
        %v3782 = vlaneseq
        %v3783 = vshrl.u32 %v3782, 7
        %v3784 = vsub.s32 %v3781, %v3783
        %v3785 = vrot.slane %v3778, %v3784
        %v3787 = vunpack.c.l.s4 1966171168
        %v3788 = vunpack.c.0.s8 %v3787
        %v3789 = vlaneseq
        %v3790 = vshrl.u32 %v3789, 7
        %v3791 = vsub.s32 %v3788, %v3790
        %v3792 = vrot.slane %v3785, %v3791
        %v3794 = vpack.c.bf16 %v3792, %v3792
        %v3795 = vpack.c.bf16 %v3577, %v3577
        %3796 = vmatprep.subr.bf16.mxu0 %v1400
        %3797 = vmatpush1.bf16.msra.mxu0 %v1399
        %3798 = vmatprep.subr.bf16.mxu0 %v1404
        %3799 = vmatpush1.bf16.msra.mxu0 %v1403
        %3800 = vmatprep.subr.bf16.mxu0 %v1408
        %3801 = vmatpush1.bf16.msra.mxu0 %v1407
        %3802 = vmatprep.subr.bf16.mxu0 %v1412
        %3803 = vmatpush1.bf16.msra.mxu0 %v1411
        %3804 = vmatprep.subr.bf16.mxu0 %v1416
        %3805 = vmatpush1.bf16.msra.mxu0 %v1415
        %3806 = vmatprep.subr.bf16.mxu0 %v1420
        %3807 = vmatpush1.bf16.msra.mxu0 %v1419
        %3808 = vmatprep.subr.bf16.mxu0 %v1424
        %3809 = vmatpush1.bf16.msra.mxu0 %v1423
        %3810 = vmatprep.subr.bf16.mxu0 %v1428
        %3811 = vmatpush1.bf16.msra.mxu0 %v1427
        %3812 = vmatprep.subr.bf16.mxu0 %v1432
        %3813 = vmatpush1.bf16.msra.mxu0 %v1431
        %3814 = vmatprep.subr.bf16.mxu0 %v1436
        %3815 = vmatpush1.bf16.msra.mxu0 %v1435
        %3816 = vmatprep.subr.bf16.mxu0 %v1440
        %3817 = vmatpush1.bf16.msra.mxu0 %v1439
        %3818 = vmatprep.subr.bf16.mxu0 %v1444
        %3819 = vmatpush1.bf16.msra.mxu0 %v1443
        %3820 = vmatprep.subr.bf16.mxu0 %v1448
        %3821 = vmatpush1.bf16.msra.mxu0 %v1447
        %3822 = vmatprep.subr.bf16.mxu0 %v1452
        %3823 = vmatpush1.bf16.msra.mxu0 %v1451
        %3824 = vmatprep.subr.bf16.mxu0 %v1456
        %3825 = vmatpush1.bf16.msra.mxu0 %v1455
        %3826 = vmatprep.subr.bf16.mxu0 %v1460
        %3827 = vmatpush1.bf16.msra.mxu0 %v1459
        %3828 = vmatprep.mubr.bf16.mxu0 %v3795
        %3829 = vmatmul.mubr.bf16.gmra.mrb[0].mxu0 %v3794
        %v3830 = vpop.f32.mrb[0].mxu0
        %v3831 = vadd.f32 %v793, %v3830
        %v3832 = vpop.f32.mrb[0].mxu0
        %v3833 = vadd.f32 %v797, %v3832
        %v3834 = vpop.f32.mrb[0].mxu0
        %v3835 = vpop.f32.mrb[0].mxu0
        %3836 = vdwg.mxu0
        %3837 = vmatprep.subr.bf16.mxu0 %v1402
        %3838 = vmatpush1.bf16.msra.mxu0 %v1401
        %3839 = vmatprep.subr.bf16.mxu0 %v1406
        %3840 = vmatpush1.bf16.msra.mxu0 %v1405
        %3841 = vmatprep.subr.bf16.mxu0 %v1410
        %3842 = vmatpush1.bf16.msra.mxu0 %v1409
        %3843 = vmatprep.subr.bf16.mxu0 %v1414
        %3844 = vmatpush1.bf16.msra.mxu0 %v1413
        %3845 = vmatprep.subr.bf16.mxu0 %v1418
        %3846 = vmatpush1.bf16.msra.mxu0 %v1417
        %3847 = vmatprep.subr.bf16.mxu0 %v1422
        %3848 = vmatpush1.bf16.msra.mxu0 %v1421
        %3849 = vmatprep.subr.bf16.mxu0 %v1426
        %3850 = vmatpush1.bf16.msra.mxu0 %v1425
        %3851 = vmatprep.subr.bf16.mxu0 %v1430
        %3852 = vmatpush1.bf16.msra.mxu0 %v1429
        %3853 = vmatprep.subr.bf16.mxu0 %v1434
        %3854 = vmatpush1.bf16.msra.mxu0 %v1433
        %3855 = vmatprep.subr.bf16.mxu0 %v1438
        %3856 = vmatpush1.bf16.msra.mxu0 %v1437
        %3857 = vmatprep.subr.bf16.mxu0 %v1442
        %3858 = vmatpush1.bf16.msra.mxu0 %v1441
        %3859 = vmatprep.subr.bf16.mxu0 %v1446
        %3860 = vmatpush1.bf16.msra.mxu0 %v1445
        %3861 = vmatprep.subr.bf16.mxu0 %v1450
        %3862 = vmatpush1.bf16.msra.mxu0 %v1449
        %3863 = vmatprep.subr.bf16.mxu0 %v1454
        %3864 = vmatpush1.bf16.msra.mxu0 %v1453
        %3865 = vmatprep.subr.bf16.mxu0 %v1458
        %3866 = vmatpush1.bf16.msra.mxu0 %v1457
        %3867 = vmatprep.subr.bf16.mxu0 %v1462
        %3868 = vmatpush1.bf16.msra.mxu0 %v1461
        %3869 = vmatprep.mubr.bf16.mxu0 %v3795
        %3870 = vmatmul.mubr.bf16.gmra.mrb[0].mxu0 %v3794
        %v3871 = vpop.f32.mrb[0].mxu0
        %v3872 = vadd.f32 %v801, %v3871
        %v3873 = vpop.f32.mrb[0].mxu0
        %v3874 = vadd.f32 %v805, %v3873
        %v3875 = vpop.f32.mrb[0].mxu0
        %v3876 = vpop.f32.mrb[0].mxu0
        %3877 = vdwg.mxu0
        %v3878 = vxor.u32 %v3831, 2147483648
        %v3879 = vmul.f32 %v3878, 1.442695
        %v3880 = vpow.pop %v3879
        %v3881 = vadd.f32 %v3880, 1.0
        %v3882 = vrcp.pop %v3881
        %v3883 = vmul.f32 1.0, %v3882
        %v3884 = vxor.u32 %v3833, 2147483648
        %v3885 = vmul.f32 %v3884, 1.442695
        %v3886 = vpow.pop %v3885
        %v3887 = vadd.f32 %v3886, 1.0
        %v3888 = vrcp.pop %v3887
        %v3889 = vmul.f32 1.0, %v3888
        %v3890 = vtanh.pop %v3872
        %v3891 = vxor.u32 %v3874, 2147483648
        %v3892 = vmul.f32 %v3891, 1.442695
        %v3893 = vpow.pop %v3892
        %v3894 = vadd.f32 %v3893, 1.0
        %v3895 = vrcp.pop %v3894
        %v3896 = vmul.f32 1.0, %v3895
        %v3897 = vmul.f32 %v3889, %v3575
        %v3898 = vmul.f32 %v3883, %v3890
        %v3899 = vadd.f32 %v3897, %v3898
        %v3900 = vtanh.pop %v3899
        %v3901 = vmul.f32 %v3896, %v3900
        %3902 = vst [vmem:[#allocation3] sm:$0x3] %v3792
        %v3905 = vcombine.low %v3770, %v3771
        %v3907 = vunpack.c.l.s4 1966171168
        %v3908 = vunpack.c.0.s8 %v3907
        %v3909 = vlaneseq
        %v3910 = vshrl.u32 %v3909, 7
        %v3911 = vsub.s32 %v3908, %v3910
        %v3912 = vrot.slane %v3905, %v3911
        %v3914 = vunpack.c.l.s4 1966171168
        %v3915 = vunpack.c.0.s8 %v3914
        %v3916 = vlaneseq
        %v3917 = vshrl.u32 %v3916, 7
        %v3918 = vsub.s32 %v3915, %v3917
        %v3919 = vrot.slane %v3912, %v3918
        %3921 = vst [vmem:[#allocation4] sm:$0x3] %v3919
        %3922 = vst [vmem:[#allocation5] sm:$0x3] %v3901
        %3923 = vst [vmem:[#allocation6] sm:$0x3] %v3899
        %p3924 = scmp.eq.s32.totalorder %s32, 1
        // Predicated region
        $region127: #{tpu_custom_call.1} parent=101 // pred_check
          %p3925 = pneg %p3924
        $region128: #{tpu_custom_call.1} parent=101 // pred_check_branch
          %3927 = sbr.rel (%p3925) target = $region130
        $region129: #{tpu_custom_call.1} parent=101 // pred_region
          %v3928 = vsel %vm555, %v3901, 0.0
          %3929 = vadd.xlane.f32.xlu0 %v3928
          %v3930 = vpop.xlane.xlu0 %3929
          %v3931 = vrcp.pop 128.0
          %v3932 = vmul.f32 %v3930, %v3931
          %v3933 = vsub.f32 %v3901, %v3932
          %v3934 = vmul.f32 %v3933, %v3933
          %v3935 = vsel %vm555, %v3934, 0.0
          %3936 = vadd.xlane.f32.xlu0 %v3935
          %v3937 = vpop.xlane.xlu0 %3936
          %v3938 = vmul.f32 %v3937, %v3931
          %v3939 = vadd.f32 %v3938, 1e-05
          %v3940 = vrsqrt.pop %v3939
          %v3941 = vmul.f32 %v3933, %v3940
          %v3942 = vld [vmem:[%s6] sm:$0x1]
          %v3944 = vlaneseq
          %v3945 = vshrl.u32 %v3944, 7
          %v3946 = vsub.s32 0, %v3945
          %v3947 = vrot.slane %v3942, %v3946
          %v3949 = vmul.f32 %v3941, %v3947
          %v3950 = vld [vmem:[%s7] sm:$0x1]
          %v3952 = vlaneseq
          %v3953 = vshrl.u32 %v3952, 7
          %v3954 = vsub.s32 0, %v3953
          %v3955 = vrot.slane %v3950, %v3954
          %v3957 = vadd.f32 %v3949, %v3955
          %v3958 = vld [vmem:[%s8] sm:$0xff]
          %v3959 = vld [vmem:[%s8 + $0x8] sm:$0xff]
          %v3960 = vld [vmem:[%s8 + $0x10] sm:$0xff]
          %v3961 = vld [vmem:[%s8 + $0x18] sm:$0xff]
          %v3962 = vld [vmem:[%s8 + $0x20] sm:$0xff]
          %v3963 = vld [vmem:[%s8 + $0x28] sm:$0xff]
          %v3964 = vld [vmem:[%s8 + $0x30] sm:$0xff]
          %v3965 = vld [vmem:[%s8 + $0x38] sm:$0xff]
          %v3966 = vld [vmem:[%s8 + $0x40] sm:$0xff]
          %v3967 = vld [vmem:[%s8 + $0x48] sm:$0xff]
          %v3968 = vld [vmem:[%s8 + $0x50] sm:$0xff]
          %v3969 = vld [vmem:[%s8 + $0x58] sm:$0xff]
          %v3970 = vld [vmem:[%s8 + $0x60] sm:$0xff]
          %v3971 = vld [vmem:[%s8 + $0x68] sm:$0xff]
          %v3972 = vld [vmem:[%s8 + $0x70] sm:$0xff]
          %v3973 = vld [vmem:[%s8 + $0x78] sm:$0xff]
          %v3974 = vld [vmem:[%s9] sm:$0x1]
          %v3976 = vlaneseq
          %v3977 = vshrl.u32 %v3976, 7
          %v3978 = vsub.s32 0, %v3977
          %v3979 = vrot.slane %v3974, %v3978
          %3981 = vmatprep.subr.mxu0 0.0
          %3982 = vmatpush1.msra.mxu0 %v3958
          %3983 = vmatprep.subr.mxu0 0.0
          %3984 = vmatpush1.msra.mxu0 %v3959
          %3985 = vmatprep.subr.mxu0 0.0
          %3986 = vmatpush1.msra.mxu0 %v3960
          %3987 = vmatprep.subr.mxu0 0.0
          %3988 = vmatpush1.msra.mxu0 %v3961
          %3989 = vmatprep.subr.mxu0 0.0
          %3990 = vmatpush1.msra.mxu0 %v3962
          %3991 = vmatprep.subr.mxu0 0.0
          %3992 = vmatpush1.msra.mxu0 %v3963
          %3993 = vmatprep.subr.mxu0 0.0
          %3994 = vmatpush1.msra.mxu0 %v3964
          %3995 = vmatprep.subr.mxu0 0.0
          %3996 = vmatpush1.msra.mxu0 %v3965
          %3997 = vmatprep.subr.mxu0 0.0
          %3998 = vmatpush1.msra.mxu0 %v3966
          %3999 = vmatprep.subr.mxu0 0.0
          %4000 = vmatpush1.msra.mxu0 %v3967
          %4001 = vmatprep.subr.mxu0 0.0
          %4002 = vmatpush1.msra.mxu0 %v3968
          %4003 = vmatprep.subr.mxu0 0.0
          %4004 = vmatpush1.msra.mxu0 %v3969
          %4005 = vmatprep.subr.mxu0 0.0
          %4006 = vmatpush1.msra.mxu0 %v3970
          %4007 = vmatprep.subr.mxu0 0.0
          %4008 = vmatpush1.msra.mxu0 %v3971
          %4009 = vmatprep.subr.mxu0 0.0
          %4010 = vmatpush1.msra.mxu0 %v3972
          %4011 = vmatprep.subr.mxu0 0.0
          %4012 = vmatpush1.msra.mxu0 %v3973
          %4013 = vmatprep.subr.mxu0 0.0
          %4014 = vmatpush1.msra.mxu0 0.0
          %4015 = vmatprep.subr.mxu0 0.0
          %4016 = vmatpush1.msra.mxu0 0.0
          %4017 = vmatprep.subr.mxu0 0.0
          %4018 = vmatpush1.msra.mxu0 0.0
          %4019 = vmatprep.subr.mxu0 0.0
          %4020 = vmatpush1.msra.mxu0 0.0
          %4021 = vmatprep.subr.mxu0 0.0
          %4022 = vmatpush1.msra.mxu0 0.0
          %4023 = vmatprep.subr.mxu0 0.0
          %4024 = vmatpush1.msra.mxu0 0.0
          %4025 = vmatprep.subr.mxu0 0.0
          %4026 = vmatpush1.msra.mxu0 0.0
          %4027 = vmatprep.subr.mxu0 0.0
          %4028 = vmatpush1.msra.mxu0 0.0
          %4029 = vmatprep.subr.mxu0 0.0
          %4030 = vmatpush1.msra.mxu0 0.0
          %4031 = vmatprep.subr.mxu0 0.0
          %4032 = vmatpush1.msra.mxu0 0.0
          %4033 = vmatprep.subr.mxu0 0.0
          %4034 = vmatpush1.msra.mxu0 0.0
          %4035 = vmatprep.subr.mxu0 0.0
          %4036 = vmatpush1.msra.mxu0 0.0
          %4037 = vmatprep.subr.mxu0 0.0
          %4038 = vmatpush1.msra.mxu0 0.0
          %4039 = vmatprep.subr.mxu0 0.0
          %4040 = vmatpush1.msra.mxu0 0.0
          %4041 = vmatprep.subr.mxu0 0.0
          %4042 = vmatpush1.msra.mxu0 0.0
          %4043 = vmatprep.subr.mxu0 0.0
          %4044 = vmatpush1.msra.mxu0 0.0
          %4045 = vmatprep.mubr.f32.mxu0 0.0
          %4046 = vmatmul.mubr.f32.gmra.mrb[0].mxu0 %v3957
          %v4047 = vpop.f32.mrb[0].mxu0
          %v4048 = vadd.f32 %v3979, %v4047
          %v4049 = vpop.f32.mrb[0].mxu0
          %4050 = vdwg.mxu0
          %v4051 = vmax.f32 %v4048, 0.0
          %v4052 = vld [vmem:[%s10] sm:$0xff]
          %v4053 = vld [vmem:[%s10 + $0x8] sm:$0xff]
          %v4054 = vld [vmem:[%s10 + $0x10] sm:$0xff]
          %v4055 = vld [vmem:[%s10 + $0x18] sm:$0xff]
          %v4056 = vld [vmem:[%s10 + $0x20] sm:$0xff]
          %v4057 = vld [vmem:[%s10 + $0x28] sm:$0xff]
          %v4058 = vld [vmem:[%s10 + $0x30] sm:$0xff]
          %v4059 = vld [vmem:[%s10 + $0x38] sm:$0xff]
          %v4060 = vld [vmem:[%s11] sm:$0x1]
          %v4062 = vlaneseq
          %v4063 = vshrl.u32 %v4062, 7
          %v4064 = vsub.s32 0, %v4063
          %v4065 = vrot.slane %v4060, %v4064
          %vm4067 = vcmask 523264
          %v4069 = vsel %vm4067, %v4051, 0
          %4071 = vmatprep.subr.mxu0 0.0
          %4072 = vmatpush1.msra.mxu0 %v4052
          %4073 = vmatprep.subr.mxu0 0.0
          %4074 = vmatpush1.msra.mxu0 %v4053
          %4075 = vmatprep.subr.mxu0 0.0
          %4076 = vmatpush1.msra.mxu0 %v4054
          %4077 = vmatprep.subr.mxu0 0.0
          %4078 = vmatpush1.msra.mxu0 %v4055
          %4079 = vmatprep.subr.mxu0 0.0
          %4080 = vmatpush1.msra.mxu0 %v4056
          %4081 = vmatprep.subr.mxu0 0.0
          %4082 = vmatpush1.msra.mxu0 %v4057
          %4083 = vmatprep.subr.mxu0 0.0
          %4084 = vmatpush1.msra.mxu0 %v4058
          %4085 = vmatprep.subr.mxu0 0.0
          %4086 = vmatpush1.msra.mxu0 %v4059
          %4087 = vmatprep.subr.mxu0 0.0
          %4088 = vmatpush1.msra.mxu0 0.0
          %4089 = vmatprep.subr.mxu0 0.0
          %4090 = vmatpush1.msra.mxu0 0.0
          %4091 = vmatprep.subr.mxu0 0.0
          %4092 = vmatpush1.msra.mxu0 0.0
          %4093 = vmatprep.subr.mxu0 0.0
          %4094 = vmatpush1.msra.mxu0 0.0
          %4095 = vmatprep.subr.mxu0 0.0
          %4096 = vmatpush1.msra.mxu0 0.0
          %4097 = vmatprep.subr.mxu0 0.0
          %4098 = vmatpush1.msra.mxu0 0.0
          %4099 = vmatprep.subr.mxu0 0.0
          %4100 = vmatpush1.msra.mxu0 0.0
          %4101 = vmatprep.subr.mxu0 0.0
          %4102 = vmatpush1.msra.mxu0 0.0
          %4103 = vmatprep.subr.mxu0 0.0
          %4104 = vmatpush1.msra.mxu0 0.0
          %4105 = vmatprep.subr.mxu0 0.0
          %4106 = vmatpush1.msra.mxu0 0.0
          %4107 = vmatprep.subr.mxu0 0.0
          %4108 = vmatpush1.msra.mxu0 0.0
          %4109 = vmatprep.subr.mxu0 0.0
          %4110 = vmatpush1.msra.mxu0 0.0
          %4111 = vmatprep.subr.mxu0 0.0
          %4112 = vmatpush1.msra.mxu0 0.0
          %4113 = vmatprep.subr.mxu0 0.0
          %4114 = vmatpush1.msra.mxu0 0.0
          %4115 = vmatprep.subr.mxu0 0.0
          %4116 = vmatpush1.msra.mxu0 0.0
          %4117 = vmatprep.subr.mxu0 0.0
          %4118 = vmatpush1.msra.mxu0 0.0
          %4119 = vmatprep.subr.mxu0 0.0
          %4120 = vmatpush1.msra.mxu0 0.0
          %4121 = vmatprep.subr.mxu0 0.0
          %4122 = vmatpush1.msra.mxu0 0.0
          %4123 = vmatprep.subr.mxu0 0.0
          %4124 = vmatpush1.msra.mxu0 0.0
          %4125 = vmatprep.subr.mxu0 0.0
          %4126 = vmatpush1.msra.mxu0 0.0
          %4127 = vmatprep.subr.mxu0 0.0
          %4128 = vmatpush1.msra.mxu0 0.0
          %4129 = vmatprep.subr.mxu0 0.0
          %4130 = vmatpush1.msra.mxu0 0.0
          %4131 = vmatprep.subr.mxu0 0.0
          %4132 = vmatpush1.msra.mxu0 0.0
          %4133 = vmatprep.subr.mxu0 0.0
          %4134 = vmatpush1.msra.mxu0 0.0
          %4135 = vmatprep.mubr.f32.mxu0 0.0
          %4136 = vmatmul.mubr.f32.gmra.mrb[0].mxu0 %v4069
          %v4137 = vpop.f32.mrb[0].mxu0
          %v4138 = vadd.f32 %v4065, %v4137
          %v4139 = vpop.f32.mrb[0].mxu0
          %4140 = vdwg.mxu0
          %vm4141 = vcmask 17408
          %4142 = vst.msk [vmem:[#allocation16] sm:$0x3] %vm4141, %v4138
        $region130: #{tpu_custom_call.1} parent=101 // pred_fallthru
          _
        // Predicated region
        $region131: #{tpu_custom_call.1} parent=101 // pred_check
          %p4143 = pneg %p316
        $region132: #{tpu_custom_call.1} parent=101 // pred_check_branch
          %4145 = sbr.rel (%p4143) target = $region134
        $region133: #{tpu_custom_call.1} parent=101 // pred_region
          %s4147 = ssub.s32 32, 32
          %4148 = vsyncadd [#allocation10], %s4147
          %s4149 = smul.addr %s31, 32
          %s4150 = scalar_lea.hbm %s12, %s4149
          %s4152 = sshll.u32 [#allocation16], 4
          %s4153 = int_to_ptr.vmem [resolvable:$true] %s4152
          %4155 = dma.vmem_to_hbm [thread:$0]  %s4153, 32, %s4150, [#allocation10]
        $region134: #{tpu_custom_call.1} parent=101 // pred_fallthru
          _
        // Predicated region
        $region135: #{tpu_custom_call.1} parent=101 // pred_check
          %p4156 = pneg %p316
        $region136: #{tpu_custom_call.1} parent=101 // pred_check_branch
          %4158 = sbr.rel (%p4156) target = $region138
        $region137: #{tpu_custom_call.1} parent=101 // pred_region
          %4159 = dma.done [#allocation10], 32
        $region138: #{tpu_custom_call.1} parent=101 // pred_fallthru
          _
      $region102: #{tpu_custom_call.1} parent=5 // pred_fallthru
        _
      %p4160 = scmp.le.s32.totalorder 2, %s22
      // Predicated region
      $region139: #{tpu_custom_call.1} parent=5 // pred_check
        %p4161 = pneg %p4160
      $region140: #{tpu_custom_call.1} parent=5 // pred_check_branch
        %4163 = sbr.rel (%p4161) target = $region142
      $region141: #{tpu_custom_call.1} parent=5 // pred_region
        %s4164 = ssub.s32 %s22, 2
      $region142: #{tpu_custom_call.1} parent=5 // pred_fallthru
        _
    $region6: #{tpu_custom_call.1} parent=1 // loop_footer
      %s26 = sadd.s32 1, %s22
    $region7: #{tpu_custom_call.1} parent=1 // loop_footer_branch
      %21 = sbr.rel target = $region3
    $region8: #{tpu_custom_call.1} parent=1 // loop_exit
      _
    %4165 = vsyncpa [#allocation9], 1
    %s4166 = scalar_lea.sflag [#allocation9], 1
    %4167 = vsyncpa %s4166, 1
    %4168 = vsyncpa [#allocation12], 1
    %4169 = vsyncpa [#allocation15], 1
    %4170 = vsyncpa [#allocation10], 1
    %s4171 = scalar_lea.sflag [#allocation10], 1
    %4172 = vsyncpa %s4171, 1

</llo_original>
